<compile_context>
chip_gen: v7x
topology: tpu7x:2x2x1
jax: 0.10.0
libtpu: 0.0.40
codegen_flags: <defaults>
</compile_context>

<pallas_src>
import math
from functools import partial

import jax
import jax.numpy as jnp
from jax.experimental import pallas as pl
from jax.experimental.pallas import tpu as pltpu

_WPACK_COLS = 128     # lane-dense packed-weight width
_BIAS_COL = 32        # column holding the per-channel bias (union taps <= 31)


def _shift_flat(x, delta, hw, use_xlu_roll):
    """Return y with y[..., f] == x[..., (f + delta) % hw] (wrap masked by caller)."""
    if delta == 0:
        return x
    if use_xlu_roll:
        # pltpu.roll follows jnp.roll semantics: roll(x, s)[f] == x[(f - s) % hw]
        return pltpu.roll(x, shift=(-delta) % hw, axis=x.ndim - 1)
    # Portability fallback: slice + concat (relayout copies, still tiny here).
    return jnp.roll(x, -delta, axis=x.ndim - 1)


def _inception_kernel(x_ref, w_ref, o_ref, *, H, W, taps, use_xlu_roll):
    """Fused depthwise-inception conv on one channel/batch slab.

    x_ref : (Nb, CB, H*W)  input slab, spatial flattened onto lanes
    w_ref : (CB, 128)      packed per-channel tap weights (+ bias at _BIAS_COL)
    o_ref : (Nb, CB, H*W)  output slab (same HBM buffer as the input: aliased)
    """
    HW = H * W
    nb, cb, _ = x_ref.shape

    xb = x_ref[...].astype(jnp.float32)                       # (Nb, CB, HW)
    wb = w_ref[...].astype(jnp.float32)                       # (CB, 128), one load

    # Flat spatial index (lanes).  Row comparisons only need flat thresholds;
    # column index avoids integer division when W is a power of two.
    fl = jax.lax.broadcasted_iota(jnp.int32, (1, HW), 1)
    if (W & (W - 1)) == 0:
        col = jnp.bitwise_and(fl, W - 1)
    else:
        col = jax.lax.rem(fl, jnp.int32(W))

    # Start the accumulator at the per-channel bias (identity rows have bias 0).
    acc = jnp.broadcast_to(wb[:, _BIAS_COL:_BIAS_COL + 1][None], xb.shape)

    for t, (dh, dw) in enumerate(taps):
        shifted = _shift_flat(xb, dh * W + dw, HW, use_xlu_roll)
        # Border mask reproducing the Conv2d zero padding (the roll wraps).
        m = None
        if dh > 0:
            m = fl < (H - dh) * W           # row < H - dh
        elif dh < 0:
            m = fl >= (-dh) * W             # row >= -dh
        if dw > 0:
            mw = col < (W - dw)
            m = mw if m is None else jnp.logical_and(m, mw)
        elif dw < 0:
            mw = col >= (-dw)
            m = mw if m is None else jnp.logical_and(m, mw)
        if m is not None:
            shifted = jnp.where(m.reshape(1, 1, HW), shifted, 0.0)
        w_t = wb[:, t:t + 1][None]          # (1, CB, 1) sliced in-register
        acc = acc + shifted * w_t

    o_ref[...] = acc.astype(o_ref.dtype)


def _tap_sets(sks, bks):
    """Tap offsets (dh, dw) of each branch + their union (matching PyTorch Conv2d)."""
    dil = 2
    p_sq = sks // 2 + 1                     # dwconv_hw: dilation=2, padding=sks//2+1
    p_bd = bks // 2
    taps_hw = tuple((a * dil - p_sq, b * dil - p_sq)
                    for a in range(sks) for b in range(sks))
    taps_w = tuple((0, b - p_bd) for b in range(bks))
    taps_h = tuple((a - p_bd, 0) for a in range(bks))
    union = []
    for tap in taps_hw + taps_w + taps_h + ((0, 0),):
        if tap not in union:
            union.append(tap)
    return taps_hw, taps_w, taps_h, tuple(union)


def _pack_weights(p, c_slab, c_start, id_c, gc, taps_hw, taps_w, taps_h, union):
    """Pack every slab channel's tap weights + bias into one (c_slab, 128) block."""
    col = {tap: i for i, tap in enumerate(union)}
    w = jnp.zeros((c_slab, _WPACK_COLS), jnp.float32)

    id_rows = id_c - c_start                # identity channels inside the slab
    if id_rows > 0:                         # pass-through: weight 1 on the (0,0) tap
        w = w.at[0:id_rows, col[(0, 0)]].set(1.0)

    def put(r0, taps, wt, b):
        nonlocal w
        wt = wt.reshape(gc, -1).astype(jnp.float32)
        for k, tap in enumerate(taps):
            w = w.at[r0:r0 + gc, col[tap]].set(wt[:, k])
        w = w.at[r0:r0 + gc, _BIAS_COL].set(b.astype(jnp.float32))

    put(id_rows, taps_hw, p["w_hw"], p["b_hw"])
    put(id_rows + gc, taps_w, p["w_w"], p["b_w"])
    put(id_rows + 2 * gc, taps_h, p["w_h"], p["b_h"])
    return w


def inception_dwconv2d(x, p, use_xlu_roll=True):
    """Forward pass matching PyTorch InceptionDWConv2d.  x: (N, C, H, W)."""
    N, C, H, W = x.shape
    gc = p["gc"]
    if gc == 0:                              # everything is identity
        return x
    id_c = C - 3 * gc
    HW = H * W

    taps_hw, taps_w, taps_h, union = _tap_sets(p["square_kernel_size"],
                                               p["band_kernel_size"])
    assert len(union) <= _BIAS_COL

    # Channel slab actually touched by the kernel: the conv channels, with the
    # start rounded down to a sublane (8) boundary so every block is 8-aligned.
    # Channels below c_start are never read or written: they pass through via
    # the input/output aliasing.
    c_start = (id_c // 8) * 8
    c_slab = C - c_start
    if c_slab % 8 != 0:                      # odd channel counts: full-C fallback
        c_start, c_slab = 0, C

    # Channel block size: a multiple of 8 dividing both the slab and its offset
    # (so the BlockSpec index map can express the offset in block units).
    if c_start == 0:
        cb = c_slab                          # full channel dim is always legal
    else:
        g = math.gcd(c_slab, c_start)
        cb = max(d for d in range(8, g + 1, 8) if g % d == 0)

    # Pack a few batch elements per block when they are small so each grid step
    # moves a decent slab (amortizes the ~0.35us per-step pipeline overhead).
    per_batch_bytes = cb * HW * x.dtype.itemsize
    nb = N if N * per_batch_bytes <= (4 << 20) else 1

    wpack = _pack_weights(p, c_slab, c_start, id_c, gc,
                          taps_hw, taps_w, taps_h, union)

    x_flat = x.reshape(N, C, HW)
    kernel = partial(_inception_kernel, H=H, W=W, taps=union,
                     use_xlu_roll=use_xlu_roll)
    c_off_b = c_start // cb
    itemsize = x.dtype.itemsize

    out = pl.pallas_call(
        kernel,
        out_shape=jax.ShapeDtypeStruct((N, C, HW), x.dtype),
        grid=(N // nb, c_slab // cb),
        in_specs=[
            pl.BlockSpec((nb, cb, HW), lambda n, c: (n, c + c_off_b, 0)),
            pl.BlockSpec((cb, _WPACK_COLS), lambda n, c: (c, 0)),
        ],
        out_specs=pl.BlockSpec((nb, cb, HW), lambda n, c: (n, c + c_off_b, 0)),
        input_output_aliases={0: 0},         # identity channels stay in place
        compiler_params=pltpu.CompilerParams(
            dimension_semantics=("parallel", "parallel")),
        cost_estimate=pl.CostEstimate(
            flops=2 * N * c_slab * HW * len(union),
            transcendentals=0,
            bytes_accessed=2 * N * c_slab * HW * itemsize + int(wpack.size) * 4),
    )(x_flat, wpack)
    return out.reshape(N, C, H, W)


def init_inception_dwconv2d_params(key, in_channels, square_kernel_size=3,
                                   band_kernel_size=11, branch_ratio=0.125):
    gc = int(in_channels * branch_ratio)
    ks = jax.random.split(key, 6)
    return dict(
        gc=gc,
        square_kernel_size=square_kernel_size,
        band_kernel_size=band_kernel_size,
        split_indexes=(in_channels - 3 * gc, gc, gc, gc),
        w_hw=jax.random.normal(ks[0], (gc, square_kernel_size, square_kernel_size),
                               jnp.float32) * 0.1,
        b_hw=jax.random.normal(ks[1], (gc,), jnp.float32) * 0.1,
        w_w=jax.random.normal(ks[2], (gc, 1, band_kernel_size), jnp.float32) * 0.1,
        b_w=jax.random.normal(ks[3], (gc,), jnp.float32) * 0.1,
        w_h=jax.random.normal(ks[4], (gc, band_kernel_size, 1), jnp.float32) * 0.1,
        b_h=jax.random.normal(ks[5], (gc,), jnp.float32) * 0.1,
    )


# ------------- pure-JAX reference (lax.conv) for the correctness check -------------

def _ref_depthwise(x, w, b, dilation, padding):
    C = x.shape[1]
    kh, kw = w.shape[1], w.shape[2]
    out = jax.lax.conv_general_dilated(
        x, w.reshape(C, 1, kh, kw),
        window_strides=(1, 1),
        padding=((padding[0], padding[0]), (padding[1], padding[1])),
        rhs_dilation=dilation,
        dimension_numbers=("NCHW", "OIHW", "NCHW"),
        feature_group_count=C,
        precision=jax.lax.Precision.HIGHEST,
    )
    return out + b[None, :, None, None]


def _ref_forward(x, p):
    sks, bks = p["square_kernel_size"], p["band_kernel_size"]
    id_c, gc, _, _ = p["split_indexes"]
    x_id = x[:, :id_c]
    x_hw = x[:, id_c: id_c + gc]
    x_w = x[:, id_c + gc: id_c + 2 * gc]
    x_h = x[:, id_c + 2 * gc: id_c + 3 * gc]
    return jnp.concatenate((
        x_id,
        _ref_depthwise(x_hw, p["w_hw"], p["b_hw"], (2, 2), (sks // 2 + 1, sks // 2 + 1)),
        _ref_depthwise(x_w, p["w_w"], p["b_w"], (1, 1), (0, bks // 2)),
        _ref_depthwise(x_h, p["w_h"], p["b_h"], (1, 1), (bks // 2, 0)),
    ), axis=1)


if __name__ == "__main__":
    key = jax.random.PRNGKey(0)
    k_x, k_p = jax.random.split(key)

    N, C, H, W = 2, 32, 16, 16              # in_channels=32 -> gc=4, split (20,4,4,4)
    params = init_inception_dwconv2d_params(k_p, C)

    def make_x():
        return jax.random.normal(k_x, (N, C, H, W), jnp.float32)

    # Reference first (the kernel input below is donated for true in-place aliasing).
    x_ref_in = make_x()
    ref = jax.block_until_ready(_ref_forward(x_ref_in, params))
    del x_ref_in

    try:
        fwd = jax.jit(lambda v: inception_dwconv2d(v, params), donate_argnums=0)
        out = jax.block_until_ready(fwd(make_x()))
    except Exception:
        # Portability fallback: identical math with jnp.roll in case pltpu.roll
        # cannot lower for this shape on the current backend.
        fwd = jax.jit(lambda v: inception_dwconv2d(v, params, use_xlu_roll=False),
                      donate_argnums=0)
        out = jax.block_until_ready(fwd(make_x()))

    assert out.shape == (N, C, H, W)
    max_err = float(jnp.max(jnp.abs(out - ref)))
    assert jnp.allclose(out, ref, rtol=1e-4, atol=1e-4), (
        f"mismatch vs lax.conv reference (max_err={max_err})")
    print("KERNEL_OK")
</pallas_src>

<mosaic_0001>
module attributes {stable_mosaic.version = 11 : i64} {
  func.func @_inception_kernel(%arg0: i32, %arg1: i32, %arg2: memref<2x16x256xf32, #tpu.memory_space<vmem>>, %arg3: memref<16x128xf32, #tpu.memory_space<vmem>>, %arg4: memref<2x16x256xf32, #tpu.memory_space<vmem>>) attributes {dimension_semantics = [#tpu.dimension_semantics<parallel>, #tpu.dimension_semantics<parallel>], iteration_bounds = array<i64: 1, 1>, scalar_prefetch = 0 : i64, scratch_operands = 0 : i64, tpu.core_type = #tpu.core_type<tc>, window_params = [{transform_indices = @transform_0, window_bounds = array<i64: 2, 16, 256>}, {transform_indices = @transform_1, window_bounds = array<i64: 16, 128>}, {transform_indices = @transform_2, window_bounds = array<i64: 2, 16, 256>}]} {
    %c0 = arith.constant 0 : index
    %c0_0 = arith.constant 0 : index
    %c0_1 = arith.constant 0 : index
    %0 = vector.load %arg2[%c0, %c0_0, %c0_1] : memref<2x16x256xf32, #tpu.memory_space<vmem>>, vector<2x16x256xf32>
    %c0_2 = arith.constant 0 : index
    %c0_3 = arith.constant 0 : index
    %1 = vector.load %arg3[%c0_2, %c0_3] : memref<16x128xf32, #tpu.memory_space<vmem>>, vector<16x128xf32>
    %2 = tpu.iota {dimensions = array<i32: 1>} : vector<1x256xi32>
    %c15_i32 = arith.constant 15 : i32
    %3 = vector.broadcast %c15_i32 : i32 to vector<1x256xi32>
    %4 = arith.andi %2, %3 : vector<1x256xi32>
    %5 = vector.extract_strided_slice %1 {offsets = [0, 32], sizes = [16, 1], strides = [1, 1]} : vector<16x128xf32> to vector<16x1xf32>
    %6 = vector.shape_cast %5 : vector<16x1xf32> to vector<1x16x1xf32>
    %7 = vector.shape_cast %6 : vector<1x16x1xf32> to vector<1x16x1xf32>
    %8 = vector.broadcast %7 : vector<1x16x1xf32> to vector<2x16x256xf32>
    %c34_i32 = arith.constant 34 : i32
    %9 = tpu.dynamic_rotate %0 by %c34_i32 dim 2 : vector<2x16x256xf32>, i32 -> vector<2x16x256xf32>
    %c32_i32 = arith.constant 32 : i32
    %10 = vector.broadcast %c32_i32 : i32 to vector<1x256xi32>
    %11 = arith.cmpi sge, %2, %10 : vector<1x256xi32>
    %c2_i32 = arith.constant 2 : i32
    %12 = vector.broadcast %c2_i32 : i32 to vector<1x256xi32>
    %13 = arith.cmpi sge, %4, %12 : vector<1x256xi32>
    %14 = arith.andi %11, %13 : vector<1x256xi1>
    %15 = vector.shape_cast %14 : vector<1x256xi1> to vector<1x1x256xi1>
    %cst = arith.constant 0.000000e+00 : f32
    %16 = vector.shape_cast %15 : vector<1x1x256xi1> to vector<1x1x256xi1>
    %17 = vector.broadcast %16 : vector<1x1x256xi1> to vector<2x16x256xi1>
    %18 = vector.broadcast %cst : f32 to vector<2x16x256xf32>
    %19 = arith.select %17, %9, %18 : vector<2x16x256xi1>, vector<2x16x256xf32>
    %20 = vector.extract_strided_slice %1 {offsets = [0, 0], sizes = [16, 1], strides = [1, 1]} : vector<16x128xf32> to vector<16x1xf32>
    %21 = vector.shape_cast %20 : vector<16x1xf32> to vector<1x16x1xf32>
    %22 = vector.broadcast %21 : vector<1x16x1xf32> to vector<2x16x256xf32>
    %23 = arith.mulf %19, %22 : vector<2x16x256xf32>
    %24 = arith.addf %8, %23 : vector<2x16x256xf32>
    %c32_i32_4 = arith.constant 32 : i32
    %25 = tpu.dynamic_rotate %0 by %c32_i32_4 dim 2 : vector<2x16x256xf32>, i32 -> vector<2x16x256xf32>
    %c32_i32_5 = arith.constant 32 : i32
    %26 = vector.broadcast %c32_i32_5 : i32 to vector<1x256xi32>
    %27 = arith.cmpi sge, %2, %26 : vector<1x256xi32>
    %28 = vector.shape_cast %27 : vector<1x256xi1> to vector<1x1x256xi1>
    %cst_6 = arith.constant 0.000000e+00 : f32
    %29 = vector.shape_cast %28 : vector<1x1x256xi1> to vector<1x1x256xi1>
    %30 = vector.broadcast %29 : vector<1x1x256xi1> to vector<2x16x256xi1>
    %31 = vector.broadcast %cst_6 : f32 to vector<2x16x256xf32>
    %32 = arith.select %30, %25, %31 : vector<2x16x256xi1>, vector<2x16x256xf32>
    %33 = vector.extract_strided_slice %1 {offsets = [0, 1], sizes = [16, 1], strides = [1, 1]} : vector<16x128xf32> to vector<16x1xf32>
    %34 = vector.shape_cast %33 : vector<16x1xf32> to vector<1x16x1xf32>
    %35 = vector.broadcast %34 : vector<1x16x1xf32> to vector<2x16x256xf32>
    %36 = arith.mulf %32, %35 : vector<2x16x256xf32>
    %37 = arith.addf %24, %36 : vector<2x16x256xf32>
    %c30_i32 = arith.constant 30 : i32
    %38 = tpu.dynamic_rotate %0 by %c30_i32 dim 2 : vector<2x16x256xf32>, i32 -> vector<2x16x256xf32>
    %c32_i32_7 = arith.constant 32 : i32
    %39 = vector.broadcast %c32_i32_7 : i32 to vector<1x256xi32>
    %40 = arith.cmpi sge, %2, %39 : vector<1x256xi32>
    %c14_i32 = arith.constant 14 : i32
    %41 = vector.broadcast %c14_i32 : i32 to vector<1x256xi32>
    %42 = arith.cmpi slt, %4, %41 : vector<1x256xi32>
    %43 = arith.andi %40, %42 : vector<1x256xi1>
    %44 = vector.shape_cast %43 : vector<1x256xi1> to vector<1x1x256xi1>
    %cst_8 = arith.constant 0.000000e+00 : f32
    %45 = vector.shape_cast %44 : vector<1x1x256xi1> to vector<1x1x256xi1>
    %46 = vector.broadcast %45 : vector<1x1x256xi1> to vector<2x16x256xi1>
    %47 = vector.broadcast %cst_8 : f32 to vector<2x16x256xf32>
    %48 = arith.select %46, %38, %47 : vector<2x16x256xi1>, vector<2x16x256xf32>
    %49 = vector.extract_strided_slice %1 {offsets = [0, 2], sizes = [16, 1], strides = [1, 1]} : vector<16x128xf32> to vector<16x1xf32>
    %50 = vector.shape_cast %49 : vector<16x1xf32> to vector<1x16x1xf32>
    %51 = vector.broadcast %50 : vector<1x16x1xf32> to vector<2x16x256xf32>
    %52 = arith.mulf %48, %51 : vector<2x16x256xf32>
    %53 = arith.addf %37, %52 : vector<2x16x256xf32>
    %c2_i32_9 = arith.constant 2 : i32
    %54 = tpu.dynamic_rotate %0 by %c2_i32_9 dim 2 : vector<2x16x256xf32>, i32 -> vector<2x16x256xf32>
    %c2_i32_10 = arith.constant 2 : i32
    %55 = vector.broadcast %c2_i32_10 : i32 to vector<1x256xi32>
    %56 = arith.cmpi sge, %4, %55 : vector<1x256xi32>
    %57 = vector.shape_cast %56 : vector<1x256xi1> to vector<1x1x256xi1>
    %cst_11 = arith.constant 0.000000e+00 : f32
    %58 = vector.shape_cast %57 : vector<1x1x256xi1> to vector<1x1x256xi1>
    %59 = vector.broadcast %58 : vector<1x1x256xi1> to vector<2x16x256xi1>
    %60 = vector.broadcast %cst_11 : f32 to vector<2x16x256xf32>
    %61 = arith.select %59, %54, %60 : vector<2x16x256xi1>, vector<2x16x256xf32>
    %62 = vector.extract_strided_slice %1 {offsets = [0, 3], sizes = [16, 1], strides = [1, 1]} : vector<16x128xf32> to vector<16x1xf32>
    %63 = vector.shape_cast %62 : vector<16x1xf32> to vector<1x16x1xf32>
    %64 = vector.broadcast %63 : vector<1x16x1xf32> to vector<2x16x256xf32>
    %65 = arith.mulf %61, %64 : vector<2x16x256xf32>
    %66 = arith.addf %53, %65 : vector<2x16x256xf32>
    %67 = vector.extract_strided_slice %1 {offsets = [0, 4], sizes = [16, 1], strides = [1, 1]} : vector<16x128xf32> to vector<16x1xf32>
    %68 = vector.shape_cast %67 : vector<16x1xf32> to vector<1x16x1xf32>
    %69 = vector.broadcast %68 : vector<1x16x1xf32> to vector<2x16x256xf32>
    %70 = arith.mulf %0, %69 : vector<2x16x256xf32>
    %71 = arith.addf %66, %70 : vector<2x16x256xf32>
    %c254_i32 = arith.constant 254 : i32
    %72 = tpu.dynamic_rotate %0 by %c254_i32 dim 2 : vector<2x16x256xf32>, i32 -> vector<2x16x256xf32>
    %c14_i32_12 = arith.constant 14 : i32
    %73 = vector.broadcast %c14_i32_12 : i32 to vector<1x256xi32>
    %74 = arith.cmpi slt, %4, %73 : vector<1x256xi32>
    %75 = vector.shape_cast %74 : vector<1x256xi1> to vector<1x1x256xi1>
    %cst_13 = arith.constant 0.000000e+00 : f32
    %76 = vector.shape_cast %75 : vector<1x1x256xi1> to vector<1x1x256xi1>
    %77 = vector.broadcast %76 : vector<1x1x256xi1> to vector<2x16x256xi1>
    %78 = vector.broadcast %cst_13 : f32 to vector<2x16x256xf32>
    %79 = arith.select %77, %72, %78 : vector<2x16x256xi1>, vector<2x16x256xf32>
    %80 = vector.extract_strided_slice %1 {offsets = [0, 5], sizes = [16, 1], strides = [1, 1]} : vector<16x128xf32> to vector<16x1xf32>
    %81 = vector.shape_cast %80 : vector<16x1xf32> to vector<1x16x1xf32>
    %82 = vector.broadcast %81 : vector<1x16x1xf32> to vector<2x16x256xf32>
    %83 = arith.mulf %79, %82 : vector<2x16x256xf32>
    %84 = arith.addf %71, %83 : vector<2x16x256xf32>
    %c226_i32 = arith.constant 226 : i32
    %85 = tpu.dynamic_rotate %0 by %c226_i32 dim 2 : vector<2x16x256xf32>, i32 -> vector<2x16x256xf32>
    %c224_i32 = arith.constant 224 : i32
    %86 = vector.broadcast %c224_i32 : i32 to vector<1x256xi32>
    %87 = arith.cmpi slt, %2, %86 : vector<1x256xi32>
    %c2_i32_14 = arith.constant 2 : i32
    %88 = vector.broadcast %c2_i32_14 : i32 to vector<1x256xi32>
    %89 = arith.cmpi sge, %4, %88 : vector<1x256xi32>
    %90 = arith.andi %87, %89 : vector<1x256xi1>
    %91 = vector.shape_cast %90 : vector<1x256xi1> to vector<1x1x256xi1>
    %cst_15 = arith.constant 0.000000e+00 : f32
    %92 = vector.shape_cast %91 : vector<1x1x256xi1> to vector<1x1x256xi1>
    %93 = vector.broadcast %92 : vector<1x1x256xi1> to vector<2x16x256xi1>
    %94 = vector.broadcast %cst_15 : f32 to vector<2x16x256xf32>
    %95 = arith.select %93, %85, %94 : vector<2x16x256xi1>, vector<2x16x256xf32>
    %96 = vector.extract_strided_slice %1 {offsets = [0, 6], sizes = [16, 1], strides = [1, 1]} : vector<16x128xf32> to vector<16x1xf32>
    %97 = vector.shape_cast %96 : vector<16x1xf32> to vector<1x16x1xf32>
    %98 = vector.broadcast %97 : vector<1x16x1xf32> to vector<2x16x256xf32>
    %99 = arith.mulf %95, %98 : vector<2x16x256xf32>
    %100 = arith.addf %84, %99 : vector<2x16x256xf32>
    %c224_i32_16 = arith.constant 224 : i32
    %101 = tpu.dynamic_rotate %0 by %c224_i32_16 dim 2 : vector<2x16x256xf32>, i32 -> vector<2x16x256xf32>
    %c224_i32_17 = arith.constant 224 : i32
    %102 = vector.broadcast %c224_i32_17 : i32 to vector<1x256xi32>
    %103 = arith.cmpi slt, %2, %102 : vector<1x256xi32>
    %104 = vector.shape_cast %103 : vector<1x256xi1> to vector<1x1x256xi1>
    %cst_18 = arith.constant 0.000000e+00 : f32
    %105 = vector.shape_cast %104 : vector<1x1x256xi1> to vector<1x1x256xi1>
    %106 = vector.broadcast %105 : vector<1x1x256xi1> to vector<2x16x256xi1>
    %107 = vector.broadcast %cst_18 : f32 to vector<2x16x256xf32>
    %108 = arith.select %106, %101, %107 : vector<2x16x256xi1>, vector<2x16x256xf32>
    %109 = vector.extract_strided_slice %1 {offsets = [0, 7], sizes = [16, 1], strides = [1, 1]} : vector<16x128xf32> to vector<16x1xf32>
    %110 = vector.shape_cast %109 : vector<16x1xf32> to vector<1x16x1xf32>
    %111 = vector.broadcast %110 : vector<1x16x1xf32> to vector<2x16x256xf32>
    %112 = arith.mulf %108, %111 : vector<2x16x256xf32>
    %113 = arith.addf %100, %112 : vector<2x16x256xf32>
    %c222_i32 = arith.constant 222 : i32
    %114 = tpu.dynamic_rotate %0 by %c222_i32 dim 2 : vector<2x16x256xf32>, i32 -> vector<2x16x256xf32>
    %c224_i32_19 = arith.constant 224 : i32
    %115 = vector.broadcast %c224_i32_19 : i32 to vector<1x256xi32>
    %116 = arith.cmpi slt, %2, %115 : vector<1x256xi32>
    %c14_i32_20 = arith.constant 14 : i32
    %117 = vector.broadcast %c14_i32_20 : i32 to vector<1x256xi32>
    %118 = arith.cmpi slt, %4, %117 : vector<1x256xi32>
    %119 = arith.andi %116, %118 : vector<1x256xi1>
    %120 = vector.shape_cast %119 : vector<1x256xi1> to vector<1x1x256xi1>
    %cst_21 = arith.constant 0.000000e+00 : f32
    %121 = vector.shape_cast %120 : vector<1x1x256xi1> to vector<1x1x256xi1>
    %122 = vector.broadcast %121 : vector<1x1x256xi1> to vector<2x16x256xi1>
    %123 = vector.broadcast %cst_21 : f32 to vector<2x16x256xf32>
    %124 = arith.select %122, %114, %123 : vector<2x16x256xi1>, vector<2x16x256xf32>
    %125 = vector.extract_strided_slice %1 {offsets = [0, 8], sizes = [16, 1], strides = [1, 1]} : vector<16x128xf32> to vector<16x1xf32>
    %126 = vector.shape_cast %125 : vector<16x1xf32> to vector<1x16x1xf32>
    %127 = vector.broadcast %126 : vector<1x16x1xf32> to vector<2x16x256xf32>
    %128 = arith.mulf %124, %127 : vector<2x16x256xf32>
    %129 = arith.addf %113, %128 : vector<2x16x256xf32>
    %c5_i32 = arith.constant 5 : i32
    %130 = tpu.dynamic_rotate %0 by %c5_i32 dim 2 : vector<2x16x256xf32>, i32 -> vector<2x16x256xf32>
    %c5_i32_22 = arith.constant 5 : i32
    %131 = vector.broadcast %c5_i32_22 : i32 to vector<1x256xi32>
    %132 = arith.cmpi sge, %4, %131 : vector<1x256xi32>
    %133 = vector.shape_cast %132 : vector<1x256xi1> to vector<1x1x256xi1>
    %cst_23 = arith.constant 0.000000e+00 : f32
    %134 = vector.shape_cast %133 : vector<1x1x256xi1> to vector<1x1x256xi1>
    %135 = vector.broadcast %134 : vector<1x1x256xi1> to vector<2x16x256xi1>
    %136 = vector.broadcast %cst_23 : f32 to vector<2x16x256xf32>
    %137 = arith.select %135, %130, %136 : vector<2x16x256xi1>, vector<2x16x256xf32>
    %138 = vector.extract_strided_slice %1 {offsets = [0, 9], sizes = [16, 1], strides = [1, 1]} : vector<16x128xf32> to vector<16x1xf32>
    %139 = vector.shape_cast %138 : vector<16x1xf32> to vector<1x16x1xf32>
    %140 = vector.broadcast %139 : vector<1x16x1xf32> to vector<2x16x256xf32>
    %141 = arith.mulf %137, %140 : vector<2x16x256xf32>
    %142 = arith.addf %129, %141 : vector<2x16x256xf32>
    %c4_i32 = arith.constant 4 : i32
    %143 = tpu.dynamic_rotate %0 by %c4_i32 dim 2 : vector<2x16x256xf32>, i32 -> vector<2x16x256xf32>
    %c4_i32_24 = arith.constant 4 : i32
    %144 = vector.broadcast %c4_i32_24 : i32 to vector<1x256xi32>
    %145 = arith.cmpi sge, %4, %144 : vector<1x256xi32>
    %146 = vector.shape_cast %145 : vector<1x256xi1> to vector<1x1x256xi1>
    %cst_25 = arith.constant 0.000000e+00 : f32
    %147 = vector.shape_cast %146 : vector<1x1x256xi1> to vector<1x1x256xi1>
    %148 = vector.broadcast %147 : vector<1x1x256xi1> to vector<2x16x256xi1>
    %149 = vector.broadcast %cst_25 : f32 to vector<2x16x256xf32>
    %150 = arith.select %148, %143, %149 : vector<2x16x256xi1>, vector<2x16x256xf32>
    %151 = vector.extract_strided_slice %1 {offsets = [0, 10], sizes = [16, 1], strides = [1, 1]} : vector<16x128xf32> to vector<16x1xf32>
    %152 = vector.shape_cast %151 : vector<16x1xf32> to vector<1x16x1xf32>
    %153 = vector.broadcast %152 : vector<1x16x1xf32> to vector<2x16x256xf32>
    %154 = arith.mulf %150, %153 : vector<2x16x256xf32>
    %155 = arith.addf %142, %154 : vector<2x16x256xf32>
    %c3_i32 = arith.constant 3 : i32
    %156 = tpu.dynamic_rotate %0 by %c3_i32 dim 2 : vector<2x16x256xf32>, i32 -> vector<2x16x256xf32>
    %c3_i32_26 = arith.constant 3 : i32
    %157 = vector.broadcast %c3_i32_26 : i32 to vector<1x256xi32>
    %158 = arith.cmpi sge, %4, %157 : vector<1x256xi32>
    %159 = vector.shape_cast %158 : vector<1x256xi1> to vector<1x1x256xi1>
    %cst_27 = arith.constant 0.000000e+00 : f32
    %160 = vector.shape_cast %159 : vector<1x1x256xi1> to vector<1x1x256xi1>
    %161 = vector.broadcast %160 : vector<1x1x256xi1> to vector<2x16x256xi1>
    %162 = vector.broadcast %cst_27 : f32 to vector<2x16x256xf32>
    %163 = arith.select %161, %156, %162 : vector<2x16x256xi1>, vector<2x16x256xf32>
    %164 = vector.extract_strided_slice %1 {offsets = [0, 11], sizes = [16, 1], strides = [1, 1]} : vector<16x128xf32> to vector<16x1xf32>
    %165 = vector.shape_cast %164 : vector<16x1xf32> to vector<1x16x1xf32>
    %166 = vector.broadcast %165 : vector<1x16x1xf32> to vector<2x16x256xf32>
    %167 = arith.mulf %163, %166 : vector<2x16x256xf32>
    %168 = arith.addf %155, %167 : vector<2x16x256xf32>
    %c1_i32 = arith.constant 1 : i32
    %169 = tpu.dynamic_rotate %0 by %c1_i32 dim 2 : vector<2x16x256xf32>, i32 -> vector<2x16x256xf32>
    %c1_i32_28 = arith.constant 1 : i32
    %170 = vector.broadcast %c1_i32_28 : i32 to vector<1x256xi32>
    %171 = arith.cmpi sge, %4, %170 : vector<1x256xi32>
    %172 = vector.shape_cast %171 : vector<1x256xi1> to vector<1x1x256xi1>
    %cst_29 = arith.constant 0.000000e+00 : f32
    %173 = vector.shape_cast %172 : vector<1x1x256xi1> to vector<1x1x256xi1>
    %174 = vector.broadcast %173 : vector<1x1x256xi1> to vector<2x16x256xi1>
    %175 = vector.broadcast %cst_29 : f32 to vector<2x16x256xf32>
    %176 = arith.select %174, %169, %175 : vector<2x16x256xi1>, vector<2x16x256xf32>
    %177 = vector.extract_strided_slice %1 {offsets = [0, 12], sizes = [16, 1], strides = [1, 1]} : vector<16x128xf32> to vector<16x1xf32>
    %178 = vector.shape_cast %177 : vector<16x1xf32> to vector<1x16x1xf32>
    %179 = vector.broadcast %178 : vector<1x16x1xf32> to vector<2x16x256xf32>
    %180 = arith.mulf %176, %179 : vector<2x16x256xf32>
    %181 = arith.addf %168, %180 : vector<2x16x256xf32>
    %c255_i32 = arith.constant 255 : i32
    %182 = tpu.dynamic_rotate %0 by %c255_i32 dim 2 : vector<2x16x256xf32>, i32 -> vector<2x16x256xf32>
    %c15_i32_30 = arith.constant 15 : i32
    %183 = vector.broadcast %c15_i32_30 : i32 to vector<1x256xi32>
    %184 = arith.cmpi slt, %4, %183 : vector<1x256xi32>
    %185 = vector.shape_cast %184 : vector<1x256xi1> to vector<1x1x256xi1>
    %cst_31 = arith.constant 0.000000e+00 : f32
    %186 = vector.shape_cast %185 : vector<1x1x256xi1> to vector<1x1x256xi1>
    %187 = vector.broadcast %186 : vector<1x1x256xi1> to vector<2x16x256xi1>
    %188 = vector.broadcast %cst_31 : f32 to vector<2x16x256xf32>
    %189 = arith.select %187, %182, %188 : vector<2x16x256xi1>, vector<2x16x256xf32>
    %190 = vector.extract_strided_slice %1 {offsets = [0, 13], sizes = [16, 1], strides = [1, 1]} : vector<16x128xf32> to vector<16x1xf32>
    %191 = vector.shape_cast %190 : vector<16x1xf32> to vector<1x16x1xf32>
    %192 = vector.broadcast %191 : vector<1x16x1xf32> to vector<2x16x256xf32>
    %193 = arith.mulf %189, %192 : vector<2x16x256xf32>
    %194 = arith.addf %181, %193 : vector<2x16x256xf32>
    %c253_i32 = arith.constant 253 : i32
    %195 = tpu.dynamic_rotate %0 by %c253_i32 dim 2 : vector<2x16x256xf32>, i32 -> vector<2x16x256xf32>
    %c13_i32 = arith.constant 13 : i32
    %196 = vector.broadcast %c13_i32 : i32 to vector<1x256xi32>
    %197 = arith.cmpi slt, %4, %196 : vector<1x256xi32>
    %198 = vector.shape_cast %197 : vector<1x256xi1> to vector<1x1x256xi1>
    %cst_32 = arith.constant 0.000000e+00 : f32
    %199 = vector.shape_cast %198 : vector<1x1x256xi1> to vector<1x1x256xi1>
    %200 = vector.broadcast %199 : vector<1x1x256xi1> to vector<2x16x256xi1>
    %201 = vector.broadcast %cst_32 : f32 to vector<2x16x256xf32>
    %202 = arith.select %200, %195, %201 : vector<2x16x256xi1>, vector<2x16x256xf32>
    %203 = vector.extract_strided_slice %1 {offsets = [0, 14], sizes = [16, 1], strides = [1, 1]} : vector<16x128xf32> to vector<16x1xf32>
    %204 = vector.shape_cast %203 : vector<16x1xf32> to vector<1x16x1xf32>
    %205 = vector.broadcast %204 : vector<1x16x1xf32> to vector<2x16x256xf32>
    %206 = arith.mulf %202, %205 : vector<2x16x256xf32>
    %207 = arith.addf %194, %206 : vector<2x16x256xf32>
    %c252_i32 = arith.constant 252 : i32
    %208 = tpu.dynamic_rotate %0 by %c252_i32 dim 2 : vector<2x16x256xf32>, i32 -> vector<2x16x256xf32>
    %c12_i32 = arith.constant 12 : i32
    %209 = vector.broadcast %c12_i32 : i32 to vector<1x256xi32>
    %210 = arith.cmpi slt, %4, %209 : vector<1x256xi32>
    %211 = vector.shape_cast %210 : vector<1x256xi1> to vector<1x1x256xi1>
    %cst_33 = arith.constant 0.000000e+00 : f32
    %212 = vector.shape_cast %211 : vector<1x1x256xi1> to vector<1x1x256xi1>
    %213 = vector.broadcast %212 : vector<1x1x256xi1> to vector<2x16x256xi1>
    %214 = vector.broadcast %cst_33 : f32 to vector<2x16x256xf32>
    %215 = arith.select %213, %208, %214 : vector<2x16x256xi1>, vector<2x16x256xf32>
    %216 = vector.extract_strided_slice %1 {offsets = [0, 15], sizes = [16, 1], strides = [1, 1]} : vector<16x128xf32> to vector<16x1xf32>
    %217 = vector.shape_cast %216 : vector<16x1xf32> to vector<1x16x1xf32>
    %218 = vector.broadcast %217 : vector<1x16x1xf32> to vector<2x16x256xf32>
    %219 = arith.mulf %215, %218 : vector<2x16x256xf32>
    %220 = arith.addf %207, %219 : vector<2x16x256xf32>
    %c251_i32 = arith.constant 251 : i32
    %221 = tpu.dynamic_rotate %0 by %c251_i32 dim 2 : vector<2x16x256xf32>, i32 -> vector<2x16x256xf32>
    %c11_i32 = arith.constant 11 : i32
    %222 = vector.broadcast %c11_i32 : i32 to vector<1x256xi32>
    %223 = arith.cmpi slt, %4, %222 : vector<1x256xi32>
    %224 = vector.shape_cast %223 : vector<1x256xi1> to vector<1x1x256xi1>
    %cst_34 = arith.constant 0.000000e+00 : f32
    %225 = vector.shape_cast %224 : vector<1x1x256xi1> to vector<1x1x256xi1>
    %226 = vector.broadcast %225 : vector<1x1x256xi1> to vector<2x16x256xi1>
    %227 = vector.broadcast %cst_34 : f32 to vector<2x16x256xf32>
    %228 = arith.select %226, %221, %227 : vector<2x16x256xi1>, vector<2x16x256xf32>
    %229 = vector.extract_strided_slice %1 {offsets = [0, 16], sizes = [16, 1], strides = [1, 1]} : vector<16x128xf32> to vector<16x1xf32>
    %230 = vector.shape_cast %229 : vector<16x1xf32> to vector<1x16x1xf32>
    %231 = vector.broadcast %230 : vector<1x16x1xf32> to vector<2x16x256xf32>
    %232 = arith.mulf %228, %231 : vector<2x16x256xf32>
    %233 = arith.addf %220, %232 : vector<2x16x256xf32>
    %c80_i32 = arith.constant 80 : i32
    %234 = tpu.dynamic_rotate %0 by %c80_i32 dim 2 : vector<2x16x256xf32>, i32 -> vector<2x16x256xf32>
    %c80_i32_35 = arith.constant 80 : i32
    %235 = vector.broadcast %c80_i32_35 : i32 to vector<1x256xi32>
    %236 = arith.cmpi sge, %2, %235 : vector<1x256xi32>
    %237 = vector.shape_cast %236 : vector<1x256xi1> to vector<1x1x256xi1>
    %cst_36 = arith.constant 0.000000e+00 : f32
    %238 = vector.shape_cast %237 : vector<1x1x256xi1> to vector<1x1x256xi1>
    %239 = vector.broadcast %238 : vector<1x1x256xi1> to vector<2x16x256xi1>
    %240 = vector.broadcast %cst_36 : f32 to vector<2x16x256xf32>
    %241 = arith.select %239, %234, %240 : vector<2x16x256xi1>, vector<2x16x256xf32>
    %242 = vector.extract_strided_slice %1 {offsets = [0, 17], sizes = [16, 1], strides = [1, 1]} : vector<16x128xf32> to vector<16x1xf32>
    %243 = vector.shape_cast %242 : vector<16x1xf32> to vector<1x16x1xf32>
    %244 = vector.broadcast %243 : vector<1x16x1xf32> to vector<2x16x256xf32>
    %245 = arith.mulf %241, %244 : vector<2x16x256xf32>
    %246 = arith.addf %233, %245 : vector<2x16x256xf32>
    %c64_i32 = arith.constant 64 : i32
    %247 = tpu.dynamic_rotate %0 by %c64_i32 dim 2 : vector<2x16x256xf32>, i32 -> vector<2x16x256xf32>
    %c64_i32_37 = arith.constant 64 : i32
    %248 = vector.broadcast %c64_i32_37 : i32 to vector<1x256xi32>
    %249 = arith.cmpi sge, %2, %248 : vector<1x256xi32>
    %250 = vector.shape_cast %249 : vector<1x256xi1> to vector<1x1x256xi1>
    %cst_38 = arith.constant 0.000000e+00 : f32
    %251 = vector.shape_cast %250 : vector<1x1x256xi1> to vector<1x1x256xi1>
    %252 = vector.broadcast %251 : vector<1x1x256xi1> to vector<2x16x256xi1>
    %253 = vector.broadcast %cst_38 : f32 to vector<2x16x256xf32>
    %254 = arith.select %252, %247, %253 : vector<2x16x256xi1>, vector<2x16x256xf32>
    %255 = vector.extract_strided_slice %1 {offsets = [0, 18], sizes = [16, 1], strides = [1, 1]} : vector<16x128xf32> to vector<16x1xf32>
    %256 = vector.shape_cast %255 : vector<16x1xf32> to vector<1x16x1xf32>
    %257 = vector.broadcast %256 : vector<1x16x1xf32> to vector<2x16x256xf32>
    %258 = arith.mulf %254, %257 : vector<2x16x256xf32>
    %259 = arith.addf %246, %258 : vector<2x16x256xf32>
    %c48_i32 = arith.constant 48 : i32
    %260 = tpu.dynamic_rotate %0 by %c48_i32 dim 2 : vector<2x16x256xf32>, i32 -> vector<2x16x256xf32>
    %c48_i32_39 = arith.constant 48 : i32
    %261 = vector.broadcast %c48_i32_39 : i32 to vector<1x256xi32>
    %262 = arith.cmpi sge, %2, %261 : vector<1x256xi32>
    %263 = vector.shape_cast %262 : vector<1x256xi1> to vector<1x1x256xi1>
    %cst_40 = arith.constant 0.000000e+00 : f32
    %264 = vector.shape_cast %263 : vector<1x1x256xi1> to vector<1x1x256xi1>
    %265 = vector.broadcast %264 : vector<1x1x256xi1> to vector<2x16x256xi1>
    %266 = vector.broadcast %cst_40 : f32 to vector<2x16x256xf32>
    %267 = arith.select %265, %260, %266 : vector<2x16x256xi1>, vector<2x16x256xf32>
    %268 = vector.extract_strided_slice %1 {offsets = [0, 19], sizes = [16, 1], strides = [1, 1]} : vector<16x128xf32> to vector<16x1xf32>
    %269 = vector.shape_cast %268 : vector<16x1xf32> to vector<1x16x1xf32>
    %270 = vector.broadcast %269 : vector<1x16x1xf32> to vector<2x16x256xf32>
    %271 = arith.mulf %267, %270 : vector<2x16x256xf32>
    %272 = arith.addf %259, %271 : vector<2x16x256xf32>
    %c16_i32 = arith.constant 16 : i32
    %273 = tpu.dynamic_rotate %0 by %c16_i32 dim 2 : vector<2x16x256xf32>, i32 -> vector<2x16x256xf32>
    %c16_i32_41 = arith.constant 16 : i32
    %274 = vector.broadcast %c16_i32_41 : i32 to vector<1x256xi32>
    %275 = arith.cmpi sge, %2, %274 : vector<1x256xi32>
    %276 = vector.shape_cast %275 : vector<1x256xi1> to vector<1x1x256xi1>
    %cst_42 = arith.constant 0.000000e+00 : f32
    %277 = vector.shape_cast %276 : vector<1x1x256xi1> to vector<1x1x256xi1>
    %278 = vector.broadcast %277 : vector<1x1x256xi1> to vector<2x16x256xi1>
    %279 = vector.broadcast %cst_42 : f32 to vector<2x16x256xf32>
    %280 = arith.select %278, %273, %279 : vector<2x16x256xi1>, vector<2x16x256xf32>
    %281 = vector.extract_strided_slice %1 {offsets = [0, 20], sizes = [16, 1], strides = [1, 1]} : vector<16x128xf32> to vector<16x1xf32>
    %282 = vector.shape_cast %281 : vector<16x1xf32> to vector<1x16x1xf32>
    %283 = vector.broadcast %282 : vector<1x16x1xf32> to vector<2x16x256xf32>
    %284 = arith.mulf %280, %283 : vector<2x16x256xf32>
    %285 = arith.addf %272, %284 : vector<2x16x256xf32>
    %c240_i32 = arith.constant 240 : i32
    %286 = tpu.dynamic_rotate %0 by %c240_i32 dim 2 : vector<2x16x256xf32>, i32 -> vector<2x16x256xf32>
    %c240_i32_43 = arith.constant 240 : i32
    %287 = vector.broadcast %c240_i32_43 : i32 to vector<1x256xi32>
    %288 = arith.cmpi slt, %2, %287 : vector<1x256xi32>
    %289 = vector.shape_cast %288 : vector<1x256xi1> to vector<1x1x256xi1>
    %cst_44 = arith.constant 0.000000e+00 : f32
    %290 = vector.shape_cast %289 : vector<1x1x256xi1> to vector<1x1x256xi1>
    %291 = vector.broadcast %290 : vector<1x1x256xi1> to vector<2x16x256xi1>
    %292 = vector.broadcast %cst_44 : f32 to vector<2x16x256xf32>
    %293 = arith.select %291, %286, %292 : vector<2x16x256xi1>, vector<2x16x256xf32>
    %294 = vector.extract_strided_slice %1 {offsets = [0, 21], sizes = [16, 1], strides = [1, 1]} : vector<16x128xf32> to vector<16x1xf32>
    %295 = vector.shape_cast %294 : vector<16x1xf32> to vector<1x16x1xf32>
    %296 = vector.broadcast %295 : vector<1x16x1xf32> to vector<2x16x256xf32>
    %297 = arith.mulf %293, %296 : vector<2x16x256xf32>
    %298 = arith.addf %285, %297 : vector<2x16x256xf32>
    %c208_i32 = arith.constant 208 : i32
    %299 = tpu.dynamic_rotate %0 by %c208_i32 dim 2 : vector<2x16x256xf32>, i32 -> vector<2x16x256xf32>
    %c208_i32_45 = arith.constant 208 : i32
    %300 = vector.broadcast %c208_i32_45 : i32 to vector<1x256xi32>
    %301 = arith.cmpi slt, %2, %300 : vector<1x256xi32>
    %302 = vector.shape_cast %301 : vector<1x256xi1> to vector<1x1x256xi1>
    %cst_46 = arith.constant 0.000000e+00 : f32
    %303 = vector.shape_cast %302 : vector<1x1x256xi1> to vector<1x1x256xi1>
    %304 = vector.broadcast %303 : vector<1x1x256xi1> to vector<2x16x256xi1>
    %305 = vector.broadcast %cst_46 : f32 to vector<2x16x256xf32>
    %306 = arith.select %304, %299, %305 : vector<2x16x256xi1>, vector<2x16x256xf32>
    %307 = vector.extract_strided_slice %1 {offsets = [0, 22], sizes = [16, 1], strides = [1, 1]} : vector<16x128xf32> to vector<16x1xf32>
    %308 = vector.shape_cast %307 : vector<16x1xf32> to vector<1x16x1xf32>
    %309 = vector.broadcast %308 : vector<1x16x1xf32> to vector<2x16x256xf32>
    %310 = arith.mulf %306, %309 : vector<2x16x256xf32>
    %311 = arith.addf %298, %310 : vector<2x16x256xf32>
    %c192_i32 = arith.constant 192 : i32
    %312 = tpu.dynamic_rotate %0 by %c192_i32 dim 2 : vector<2x16x256xf32>, i32 -> vector<2x16x256xf32>
    %c192_i32_47 = arith.constant 192 : i32
    %313 = vector.broadcast %c192_i32_47 : i32 to vector<1x256xi32>
    %314 = arith.cmpi slt, %2, %313 : vector<1x256xi32>
    %315 = vector.shape_cast %314 : vector<1x256xi1> to vector<1x1x256xi1>
    %cst_48 = arith.constant 0.000000e+00 : f32
    %316 = vector.shape_cast %315 : vector<1x1x256xi1> to vector<1x1x256xi1>
    %317 = vector.broadcast %316 : vector<1x1x256xi1> to vector<2x16x256xi1>
    %318 = vector.broadcast %cst_48 : f32 to vector<2x16x256xf32>
    %319 = arith.select %317, %312, %318 : vector<2x16x256xi1>, vector<2x16x256xf32>
    %320 = vector.extract_strided_slice %1 {offsets = [0, 23], sizes = [16, 1], strides = [1, 1]} : vector<16x128xf32> to vector<16x1xf32>
    %321 = vector.shape_cast %320 : vector<16x1xf32> to vector<1x16x1xf32>
    %322 = vector.broadcast %321 : vector<1x16x1xf32> to vector<2x16x256xf32>
    %323 = arith.mulf %319, %322 : vector<2x16x256xf32>
    %324 = arith.addf %311, %323 : vector<2x16x256xf32>
    %c176_i32 = arith.constant 176 : i32
    %325 = tpu.dynamic_rotate %0 by %c176_i32 dim 2 : vector<2x16x256xf32>, i32 -> vector<2x16x256xf32>
    %c176_i32_49 = arith.constant 176 : i32
    %326 = vector.broadcast %c176_i32_49 : i32 to vector<1x256xi32>
    %327 = arith.cmpi slt, %2, %326 : vector<1x256xi32>
    %328 = vector.shape_cast %327 : vector<1x256xi1> to vector<1x1x256xi1>
    %cst_50 = arith.constant 0.000000e+00 : f32
    %329 = vector.shape_cast %328 : vector<1x1x256xi1> to vector<1x1x256xi1>
    %330 = vector.broadcast %329 : vector<1x1x256xi1> to vector<2x16x256xi1>
    %331 = vector.broadcast %cst_50 : f32 to vector<2x16x256xf32>
    %332 = arith.select %330, %325, %331 : vector<2x16x256xi1>, vector<2x16x256xf32>
    %333 = vector.extract_strided_slice %1 {offsets = [0, 24], sizes = [16, 1], strides = [1, 1]} : vector<16x128xf32> to vector<16x1xf32>
    %334 = vector.shape_cast %333 : vector<16x1xf32> to vector<1x16x1xf32>
    %335 = vector.broadcast %334 : vector<1x16x1xf32> to vector<2x16x256xf32>
    %336 = arith.mulf %332, %335 : vector<2x16x256xf32>
    %337 = arith.addf %324, %336 : vector<2x16x256xf32>
    %c0_51 = arith.constant 0 : index
    %c0_52 = arith.constant 0 : index
    %c0_53 = arith.constant 0 : index
    %338 = vector.load %arg4[%c0_51, %c0_52, %c0_53] : memref<2x16x256xf32, #tpu.memory_space<vmem>>, vector<2x16x256xf32>
    tpu.vector_store %arg4[%c0_51, %c0_52, %c0_53], %337 {strides = array<i32>} : memref<2x16x256xf32, #tpu.memory_space<vmem>>, vector<2x16x256xf32>,
    return
  }
  func.func @transform_0(%arg0: i32, %arg1: i32) -> (i32, i32, i32) {
    %c1_i32 = arith.constant 1 : i32
    %0 = arith.addi %arg1, %c1_i32 : i32
    %c0_i32 = arith.constant 0 : i32
    %c0_i32_0 = arith.constant 0 : i32
    return %arg0, %0, %c0_i32 : i32, i32, i32
  }
  func.func @transform_1(%arg0: i32, %arg1: i32) -> (i32, i32) {
    %c0_i32 = arith.constant 0 : i32
    %c0_i32_0 = arith.constant 0 : i32
    return %arg1, %c0_i32 : i32, i32
  }
  func.func @transform_2(%arg0: i32, %arg1: i32) -> (i32, i32, i32) {
    %c1_i32 = arith.constant 1 : i32
    %0 = arith.addi %arg1, %c1_i32 : i32
    %c0_i32 = arith.constant 0 : i32
    %c0_i32_0 = arith.constant 0 : i32
    return %arg0, %0, %c0_i32 : i32, i32, i32
  }
}

module attributes {stable_mosaic.version = 11 : i64} {
  func.func @_inception_kernel(%arg0: i32, %arg1: i32, %arg2: memref<2x16x256xf32, #tpu.memory_space<vmem>>, %arg3: memref<16x128xf32, #tpu.memory_space<vmem>>, %arg4: memref<2x16x256xf32, #tpu.memory_space<vmem>>) attributes {dimension_semantics = [#tpu.dimension_semantics<parallel>, #tpu.dimension_semantics<parallel>], iteration_bounds = array<i64: 1, 1>, scalar_prefetch = 0 : i64, scratch_operands = 0 : i64, tpu.core_type = #tpu.core_type<tc>, window_params = [{transform_indices = @transform_0, window_bounds = array<i64: 2, 16, 256>}, {transform_indices = @transform_1, window_bounds = array<i64: 16, 128>}, {transform_indices = @transform_2, window_bounds = array<i64: 2, 16, 256>}]} {
    %c0 = arith.constant 0 : index
    %c0_0 = arith.constant 0 : index
    %c0_1 = arith.constant 0 : index
    %0 = vector.load %arg2[%c0, %c0_0, %c0_1] : memref<2x16x256xf32, #tpu.memory_space<vmem>>, vector<2x16x256xf32>
    %c0_2 = arith.constant 0 : index
    %c0_3 = arith.constant 0 : index
    %1 = vector.load %arg3[%c0_2, %c0_3] : memref<16x128xf32, #tpu.memory_space<vmem>>, vector<16x128xf32>
    %2 = tpu.iota {dimensions = array<i32: 1>} : vector<1x256xi32>
    %c15_i32 = arith.constant 15 : i32
    %3 = vector.broadcast %c15_i32 : i32 to vector<1x256xi32>
    %4 = arith.andi %2, %3 : vector<1x256xi32>
    %5 = vector.extract_strided_slice %1 {offsets = [0, 32], sizes = [16, 1], strides = [1, 1]} : vector<16x128xf32> to vector<16x1xf32>
    %6 = vector.shape_cast %5 : vector<16x1xf32> to vector<1x16x1xf32>
    %7 = vector.shape_cast %6 : vector<1x16x1xf32> to vector<1x16x1xf32>
    %8 = vector.broadcast %7 : vector<1x16x1xf32> to vector<2x16x256xf32>
    %9 = vector.extract_strided_slice %0 {offsets = [0, 0, 222], sizes = [2, 16, 34], strides = [1, 1, 1]} : vector<2x16x256xf32> to vector<2x16x34xf32>
    %10 = vector.extract_strided_slice %0 {offsets = [0, 0, 0], sizes = [2, 16, 222], strides = [1, 1, 1]} : vector<2x16x256xf32> to vector<2x16x222xf32>
    %11 = tpu.concatenate %9, %10 in 2 : vector<2x16x34xf32>, vector<2x16x222xf32> -> vector<2x16x256xf32>
    %c32_i32 = arith.constant 32 : i32
    %12 = vector.broadcast %c32_i32 : i32 to vector<1x256xi32>
    %13 = arith.cmpi sge, %2, %12 : vector<1x256xi32>
    %c2_i32 = arith.constant 2 : i32
    %14 = vector.broadcast %c2_i32 : i32 to vector<1x256xi32>
    %15 = arith.cmpi sge, %4, %14 : vector<1x256xi32>
    %16 = arith.andi %13, %15 : vector<1x256xi1>
    %17 = vector.shape_cast %16 : vector<1x256xi1> to vector<1x1x256xi1>
    %cst = arith.constant 0.000000e+00 : f32
    %18 = vector.shape_cast %17 : vector<1x1x256xi1> to vector<1x1x256xi1>
    %19 = vector.broadcast %18 : vector<1x1x256xi1> to vector<2x16x256xi1>
    %20 = vector.broadcast %cst : f32 to vector<2x16x256xf32>
    %21 = arith.select %19, %11, %20 : vector<2x16x256xi1>, vector<2x16x256xf32>
    %22 = vector.extract_strided_slice %1 {offsets = [0, 0], sizes = [16, 1], strides = [1, 1]} : vector<16x128xf32> to vector<16x1xf32>
    %23 = vector.shape_cast %22 : vector<16x1xf32> to vector<1x16x1xf32>
    %24 = vector.broadcast %23 : vector<1x16x1xf32> to vector<2x16x256xf32>
    %25 = arith.mulf %21, %24 : vector<2x16x256xf32>
    %26 = arith.addf %8, %25 : vector<2x16x256xf32>
    %27 = vector.extract_strided_slice %0 {offsets = [0, 0, 224], sizes = [2, 16, 32], strides = [1, 1, 1]} : vector<2x16x256xf32> to vector<2x16x32xf32>
    %28 = vector.extract_strided_slice %0 {offsets = [0, 0, 0], sizes = [2, 16, 224], strides = [1, 1, 1]} : vector<2x16x256xf32> to vector<2x16x224xf32>
    %29 = tpu.concatenate %27, %28 in 2 : vector<2x16x32xf32>, vector<2x16x224xf32> -> vector<2x16x256xf32>
    %c32_i32_4 = arith.constant 32 : i32
    %30 = vector.broadcast %c32_i32_4 : i32 to vector<1x256xi32>
    %31 = arith.cmpi sge, %2, %30 : vector<1x256xi32>
    %32 = vector.shape_cast %31 : vector<1x256xi1> to vector<1x1x256xi1>
    %cst_5 = arith.constant 0.000000e+00 : f32
    %33 = vector.shape_cast %32 : vector<1x1x256xi1> to vector<1x1x256xi1>
    %34 = vector.broadcast %33 : vector<1x1x256xi1> to vector<2x16x256xi1>
    %35 = vector.broadcast %cst_5 : f32 to vector<2x16x256xf32>
    %36 = arith.select %34, %29, %35 : vector<2x16x256xi1>, vector<2x16x256xf32>
    %37 = vector.extract_strided_slice %1 {offsets = [0, 1], sizes = [16, 1], strides = [1, 1]} : vector<16x128xf32> to vector<16x1xf32>
    %38 = vector.shape_cast %37 : vector<16x1xf32> to vector<1x16x1xf32>
    %39 = vector.broadcast %38 : vector<1x16x1xf32> to vector<2x16x256xf32>
    %40 = arith.mulf %36, %39 : vector<2x16x256xf32>
    %41 = arith.addf %26, %40 : vector<2x16x256xf32>
    %42 = vector.extract_strided_slice %0 {offsets = [0, 0, 226], sizes = [2, 16, 30], strides = [1, 1, 1]} : vector<2x16x256xf32> to vector<2x16x30xf32>
    %43 = vector.extract_strided_slice %0 {offsets = [0, 0, 0], sizes = [2, 16, 226], strides = [1, 1, 1]} : vector<2x16x256xf32> to vector<2x16x226xf32>
    %44 = tpu.concatenate %42, %43 in 2 : vector<2x16x30xf32>, vector<2x16x226xf32> -> vector<2x16x256xf32>
    %c32_i32_6 = arith.constant 32 : i32
    %45 = vector.broadcast %c32_i32_6 : i32 to vector<1x256xi32>
    %46 = arith.cmpi sge, %2, %45 : vector<1x256xi32>
    %c14_i32 = arith.constant 14 : i32
    %47 = vector.broadcast %c14_i32 : i32 to vector<1x256xi32>
    %48 = arith.cmpi slt, %4, %47 : vector<1x256xi32>
    %49 = arith.andi %46, %48 : vector<1x256xi1>
    %50 = vector.shape_cast %49 : vector<1x256xi1> to vector<1x1x256xi1>
    %cst_7 = arith.constant 0.000000e+00 : f32
    %51 = vector.shape_cast %50 : vector<1x1x256xi1> to vector<1x1x256xi1>
    %52 = vector.broadcast %51 : vector<1x1x256xi1> to vector<2x16x256xi1>
    %53 = vector.broadcast %cst_7 : f32 to vector<2x16x256xf32>
    %54 = arith.select %52, %44, %53 : vector<2x16x256xi1>, vector<2x16x256xf32>
    %55 = vector.extract_strided_slice %1 {offsets = [0, 2], sizes = [16, 1], strides = [1, 1]} : vector<16x128xf32> to vector<16x1xf32>
    %56 = vector.shape_cast %55 : vector<16x1xf32> to vector<1x16x1xf32>
    %57 = vector.broadcast %56 : vector<1x16x1xf32> to vector<2x16x256xf32>
    %58 = arith.mulf %54, %57 : vector<2x16x256xf32>
    %59 = arith.addf %41, %58 : vector<2x16x256xf32>
    %60 = vector.extract_strided_slice %0 {offsets = [0, 0, 254], sizes = [2, 16, 2], strides = [1, 1, 1]} : vector<2x16x256xf32> to vector<2x16x2xf32>
    %61 = vector.extract_strided_slice %0 {offsets = [0, 0, 0], sizes = [2, 16, 254], strides = [1, 1, 1]} : vector<2x16x256xf32> to vector<2x16x254xf32>
    %62 = tpu.concatenate %60, %61 in 2 : vector<2x16x2xf32>, vector<2x16x254xf32> -> vector<2x16x256xf32>
    %c2_i32_8 = arith.constant 2 : i32
    %63 = vector.broadcast %c2_i32_8 : i32 to vector<1x256xi32>
    %64 = arith.cmpi sge, %4, %63 : vector<1x256xi32>
    %65 = vector.shape_cast %64 : vector<1x256xi1> to vector<1x1x256xi1>
    %cst_9 = arith.constant 0.000000e+00 : f32
    %66 = vector.shape_cast %65 : vector<1x1x256xi1> to vector<1x1x256xi1>
    %67 = vector.broadcast %66 : vector<1x1x256xi1> to vector<2x16x256xi1>
    %68 = vector.broadcast %cst_9 : f32 to vector<2x16x256xf32>
    %69 = arith.select %67, %62, %68 : vector<2x16x256xi1>, vector<2x16x256xf32>
    %70 = vector.extract_strided_slice %1 {offsets = [0, 3], sizes = [16, 1], strides = [1, 1]} : vector<16x128xf32> to vector<16x1xf32>
    %71 = vector.shape_cast %70 : vector<16x1xf32> to vector<1x16x1xf32>
    %72 = vector.broadcast %71 : vector<1x16x1xf32> to vector<2x16x256xf32>
    %73 = arith.mulf %69, %72 : vector<2x16x256xf32>
    %74 = arith.addf %59, %73 : vector<2x16x256xf32>
    %75 = vector.extract_strided_slice %1 {offsets = [0, 4], sizes = [16, 1], strides = [1, 1]} : vector<16x128xf32> to vector<16x1xf32>
    %76 = vector.shape_cast %75 : vector<16x1xf32> to vector<1x16x1xf32>
    %77 = vector.broadcast %76 : vector<1x16x1xf32> to vector<2x16x256xf32>
    %78 = arith.mulf %0, %77 : vector<2x16x256xf32>
    %79 = arith.addf %74, %78 : vector<2x16x256xf32>
    %80 = vector.extract_strided_slice %0 {offsets = [0, 0, 2], sizes = [2, 16, 254], strides = [1, 1, 1]} : vector<2x16x256xf32> to vector<2x16x254xf32>
    %81 = vector.extract_strided_slice %0 {offsets = [0, 0, 0], sizes = [2, 16, 2], strides = [1, 1, 1]} : vector<2x16x256xf32> to vector<2x16x2xf32>
    %82 = tpu.concatenate %80, %81 in 2 : vector<2x16x254xf32>, vector<2x16x2xf32> -> vector<2x16x256xf32>
    %c14_i32_10 = arith.constant 14 : i32
    %83 = vector.broadcast %c14_i32_10 : i32 to vector<1x256xi32>
    %84 = arith.cmpi slt, %4, %83 : vector<1x256xi32>
    %85 = vector.shape_cast %84 : vector<1x256xi1> to vector<1x1x256xi1>
    %cst_11 = arith.constant 0.000000e+00 : f32
    %86 = vector.shape_cast %85 : vector<1x1x256xi1> to vector<1x1x256xi1>
    %87 = vector.broadcast %86 : vector<1x1x256xi1> to vector<2x16x256xi1>
    %88 = vector.broadcast %cst_11 : f32 to vector<2x16x256xf32>
    %89 = arith.select %87, %82, %88 : vector<2x16x256xi1>, vector<2x16x256xf32>
    %90 = vector.extract_strided_slice %1 {offsets = [0, 5], sizes = [16, 1], strides = [1, 1]} : vector<16x128xf32> to vector<16x1xf32>
    %91 = vector.shape_cast %90 : vector<16x1xf32> to vector<1x16x1xf32>
    %92 = vector.broadcast %91 : vector<1x16x1xf32> to vector<2x16x256xf32>
    %93 = arith.mulf %89, %92 : vector<2x16x256xf32>
    %94 = arith.addf %79, %93 : vector<2x16x256xf32>
    %95 = vector.extract_strided_slice %0 {offsets = [0, 0, 30], sizes = [2, 16, 226], strides = [1, 1, 1]} : vector<2x16x256xf32> to vector<2x16x226xf32>
    %96 = vector.extract_strided_slice %0 {offsets = [0, 0, 0], sizes = [2, 16, 30], strides = [1, 1, 1]} : vector<2x16x256xf32> to vector<2x16x30xf32>
    %97 = tpu.concatenate %95, %96 in 2 : vector<2x16x226xf32>, vector<2x16x30xf32> -> vector<2x16x256xf32>
    %c224_i32 = arith.constant 224 : i32
    %98 = vector.broadcast %c224_i32 : i32 to vector<1x256xi32>
    %99 = arith.cmpi slt, %2, %98 : vector<1x256xi32>
    %c2_i32_12 = arith.constant 2 : i32
    %100 = vector.broadcast %c2_i32_12 : i32 to vector<1x256xi32>
    %101 = arith.cmpi sge, %4, %100 : vector<1x256xi32>
    %102 = arith.andi %99, %101 : vector<1x256xi1>
    %103 = vector.shape_cast %102 : vector<1x256xi1> to vector<1x1x256xi1>
    %cst_13 = arith.constant 0.000000e+00 : f32
    %104 = vector.shape_cast %103 : vector<1x1x256xi1> to vector<1x1x256xi1>
    %105 = vector.broadcast %104 : vector<1x1x256xi1> to vector<2x16x256xi1>
    %106 = vector.broadcast %cst_13 : f32 to vector<2x16x256xf32>
    %107 = arith.select %105, %97, %106 : vector<2x16x256xi1>, vector<2x16x256xf32>
    %108 = vector.extract_strided_slice %1 {offsets = [0, 6], sizes = [16, 1], strides = [1, 1]} : vector<16x128xf32> to vector<16x1xf32>
    %109 = vector.shape_cast %108 : vector<16x1xf32> to vector<1x16x1xf32>
    %110 = vector.broadcast %109 : vector<1x16x1xf32> to vector<2x16x256xf32>
    %111 = arith.mulf %107, %110 : vector<2x16x256xf32>
    %112 = arith.addf %94, %111 : vector<2x16x256xf32>
    %113 = vector.extract_strided_slice %0 {offsets = [0, 0, 32], sizes = [2, 16, 224], strides = [1, 1, 1]} : vector<2x16x256xf32> to vector<2x16x224xf32>
    %114 = vector.extract_strided_slice %0 {offsets = [0, 0, 0], sizes = [2, 16, 32], strides = [1, 1, 1]} : vector<2x16x256xf32> to vector<2x16x32xf32>
    %115 = tpu.concatenate %113, %114 in 2 : vector<2x16x224xf32>, vector<2x16x32xf32> -> vector<2x16x256xf32>
    %c224_i32_14 = arith.constant 224 : i32
    %116 = vector.broadcast %c224_i32_14 : i32 to vector<1x256xi32>
    %117 = arith.cmpi slt, %2, %116 : vector<1x256xi32>
    %118 = vector.shape_cast %117 : vector<1x256xi1> to vector<1x1x256xi1>
    %cst_15 = arith.constant 0.000000e+00 : f32
    %119 = vector.shape_cast %118 : vector<1x1x256xi1> to vector<1x1x256xi1>
    %120 = vector.broadcast %119 : vector<1x1x256xi1> to vector<2x16x256xi1>
    %121 = vector.broadcast %cst_15 : f32 to vector<2x16x256xf32>
    %122 = arith.select %120, %115, %121 : vector<2x16x256xi1>, vector<2x16x256xf32>
    %123 = vector.extract_strided_slice %1 {offsets = [0, 7], sizes = [16, 1], strides = [1, 1]} : vector<16x128xf32> to vector<16x1xf32>
    %124 = vector.shape_cast %123 : vector<16x1xf32> to vector<1x16x1xf32>
    %125 = vector.broadcast %124 : vector<1x16x1xf32> to vector<2x16x256xf32>
    %126 = arith.mulf %122, %125 : vector<2x16x256xf32>
    %127 = arith.addf %112, %126 : vector<2x16x256xf32>
    %128 = vector.extract_strided_slice %0 {offsets = [0, 0, 34], sizes = [2, 16, 222], strides = [1, 1, 1]} : vector<2x16x256xf32> to vector<2x16x222xf32>
    %129 = vector.extract_strided_slice %0 {offsets = [0, 0, 0], sizes = [2, 16, 34], strides = [1, 1, 1]} : vector<2x16x256xf32> to vector<2x16x34xf32>
    %130 = tpu.concatenate %128, %129 in 2 : vector<2x16x222xf32>, vector<2x16x34xf32> -> vector<2x16x256xf32>
    %c224_i32_16 = arith.constant 224 : i32
    %131 = vector.broadcast %c224_i32_16 : i32 to vector<1x256xi32>
    %132 = arith.cmpi slt, %2, %131 : vector<1x256xi32>
    %c14_i32_17 = arith.constant 14 : i32
    %133 = vector.broadcast %c14_i32_17 : i32 to vector<1x256xi32>
    %134 = arith.cmpi slt, %4, %133 : vector<1x256xi32>
    %135 = arith.andi %132, %134 : vector<1x256xi1>
    %136 = vector.shape_cast %135 : vector<1x256xi1> to vector<1x1x256xi1>
    %cst_18 = arith.constant 0.000000e+00 : f32
    %137 = vector.shape_cast %136 : vector<1x1x256xi1> to vector<1x1x256xi1>
    %138 = vector.broadcast %137 : vector<1x1x256xi1> to vector<2x16x256xi1>
    %139 = vector.broadcast %cst_18 : f32 to vector<2x16x256xf32>
    %140 = arith.select %138, %130, %139 : vector<2x16x256xi1>, vector<2x16x256xf32>
    %141 = vector.extract_strided_slice %1 {offsets = [0, 8], sizes = [16, 1], strides = [1, 1]} : vector<16x128xf32> to vector<16x1xf32>
    %142 = vector.shape_cast %141 : vector<16x1xf32> to vector<1x16x1xf32>
    %143 = vector.broadcast %142 : vector<1x16x1xf32> to vector<2x16x256xf32>
    %144 = arith.mulf %140, %143 : vector<2x16x256xf32>
    %145 = arith.addf %127, %144 : vector<2x16x256xf32>
    %146 = vector.extract_strided_slice %0 {offsets = [0, 0, 251], sizes = [2, 16, 5], strides = [1, 1, 1]} : vector<2x16x256xf32> to vector<2x16x5xf32>
    %147 = vector.extract_strided_slice %0 {offsets = [0, 0, 0], sizes = [2, 16, 251], strides = [1, 1, 1]} : vector<2x16x256xf32> to vector<2x16x251xf32>
    %148 = tpu.concatenate %146, %147 in 2 : vector<2x16x5xf32>, vector<2x16x251xf32> -> vector<2x16x256xf32>
    %c5_i32 = arith.constant 5 : i32
    %149 = vector.broadcast %c5_i32 : i32 to vector<1x256xi32>
    %150 = arith.cmpi sge, %4, %149 : vector<1x256xi32>
    %151 = vector.shape_cast %150 : vector<1x256xi1> to vector<1x1x256xi1>
    %cst_19 = arith.constant 0.000000e+00 : f32
    %152 = vector.shape_cast %151 : vector<1x1x256xi1> to vector<1x1x256xi1>
    %153 = vector.broadcast %152 : vector<1x1x256xi1> to vector<2x16x256xi1>
    %154 = vector.broadcast %cst_19 : f32 to vector<2x16x256xf32>
    %155 = arith.select %153, %148, %154 : vector<2x16x256xi1>, vector<2x16x256xf32>
    %156 = vector.extract_strided_slice %1 {offsets = [0, 9], sizes = [16, 1], strides = [1, 1]} : vector<16x128xf32> to vector<16x1xf32>
    %157 = vector.shape_cast %156 : vector<16x1xf32> to vector<1x16x1xf32>
    %158 = vector.broadcast %157 : vector<1x16x1xf32> to vector<2x16x256xf32>
    %159 = arith.mulf %155, %158 : vector<2x16x256xf32>
    %160 = arith.addf %145, %159 : vector<2x16x256xf32>
    %161 = vector.extract_strided_slice %0 {offsets = [0, 0, 252], sizes = [2, 16, 4], strides = [1, 1, 1]} : vector<2x16x256xf32> to vector<2x16x4xf32>
    %162 = vector.extract_strided_slice %0 {offsets = [0, 0, 0], sizes = [2, 16, 252], strides = [1, 1, 1]} : vector<2x16x256xf32> to vector<2x16x252xf32>
    %163 = tpu.concatenate %161, %162 in 2 : vector<2x16x4xf32>, vector<2x16x252xf32> -> vector<2x16x256xf32>
    %c4_i32 = arith.constant 4 : i32
    %164 = vector.broadcast %c4_i32 : i32 to vector<1x256xi32>
    %165 = arith.cmpi sge, %4, %164 : vector<1x256xi32>
    %166 = vector.shape_cast %165 : vector<1x256xi1> to vector<1x1x256xi1>
    %cst_20 = arith.constant 0.000000e+00 : f32
    %167 = vector.shape_cast %166 : vector<1x1x256xi1> to vector<1x1x256xi1>
    %168 = vector.broadcast %167 : vector<1x1x256xi1> to vector<2x16x256xi1>
    %169 = vector.broadcast %cst_20 : f32 to vector<2x16x256xf32>
    %170 = arith.select %168, %163, %169 : vector<2x16x256xi1>, vector<2x16x256xf32>
    %171 = vector.extract_strided_slice %1 {offsets = [0, 10], sizes = [16, 1], strides = [1, 1]} : vector<16x128xf32> to vector<16x1xf32>
    %172 = vector.shape_cast %171 : vector<16x1xf32> to vector<1x16x1xf32>
    %173 = vector.broadcast %172 : vector<1x16x1xf32> to vector<2x16x256xf32>
    %174 = arith.mulf %170, %173 : vector<2x16x256xf32>
    %175 = arith.addf %160, %174 : vector<2x16x256xf32>
    %176 = vector.extract_strided_slice %0 {offsets = [0, 0, 253], sizes = [2, 16, 3], strides = [1, 1, 1]} : vector<2x16x256xf32> to vector<2x16x3xf32>
    %177 = vector.extract_strided_slice %0 {offsets = [0, 0, 0], sizes = [2, 16, 253], strides = [1, 1, 1]} : vector<2x16x256xf32> to vector<2x16x253xf32>
    %178 = tpu.concatenate %176, %177 in 2 : vector<2x16x3xf32>, vector<2x16x253xf32> -> vector<2x16x256xf32>
    %c3_i32 = arith.constant 3 : i32
    %179 = vector.broadcast %c3_i32 : i32 to vector<1x256xi32>
    %180 = arith.cmpi sge, %4, %179 : vector<1x256xi32>
    %181 = vector.shape_cast %180 : vector<1x256xi1> to vector<1x1x256xi1>
    %cst_21 = arith.constant 0.000000e+00 : f32
    %182 = vector.shape_cast %181 : vector<1x1x256xi1> to vector<1x1x256xi1>
    %183 = vector.broadcast %182 : vector<1x1x256xi1> to vector<2x16x256xi1>
    %184 = vector.broadcast %cst_21 : f32 to vector<2x16x256xf32>
    %185 = arith.select %183, %178, %184 : vector<2x16x256xi1>, vector<2x16x256xf32>
    %186 = vector.extract_strided_slice %1 {offsets = [0, 11], sizes = [16, 1], strides = [1, 1]} : vector<16x128xf32> to vector<16x1xf32>
    %187 = vector.shape_cast %186 : vector<16x1xf32> to vector<1x16x1xf32>
    %188 = vector.broadcast %187 : vector<1x16x1xf32> to vector<2x16x256xf32>
    %189 = arith.mulf %185, %188 : vector<2x16x256xf32>
    %190 = arith.addf %175, %189 : vector<2x16x256xf32>
    %191 = vector.extract_strided_slice %0 {offsets = [0, 0, 255], sizes = [2, 16, 1], strides = [1, 1, 1]} : vector<2x16x256xf32> to vector<2x16x1xf32>
    %192 = vector.extract_strided_slice %0 {offsets = [0, 0, 0], sizes = [2, 16, 255], strides = [1, 1, 1]} : vector<2x16x256xf32> to vector<2x16x255xf32>
    %193 = tpu.concatenate %191, %192 in 2 : vector<2x16x1xf32>, vector<2x16x255xf32> -> vector<2x16x256xf32>
    %c1_i32 = arith.constant 1 : i32
    %194 = vector.broadcast %c1_i32 : i32 to vector<1x256xi32>
    %195 = arith.cmpi sge, %4, %194 : vector<1x256xi32>
    %196 = vector.shape_cast %195 : vector<1x256xi1> to vector<1x1x256xi1>
    %cst_22 = arith.constant 0.000000e+00 : f32
    %197 = vector.shape_cast %196 : vector<1x1x256xi1> to vector<1x1x256xi1>
    %198 = vector.broadcast %197 : vector<1x1x256xi1> to vector<2x16x256xi1>
    %199 = vector.broadcast %cst_22 : f32 to vector<2x16x256xf32>
    %200 = arith.select %198, %193, %199 : vector<2x16x256xi1>, vector<2x16x256xf32>
    %201 = vector.extract_strided_slice %1 {offsets = [0, 12], sizes = [16, 1], strides = [1, 1]} : vector<16x128xf32> to vector<16x1xf32>
    %202 = vector.shape_cast %201 : vector<16x1xf32> to vector<1x16x1xf32>
    %203 = vector.broadcast %202 : vector<1x16x1xf32> to vector<2x16x256xf32>
    %204 = arith.mulf %200, %203 : vector<2x16x256xf32>
    %205 = arith.addf %190, %204 : vector<2x16x256xf32>
    %206 = vector.extract_strided_slice %0 {offsets = [0, 0, 1], sizes = [2, 16, 255], strides = [1, 1, 1]} : vector<2x16x256xf32> to vector<2x16x255xf32>
    %207 = vector.extract_strided_slice %0 {offsets = [0, 0, 0], sizes = [2, 16, 1], strides = [1, 1, 1]} : vector<2x16x256xf32> to vector<2x16x1xf32>
    %208 = tpu.concatenate %206, %207 in 2 : vector<2x16x255xf32>, vector<2x16x1xf32> -> vector<2x16x256xf32>
    %c15_i32_23 = arith.constant 15 : i32
    %209 = vector.broadcast %c15_i32_23 : i32 to vector<1x256xi32>
    %210 = arith.cmpi slt, %4, %209 : vector<1x256xi32>
    %211 = vector.shape_cast %210 : vector<1x256xi1> to vector<1x1x256xi1>
    %cst_24 = arith.constant 0.000000e+00 : f32
    %212 = vector.shape_cast %211 : vector<1x1x256xi1> to vector<1x1x256xi1>
    %213 = vector.broadcast %212 : vector<1x1x256xi1> to vector<2x16x256xi1>
    %214 = vector.broadcast %cst_24 : f32 to vector<2x16x256xf32>
    %215 = arith.select %213, %208, %214 : vector<2x16x256xi1>, vector<2x16x256xf32>
    %216 = vector.extract_strided_slice %1 {offsets = [0, 13], sizes = [16, 1], strides = [1, 1]} : vector<16x128xf32> to vector<16x1xf32>
    %217 = vector.shape_cast %216 : vector<16x1xf32> to vector<1x16x1xf32>
    %218 = vector.broadcast %217 : vector<1x16x1xf32> to vector<2x16x256xf32>
    %219 = arith.mulf %215, %218 : vector<2x16x256xf32>
    %220 = arith.addf %205, %219 : vector<2x16x256xf32>
    %221 = vector.extract_strided_slice %0 {offsets = [0, 0, 3], sizes = [2, 16, 253], strides = [1, 1, 1]} : vector<2x16x256xf32> to vector<2x16x253xf32>
    %222 = vector.extract_strided_slice %0 {offsets = [0, 0, 0], sizes = [2, 16, 3], strides = [1, 1, 1]} : vector<2x16x256xf32> to vector<2x16x3xf32>
    %223 = tpu.concatenate %221, %222 in 2 : vector<2x16x253xf32>, vector<2x16x3xf32> -> vector<2x16x256xf32>
    %c13_i32 = arith.constant 13 : i32
    %224 = vector.broadcast %c13_i32 : i32 to vector<1x256xi32>
    %225 = arith.cmpi slt, %4, %224 : vector<1x256xi32>
    %226 = vector.shape_cast %225 : vector<1x256xi1> to vector<1x1x256xi1>
    %cst_25 = arith.constant 0.000000e+00 : f32
    %227 = vector.shape_cast %226 : vector<1x1x256xi1> to vector<1x1x256xi1>
    %228 = vector.broadcast %227 : vector<1x1x256xi1> to vector<2x16x256xi1>
    %229 = vector.broadcast %cst_25 : f32 to vector<2x16x256xf32>
    %230 = arith.select %228, %223, %229 : vector<2x16x256xi1>, vector<2x16x256xf32>
    %231 = vector.extract_strided_slice %1 {offsets = [0, 14], sizes = [16, 1], strides = [1, 1]} : vector<16x128xf32> to vector<16x1xf32>
    %232 = vector.shape_cast %231 : vector<16x1xf32> to vector<1x16x1xf32>
    %233 = vector.broadcast %232 : vector<1x16x1xf32> to vector<2x16x256xf32>
    %234 = arith.mulf %230, %233 : vector<2x16x256xf32>
    %235 = arith.addf %220, %234 : vector<2x16x256xf32>
    %236 = vector.extract_strided_slice %0 {offsets = [0, 0, 4], sizes = [2, 16, 252], strides = [1, 1, 1]} : vector<2x16x256xf32> to vector<2x16x252xf32>
    %237 = vector.extract_strided_slice %0 {offsets = [0, 0, 0], sizes = [2, 16, 4], strides = [1, 1, 1]} : vector<2x16x256xf32> to vector<2x16x4xf32>
    %238 = tpu.concatenate %236, %237 in 2 : vector<2x16x252xf32>, vector<2x16x4xf32> -> vector<2x16x256xf32>
    %c12_i32 = arith.constant 12 : i32
    %239 = vector.broadcast %c12_i32 : i32 to vector<1x256xi32>
    %240 = arith.cmpi slt, %4, %239 : vector<1x256xi32>
    %241 = vector.shape_cast %240 : vector<1x256xi1> to vector<1x1x256xi1>
    %cst_26 = arith.constant 0.000000e+00 : f32
    %242 = vector.shape_cast %241 : vector<1x1x256xi1> to vector<1x1x256xi1>
    %243 = vector.broadcast %242 : vector<1x1x256xi1> to vector<2x16x256xi1>
    %244 = vector.broadcast %cst_26 : f32 to vector<2x16x256xf32>
    %245 = arith.select %243, %238, %244 : vector<2x16x256xi1>, vector<2x16x256xf32>
    %246 = vector.extract_strided_slice %1 {offsets = [0, 15], sizes = [16, 1], strides = [1, 1]} : vector<16x128xf32> to vector<16x1xf32>
    %247 = vector.shape_cast %246 : vector<16x1xf32> to vector<1x16x1xf32>
    %248 = vector.broadcast %247 : vector<1x16x1xf32> to vector<2x16x256xf32>
    %249 = arith.mulf %245, %248 : vector<2x16x256xf32>
    %250 = arith.addf %235, %249 : vector<2x16x256xf32>
    %251 = vector.extract_strided_slice %0 {offsets = [0, 0, 5], sizes = [2, 16, 251], strides = [1, 1, 1]} : vector<2x16x256xf32> to vector<2x16x251xf32>
    %252 = vector.extract_strided_slice %0 {offsets = [0, 0, 0], sizes = [2, 16, 5], strides = [1, 1, 1]} : vector<2x16x256xf32> to vector<2x16x5xf32>
    %253 = tpu.concatenate %251, %252 in 2 : vector<2x16x251xf32>, vector<2x16x5xf32> -> vector<2x16x256xf32>
    %c11_i32 = arith.constant 11 : i32
    %254 = vector.broadcast %c11_i32 : i32 to vector<1x256xi32>
    %255 = arith.cmpi slt, %4, %254 : vector<1x256xi32>
    %256 = vector.shape_cast %255 : vector<1x256xi1> to vector<1x1x256xi1>
    %cst_27 = arith.constant 0.000000e+00 : f32
    %257 = vector.shape_cast %256 : vector<1x1x256xi1> to vector<1x1x256xi1>
    %258 = vector.broadcast %257 : vector<1x1x256xi1> to vector<2x16x256xi1>
    %259 = vector.broadcast %cst_27 : f32 to vector<2x16x256xf32>
    %260 = arith.select %258, %253, %259 : vector<2x16x256xi1>, vector<2x16x256xf32>
    %261 = vector.extract_strided_slice %1 {offsets = [0, 16], sizes = [16, 1], strides = [1, 1]} : vector<16x128xf32> to vector<16x1xf32>
    %262 = vector.shape_cast %261 : vector<16x1xf32> to vector<1x16x1xf32>
    %263 = vector.broadcast %262 : vector<1x16x1xf32> to vector<2x16x256xf32>
    %264 = arith.mulf %260, %263 : vector<2x16x256xf32>
    %265 = arith.addf %250, %264 : vector<2x16x256xf32>
    %266 = vector.extract_strided_slice %0 {offsets = [0, 0, 176], sizes = [2, 16, 80], strides = [1, 1, 1]} : vector<2x16x256xf32> to vector<2x16x80xf32>
    %267 = vector.extract_strided_slice %0 {offsets = [0, 0, 0], sizes = [2, 16, 176], strides = [1, 1, 1]} : vector<2x16x256xf32> to vector<2x16x176xf32>
    %268 = tpu.concatenate %266, %267 in 2 : vector<2x16x80xf32>, vector<2x16x176xf32> -> vector<2x16x256xf32>
    %c80_i32 = arith.constant 80 : i32
    %269 = vector.broadcast %c80_i32 : i32 to vector<1x256xi32>
    %270 = arith.cmpi sge, %2, %269 : vector<1x256xi32>
    %271 = vector.shape_cast %270 : vector<1x256xi1> to vector<1x1x256xi1>
    %cst_28 = arith.constant 0.000000e+00 : f32
    %272 = vector.shape_cast %271 : vector<1x1x256xi1> to vector<1x1x256xi1>
    %273 = vector.broadcast %272 : vector<1x1x256xi1> to vector<2x16x256xi1>
    %274 = vector.broadcast %cst_28 : f32 to vector<2x16x256xf32>
    %275 = arith.select %273, %268, %274 : vector<2x16x256xi1>, vector<2x16x256xf32>
    %276 = vector.extract_strided_slice %1 {offsets = [0, 17], sizes = [16, 1], strides = [1, 1]} : vector<16x128xf32> to vector<16x1xf32>
    %277 = vector.shape_cast %276 : vector<16x1xf32> to vector<1x16x1xf32>
    %278 = vector.broadcast %277 : vector<1x16x1xf32> to vector<2x16x256xf32>
    %279 = arith.mulf %275, %278 : vector<2x16x256xf32>
    %280 = arith.addf %265, %279 : vector<2x16x256xf32>
    %281 = vector.extract_strided_slice %0 {offsets = [0, 0, 192], sizes = [2, 16, 64], strides = [1, 1, 1]} : vector<2x16x256xf32> to vector<2x16x64xf32>
    %282 = vector.extract_strided_slice %0 {offsets = [0, 0, 0], sizes = [2, 16, 192], strides = [1, 1, 1]} : vector<2x16x256xf32> to vector<2x16x192xf32>
    %283 = tpu.concatenate %281, %282 in 2 : vector<2x16x64xf32>, vector<2x16x192xf32> -> vector<2x16x256xf32>
    %c64_i32 = arith.constant 64 : i32
    %284 = vector.broadcast %c64_i32 : i32 to vector<1x256xi32>
    %285 = arith.cmpi sge, %2, %284 : vector<1x256xi32>
    %286 = vector.shape_cast %285 : vector<1x256xi1> to vector<1x1x256xi1>
    %cst_29 = arith.constant 0.000000e+00 : f32
    %287 = vector.shape_cast %286 : vector<1x1x256xi1> to vector<1x1x256xi1>
    %288 = vector.broadcast %287 : vector<1x1x256xi1> to vector<2x16x256xi1>
    %289 = vector.broadcast %cst_29 : f32 to vector<2x16x256xf32>
    %290 = arith.select %288, %283, %289 : vector<2x16x256xi1>, vector<2x16x256xf32>
    %291 = vector.extract_strided_slice %1 {offsets = [0, 18], sizes = [16, 1], strides = [1, 1]} : vector<16x128xf32> to vector<16x1xf32>
    %292 = vector.shape_cast %291 : vector<16x1xf32> to vector<1x16x1xf32>
    %293 = vector.broadcast %292 : vector<1x16x1xf32> to vector<2x16x256xf32>
    %294 = arith.mulf %290, %293 : vector<2x16x256xf32>
    %295 = arith.addf %280, %294 : vector<2x16x256xf32>
    %296 = vector.extract_strided_slice %0 {offsets = [0, 0, 208], sizes = [2, 16, 48], strides = [1, 1, 1]} : vector<2x16x256xf32> to vector<2x16x48xf32>
    %297 = vector.extract_strided_slice %0 {offsets = [0, 0, 0], sizes = [2, 16, 208], strides = [1, 1, 1]} : vector<2x16x256xf32> to vector<2x16x208xf32>
    %298 = tpu.concatenate %296, %297 in 2 : vector<2x16x48xf32>, vector<2x16x208xf32> -> vector<2x16x256xf32>
    %c48_i32 = arith.constant 48 : i32
    %299 = vector.broadcast %c48_i32 : i32 to vector<1x256xi32>
    %300 = arith.cmpi sge, %2, %299 : vector<1x256xi32>
    %301 = vector.shape_cast %300 : vector<1x256xi1> to vector<1x1x256xi1>
    %cst_30 = arith.constant 0.000000e+00 : f32
    %302 = vector.shape_cast %301 : vector<1x1x256xi1> to vector<1x1x256xi1>
    %303 = vector.broadcast %302 : vector<1x1x256xi1> to vector<2x16x256xi1>
    %304 = vector.broadcast %cst_30 : f32 to vector<2x16x256xf32>
    %305 = arith.select %303, %298, %304 : vector<2x16x256xi1>, vector<2x16x256xf32>
    %306 = vector.extract_strided_slice %1 {offsets = [0, 19], sizes = [16, 1], strides = [1, 1]} : vector<16x128xf32> to vector<16x1xf32>
    %307 = vector.shape_cast %306 : vector<16x1xf32> to vector<1x16x1xf32>
    %308 = vector.broadcast %307 : vector<1x16x1xf32> to vector<2x16x256xf32>
    %309 = arith.mulf %305, %308 : vector<2x16x256xf32>
    %310 = arith.addf %295, %309 : vector<2x16x256xf32>
    %311 = vector.extract_strided_slice %0 {offsets = [0, 0, 240], sizes = [2, 16, 16], strides = [1, 1, 1]} : vector<2x16x256xf32> to vector<2x16x16xf32>
    %312 = vector.extract_strided_slice %0 {offsets = [0, 0, 0], sizes = [2, 16, 240], strides = [1, 1, 1]} : vector<2x16x256xf32> to vector<2x16x240xf32>
    %313 = tpu.concatenate %311, %312 in 2 : vector<2x16x16xf32>, vector<2x16x240xf32> -> vector<2x16x256xf32>
    %c16_i32 = arith.constant 16 : i32
    %314 = vector.broadcast %c16_i32 : i32 to vector<1x256xi32>
    %315 = arith.cmpi sge, %2, %314 : vector<1x256xi32>
    %316 = vector.shape_cast %315 : vector<1x256xi1> to vector<1x1x256xi1>
    %cst_31 = arith.constant 0.000000e+00 : f32
    %317 = vector.shape_cast %316 : vector<1x1x256xi1> to vector<1x1x256xi1>
    %318 = vector.broadcast %317 : vector<1x1x256xi1> to vector<2x16x256xi1>
    %319 = vector.broadcast %cst_31 : f32 to vector<2x16x256xf32>
    %320 = arith.select %318, %313, %319 : vector<2x16x256xi1>, vector<2x16x256xf32>
    %321 = vector.extract_strided_slice %1 {offsets = [0, 20], sizes = [16, 1], strides = [1, 1]} : vector<16x128xf32> to vector<16x1xf32>
    %322 = vector.shape_cast %321 : vector<16x1xf32> to vector<1x16x1xf32>
    %323 = vector.broadcast %322 : vector<1x16x1xf32> to vector<2x16x256xf32>
    %324 = arith.mulf %320, %323 : vector<2x16x256xf32>
    %325 = arith.addf %310, %324 : vector<2x16x256xf32>
    %326 = vector.extract_strided_slice %0 {offsets = [0, 0, 16], sizes = [2, 16, 240], strides = [1, 1, 1]} : vector<2x16x256xf32> to vector<2x16x240xf32>
    %327 = vector.extract_strided_slice %0 {offsets = [0, 0, 0], sizes = [2, 16, 16], strides = [1, 1, 1]} : vector<2x16x256xf32> to vector<2x16x16xf32>
    %328 = tpu.concatenate %326, %327 in 2 : vector<2x16x240xf32>, vector<2x16x16xf32> -> vector<2x16x256xf32>
    %c240_i32 = arith.constant 240 : i32
    %329 = vector.broadcast %c240_i32 : i32 to vector<1x256xi32>
    %330 = arith.cmpi slt, %2, %329 : vector<1x256xi32>
    %331 = vector.shape_cast %330 : vector<1x256xi1> to vector<1x1x256xi1>
    %cst_32 = arith.constant 0.000000e+00 : f32
    %332 = vector.shape_cast %331 : vector<1x1x256xi1> to vector<1x1x256xi1>
    %333 = vector.broadcast %332 : vector<1x1x256xi1> to vector<2x16x256xi1>
    %334 = vector.broadcast %cst_32 : f32 to vector<2x16x256xf32>
    %335 = arith.select %333, %328, %334 : vector<2x16x256xi1>, vector<2x16x256xf32>
    %336 = vector.extract_strided_slice %1 {offsets = [0, 21], sizes = [16, 1], strides = [1, 1]} : vector<16x128xf32> to vector<16x1xf32>
    %337 = vector.shape_cast %336 : vector<16x1xf32> to vector<1x16x1xf32>
    %338 = vector.broadcast %337 : vector<1x16x1xf32> to vector<2x16x256xf32>
    %339 = arith.mulf %335, %338 : vector<2x16x256xf32>
    %340 = arith.addf %325, %339 : vector<2x16x256xf32>
    %341 = vector.extract_strided_slice %0 {offsets = [0, 0, 48], sizes = [2, 16, 208], strides = [1, 1, 1]} : vector<2x16x256xf32> to vector<2x16x208xf32>
    %342 = vector.extract_strided_slice %0 {offsets = [0, 0, 0], sizes = [2, 16, 48], strides = [1, 1, 1]} : vector<2x16x256xf32> to vector<2x16x48xf32>
    %343 = tpu.concatenate %341, %342 in 2 : vector<2x16x208xf32>, vector<2x16x48xf32> -> vector<2x16x256xf32>
    %c208_i32 = arith.constant 208 : i32
    %344 = vector.broadcast %c208_i32 : i32 to vector<1x256xi32>
    %345 = arith.cmpi slt, %2, %344 : vector<1x256xi32>
    %346 = vector.shape_cast %345 : vector<1x256xi1> to vector<1x1x256xi1>
    %cst_33 = arith.constant 0.000000e+00 : f32
    %347 = vector.shape_cast %346 : vector<1x1x256xi1> to vector<1x1x256xi1>
    %348 = vector.broadcast %347 : vector<1x1x256xi1> to vector<2x16x256xi1>
    %349 = vector.broadcast %cst_33 : f32 to vector<2x16x256xf32>
    %350 = arith.select %348, %343, %349 : vector<2x16x256xi1>, vector<2x16x256xf32>
    %351 = vector.extract_strided_slice %1 {offsets = [0, 22], sizes = [16, 1], strides = [1, 1]} : vector<16x128xf32> to vector<16x1xf32>
    %352 = vector.shape_cast %351 : vector<16x1xf32> to vector<1x16x1xf32>
    %353 = vector.broadcast %352 : vector<1x16x1xf32> to vector<2x16x256xf32>
    %354 = arith.mulf %350, %353 : vector<2x16x256xf32>
    %355 = arith.addf %340, %354 : vector<2x16x256xf32>
    %356 = vector.extract_strided_slice %0 {offsets = [0, 0, 64], sizes = [2, 16, 192], strides = [1, 1, 1]} : vector<2x16x256xf32> to vector<2x16x192xf32>
    %357 = vector.extract_strided_slice %0 {offsets = [0, 0, 0], sizes = [2, 16, 64], strides = [1, 1, 1]} : vector<2x16x256xf32> to vector<2x16x64xf32>
    %358 = tpu.concatenate %356, %357 in 2 : vector<2x16x192xf32>, vector<2x16x64xf32> -> vector<2x16x256xf32>
    %c192_i32 = arith.constant 192 : i32
    %359 = vector.broadcast %c192_i32 : i32 to vector<1x256xi32>
    %360 = arith.cmpi slt, %2, %359 : vector<1x256xi32>
    %361 = vector.shape_cast %360 : vector<1x256xi1> to vector<1x1x256xi1>
    %cst_34 = arith.constant 0.000000e+00 : f32
    %362 = vector.shape_cast %361 : vector<1x1x256xi1> to vector<1x1x256xi1>
    %363 = vector.broadcast %362 : vector<1x1x256xi1> to vector<2x16x256xi1>
    %364 = vector.broadcast %cst_34 : f32 to vector<2x16x256xf32>
    %365 = arith.select %363, %358, %364 : vector<2x16x256xi1>, vector<2x16x256xf32>
    %366 = vector.extract_strided_slice %1 {offsets = [0, 23], sizes = [16, 1], strides = [1, 1]} : vector<16x128xf32> to vector<16x1xf32>
    %367 = vector.shape_cast %366 : vector<16x1xf32> to vector<1x16x1xf32>
    %368 = vector.broadcast %367 : vector<1x16x1xf32> to vector<2x16x256xf32>
    %369 = arith.mulf %365, %368 : vector<2x16x256xf32>
    %370 = arith.addf %355, %369 : vector<2x16x256xf32>
    %371 = vector.extract_strided_slice %0 {offsets = [0, 0, 80], sizes = [2, 16, 176], strides = [1, 1, 1]} : vector<2x16x256xf32> to vector<2x16x176xf32>
    %372 = vector.extract_strided_slice %0 {offsets = [0, 0, 0], sizes = [2, 16, 80], strides = [1, 1, 1]} : vector<2x16x256xf32> to vector<2x16x80xf32>
    %373 = tpu.concatenate %371, %372 in 2 : vector<2x16x176xf32>, vector<2x16x80xf32> -> vector<2x16x256xf32>
    %c176_i32 = arith.constant 176 : i32
    %374 = vector.broadcast %c176_i32 : i32 to vector<1x256xi32>
    %375 = arith.cmpi slt, %2, %374 : vector<1x256xi32>
    %376 = vector.shape_cast %375 : vector<1x256xi1> to vector<1x1x256xi1>
    %cst_35 = arith.constant 0.000000e+00 : f32
    %377 = vector.shape_cast %376 : vector<1x1x256xi1> to vector<1x1x256xi1>
    %378 = vector.broadcast %377 : vector<1x1x256xi1> to vector<2x16x256xi1>
    %379 = vector.broadcast %cst_35 : f32 to vector<2x16x256xf32>
    %380 = arith.select %378, %373, %379 : vector<2x16x256xi1>, vector<2x16x256xf32>
    %381 = vector.extract_strided_slice %1 {offsets = [0, 24], sizes = [16, 1], strides = [1, 1]} : vector<16x128xf32> to vector<16x1xf32>
    %382 = vector.shape_cast %381 : vector<16x1xf32> to vector<1x16x1xf32>
    %383 = vector.broadcast %382 : vector<1x16x1xf32> to vector<2x16x256xf32>
    %384 = arith.mulf %380, %383 : vector<2x16x256xf32>
    %385 = arith.addf %370, %384 : vector<2x16x256xf32>
    %c0_36 = arith.constant 0 : index
    %c0_37 = arith.constant 0 : index
    %c0_38 = arith.constant 0 : index
    %386 = vector.load %arg4[%c0_36, %c0_37, %c0_38] : memref<2x16x256xf32, #tpu.memory_space<vmem>>, vector<2x16x256xf32>
    tpu.vector_store %arg4[%c0_36, %c0_37, %c0_38], %385 {strides = array<i32>} : memref<2x16x256xf32, #tpu.memory_space<vmem>>, vector<2x16x256xf32>,
    return
  }
  func.func @transform_0(%arg0: i32, %arg1: i32) -> (i32, i32, i32) {
    %c1_i32 = arith.constant 1 : i32
    %0 = arith.addi %arg1, %c1_i32 : i32
    %c0_i32 = arith.constant 0 : i32
    %c0_i32_0 = arith.constant 0 : i32
    return %arg0, %0, %c0_i32 : i32, i32, i32
  }
  func.func @transform_1(%arg0: i32, %arg1: i32) -> (i32, i32) {
    %c0_i32 = arith.constant 0 : i32
    %c0_i32_0 = arith.constant 0 : i32
    return %arg1, %c0_i32 : i32, i32
  }
  func.func @transform_2(%arg0: i32, %arg1: i32) -> (i32, i32, i32) {
    %c1_i32 = arith.constant 1 : i32
    %0 = arith.addi %arg1, %c1_i32 : i32
    %c0_i32 = arith.constant 0 : i32
    %c0_i32_0 = arith.constant 0 : i32
    return %arg0, %0, %c0_i32 : i32, i32, i32
  }
}

</mosaic_0001>

<llo_original>
// kernel: _lambda_.1
$region0: #{_lambda_.1}
  #allocation0 [shape = 'u32[]', space=smem, size = 0x4, offset = 0x4, fixed_abs, tag = 'smem constant byte address 0x4 - core index']
  #allocation1 [shape = 'u32[144,128]{1,0:T(1,128)}', space=vmem, size = 0x12000, scoped, tag = 'internal scratch']
  %s0 = inlined_call_operand.vmem [shape: f32[2,32,256], index: 0, kind: input, shape index: {}, may-alias: {0,2}]
  %s1 = inlined_call_operand.vmem [shape: f32[16,128], index: 1, kind: input, shape index: {}]
  %s2 = inlined_call_operand.vmem [shape: f32[2,32,256], index: 2, kind: output, shape index: {}, may-alias: {0,2}]
  %s3 = sld [smem:[#allocation0]]
  $region60: #{_lambda_.1} parent=0
    _
  %s5 = ssub.s32 1, %s3
  %s6 = scalar_select 0, %s5, %s3
  $region1: #{_lambda_.1} parent=0
    #allocation2 [shape = 'u8[32768]{0}', space=vmem, size = 0x8000, scoped, tag = 'input window, operand 0, single buffered']
    #allocation3 [shape = 'u8[32768]{0}', space=vmem, size = 0x8000, scoped, tag = 'output window, operand 0, single buffered']
    // Predicated region
    $region2: #{_lambda_.1} parent=1 // pred_check
      _
    $region3: #{_lambda_.1} parent=1 // pred_check_branch
      %8 = sbr.rel (0) target = $region5
    $region4: #{_lambda_.1} parent=1 // pred_region
      %s9 = sadd.s32 0, 1
      %s10 = smul.u32 2, %s9
      %s11 = smul.addr %s10, 2
      %s12 = smul.addr %s11, 8
      %s13 = scalar_lea.vmem %s0, %s12
      // Predicated region
      $region6: #{_lambda_.1} parent=4 // pred_check
        _
      $region7: #{_lambda_.1} parent=4 // pred_check_branch
        %15 = sbr.rel (0) target = $region9
      $region8: #{_lambda_.1} parent=4 // pred_region
        // Predicated region
        $region10: #{_lambda_.1} parent=8 // pred_check
          _
        $region11: #{_lambda_.1} parent=8 // pred_check_branch
          %17 = sbr.rel (0) target = $region13
        $region12: #{_lambda_.1} parent=8 // pred_region
          loop: start=0, step=1, limit=1
          $region14: #{_lambda_.1} parent=12 // loop_pre_header
            _
          $region15: #{_lambda_.1} parent=12 // loop_header
            %s19 = sphi 0, %s23
            %p20 = scmp.ge.s32.totalorder %s19, 1
            %s24 = sphi %s13, %s13
            %s25 = sphi [#allocation2], [#allocation2]
          $region16: #{_lambda_.1} parent=12 // loop_header_branch
            %22 = sbr.rel (%p20) target = $region20
          $region17: #{_lambda_.1} parent=12 // loop_body
            %v26 = vld [vmem:[%s24] sm:$0xff]
            %27 = vst [vmem:[%s25] sm:$0xff] %v26
            %v28 = vld [vmem:[%s24 + $0x8] sm:$0xff]
            %29 = vst [vmem:[%s25 + $0x8] sm:$0xff] %v28
            %v30 = vld [vmem:[%s24 + $0x10] sm:$0xff]
            %31 = vst [vmem:[%s25 + $0x10] sm:$0xff] %v30
            %v32 = vld [vmem:[%s24 + $0x18] sm:$0xff]
            %33 = vst [vmem:[%s25 + $0x18] sm:$0xff] %v32
            %v34 = vld [vmem:[%s24 + $0x40] sm:$0xff]
            %35 = vst [vmem:[%s25 + $0x20] sm:$0xff] %v34
            %v36 = vld [vmem:[%s24 + $0x48] sm:$0xff]
            %37 = vst [vmem:[%s25 + $0x28] sm:$0xff] %v36
            %v38 = vld [vmem:[%s24 + $0x50] sm:$0xff]
            %39 = vst [vmem:[%s25 + $0x30] sm:$0xff] %v38
            %v40 = vld [vmem:[%s24 + $0x58] sm:$0xff]
            %41 = vst [vmem:[%s25 + $0x38] sm:$0xff] %v40
          $region18: #{_lambda_.1} parent=12 // loop_footer
            %s23 = sadd.s32 1, %s19
          $region19: #{_lambda_.1} parent=12 // loop_footer_branch
            %18 = sbr.rel target = $region15
          $region20: #{_lambda_.1} parent=12 // loop_exit
            _
        $region13: #{_lambda_.1} parent=8 // pred_fallthru
          _
        // Predicated region
        $region21: #{_lambda_.1} parent=8 // pred_check
          _
        $region22: #{_lambda_.1} parent=8 // pred_check_branch
          %43 = sbr.rel target = $region24
        $region23: #{_lambda_.1} parent=8 // pred_region
          _
        $region24: #{_lambda_.1} parent=8 // pred_fallthru
          _
      $region9: #{_lambda_.1} parent=4 // pred_fallthru
        _
      %44 = vnop
    $region5: #{_lambda_.1} parent=1 // pred_fallthru
      _
    // Predicated region
    $region25: #{_lambda_.1} parent=1 // pred_check
      _
    $region26: #{_lambda_.1} parent=1 // pred_check_branch
      %46 = sbr.rel (0) target = $region28
    $region27: #{_lambda_.1} parent=1 // pred_region
      _
    $region28: #{_lambda_.1} parent=1 // pred_fallthru
      _
    // Predicated region
    $region29: #{_lambda_.1} parent=1 // pred_check
      _
    $region30: #{_lambda_.1} parent=1 // pred_check_branch
      %48 = sbr.rel (0) target = $region32
    $region31: #{_lambda_.1} parent=1 // pred_region
      _
    $region32: #{_lambda_.1} parent=1 // pred_fallthru
      _
    %s49 = sadd.s32 0, 1
    %s50 = smul.u32 2, %s49
    %s51 = sadd.s32 0, 1
    %s52 = smul.u32 2, %s51
    %v53 = vld [vmem:[#allocation2] sm:$0xff]
    %v54 = vld [vmem:[#allocation2 + $0x8] sm:$0xff]
    %v55 = vld [vmem:[#allocation2 + $0x10] sm:$0xff]
    %v56 = vld [vmem:[#allocation2 + $0x18] sm:$0xff]
    %v57 = vld [vmem:[#allocation2 + $0x20] sm:$0xff]
    %v58 = vld [vmem:[#allocation2 + $0x28] sm:$0xff]
    %v59 = vld [vmem:[#allocation2 + $0x30] sm:$0xff]
    %v60 = vld [vmem:[#allocation2 + $0x38] sm:$0xff]
    %v61 = vld [vmem:[%s1] sm:$0xff]
    %v62 = vld [vmem:[%s1 + $0x8] sm:$0xff]
    %v63 = vlaneseq
    %v64 = vand.u32 %v63, 127
    %v65 = vadd.s32 %v64, 128
    %v66 = vand.u32 %v64, 15
    %v67 = vand.u32 %v65, 15
    %69 = vset.pattern.permute.xlu0 32
    %70 = vperm.xlu0 %69, %v61
    %v71 = vpop.permute.xlu0 %70
    %74 = vset.pattern.permute.xlu0 32
    %75 = vperm.xlu0 %74, %v62
    %v76 = vpop.permute.xlu0 %75
    %78 = vrot.lane.b32.xlu0 %v53, 34
    %v79 = vpop.permute.xlu0 %78
    %80 = vrot.lane.b32.xlu0 %v55, 34
    %v81 = vpop.permute.xlu0 %80
    %82 = vrot.lane.b32.xlu0 %v57, 34
    %v83 = vpop.permute.xlu0 %82
    %84 = vrot.lane.b32.xlu0 %v59, 34
    %v85 = vpop.permute.xlu0 %84
    %86 = vrot.lane.b32.xlu0 %v54, 34
    %v87 = vpop.permute.xlu0 %86
    %88 = vrot.lane.b32.xlu0 %v56, 34
    %v89 = vpop.permute.xlu0 %88
    %90 = vrot.lane.b32.xlu0 %v58, 34
    %v91 = vpop.permute.xlu0 %90
    %92 = vrot.lane.b32.xlu0 %v60, 34
    %v93 = vpop.permute.xlu0 %92
    %vm94 = vcmp.lt.s32.totalorder %v64, 34
    %v95 = vsel %vm94, %v79, %v87
    %v96 = vsel %vm94, %v81, %v89
    %v97 = vsel %vm94, %v83, %v91
    %v98 = vsel %vm94, %v85, %v93
    %v99 = vsel %vm94, %v87, %v79
    %v100 = vsel %vm94, %v89, %v81
    %v101 = vsel %vm94, %v91, %v83
    %v102 = vsel %vm94, %v93, %v85
    %vm103 = vcmp.ge.s32.totalorder %v64, 32
    %vm104 = vcmp.ge.s32.totalorder %v65, 32
    %vm105 = vcmp.ge.s32.totalorder %v66, 2
    %vm106 = vcmp.ge.s32.totalorder %v67, 2
    %vm107 = vmand %vm103, %vm105
    %vm108 = vmand %vm104, %vm106
    %v109 = vsel %vm107, 1, 0
    %v110 = vsel %vm108, 1, 0
    %vm111 = vcmp.eq.s32.totalorder %v109, 1
    %vm112 = vcmp.eq.s32.totalorder %v110, 1
    %v113 = vsel %vm111, %v99, 0.0
    %v114 = vsel %vm112, %v95, 0.0
    %v115 = vsel %vm111, %v100, 0.0
    %v116 = vsel %vm112, %v96, 0.0
    %v117 = vsel %vm111, %v101, 0.0
    %v118 = vsel %vm112, %v97, 0.0
    %v119 = vsel %vm111, %v102, 0.0
    %v120 = vsel %vm112, %v98, 0.0
    %121 = vset.pattern.permute.xlu0 0
    %122 = vperm.xlu0 %121, %v61
    %v123 = vpop.permute.xlu0 %122
    %125 = vset.pattern.permute.xlu0 0
    %126 = vperm.xlu0 %125, %v62
    %v127 = vpop.permute.xlu0 %126
    %v129 = vmul.f32 %v113, %v123
    %v130 = vmul.f32 %v114, %v123
    %v131 = vmul.f32 %v115, %v127
    %v132 = vmul.f32 %v116, %v127
    %v133 = vmul.f32 %v117, %v123
    %v134 = vmul.f32 %v118, %v123
    %v135 = vmul.f32 %v119, %v127
    %v136 = vmul.f32 %v120, %v127
    %v137 = vadd.f32 %v71, %v129
    %v138 = vadd.f32 %v71, %v130
    %v139 = vadd.f32 %v76, %v131
    %v140 = vadd.f32 %v76, %v132
    %v141 = vadd.f32 %v71, %v133
    %v142 = vadd.f32 %v71, %v134
    %v143 = vadd.f32 %v76, %v135
    %v144 = vadd.f32 %v76, %v136
    %145 = vrot.lane.b32.xlu0 %v53, 32
    %v146 = vpop.permute.xlu0 %145
    %147 = vrot.lane.b32.xlu0 %v55, 32
    %v148 = vpop.permute.xlu0 %147
    %149 = vrot.lane.b32.xlu0 %v57, 32
    %v150 = vpop.permute.xlu0 %149
    %151 = vrot.lane.b32.xlu0 %v59, 32
    %v152 = vpop.permute.xlu0 %151
    %153 = vrot.lane.b32.xlu0 %v54, 32
    %v154 = vpop.permute.xlu0 %153
    %155 = vrot.lane.b32.xlu0 %v56, 32
    %v156 = vpop.permute.xlu0 %155
    %157 = vrot.lane.b32.xlu0 %v58, 32
    %v158 = vpop.permute.xlu0 %157
    %159 = vrot.lane.b32.xlu0 %v60, 32
    %v160 = vpop.permute.xlu0 %159
    %vm161 = vcmp.lt.s32.totalorder %v64, 32
    %v162 = vsel %vm161, %v146, %v154
    %v163 = vsel %vm161, %v148, %v156
    %v164 = vsel %vm161, %v150, %v158
    %v165 = vsel %vm161, %v152, %v160
    %v166 = vsel %vm161, %v154, %v146
    %v167 = vsel %vm161, %v156, %v148
    %v168 = vsel %vm161, %v158, %v150
    %v169 = vsel %vm161, %v160, %v152
    %v170 = vsel %vm103, 1, 0
    %v171 = vsel %vm104, 1, 0
    %vm172 = vcmp.eq.s32.totalorder %v170, 1
    %vm173 = vcmp.eq.s32.totalorder %v171, 1
    %v174 = vsel %vm172, %v166, 0.0
    %v175 = vsel %vm173, %v162, 0.0
    %v176 = vsel %vm172, %v167, 0.0
    %v177 = vsel %vm173, %v163, 0.0
    %v178 = vsel %vm172, %v168, 0.0
    %v179 = vsel %vm173, %v164, 0.0
    %v180 = vsel %vm172, %v169, 0.0
    %v181 = vsel %vm173, %v165, 0.0
    %182 = vset.pattern.permute.xlu0 1
    %183 = vperm.xlu0 %182, %v61
    %v184 = vpop.permute.xlu0 %183
    %186 = vset.pattern.permute.xlu0 1
    %187 = vperm.xlu0 %186, %v62
    %v188 = vpop.permute.xlu0 %187
    %v190 = vmul.f32 %v174, %v184
    %v191 = vmul.f32 %v175, %v184
    %v192 = vmul.f32 %v176, %v188
    %v193 = vmul.f32 %v177, %v188
    %v194 = vmul.f32 %v178, %v184
    %v195 = vmul.f32 %v179, %v184
    %v196 = vmul.f32 %v180, %v188
    %v197 = vmul.f32 %v181, %v188
    %v198 = vadd.f32 %v137, %v190
    %v199 = vadd.f32 %v138, %v191
    %v200 = vadd.f32 %v139, %v192
    %v201 = vadd.f32 %v140, %v193
    %v202 = vadd.f32 %v141, %v194
    %v203 = vadd.f32 %v142, %v195
    %v204 = vadd.f32 %v143, %v196
    %v205 = vadd.f32 %v144, %v197
    %206 = vrot.lane.b32.xlu0 %v53, 30
    %v207 = vpop.permute.xlu0 %206
    %208 = vrot.lane.b32.xlu0 %v55, 30
    %v209 = vpop.permute.xlu0 %208
    %210 = vrot.lane.b32.xlu0 %v57, 30
    %v211 = vpop.permute.xlu0 %210
    %212 = vrot.lane.b32.xlu0 %v59, 30
    %v213 = vpop.permute.xlu0 %212
    %214 = vrot.lane.b32.xlu0 %v54, 30
    %v215 = vpop.permute.xlu0 %214
    %216 = vrot.lane.b32.xlu0 %v56, 30
    %v217 = vpop.permute.xlu0 %216
    %218 = vrot.lane.b32.xlu0 %v58, 30
    %v219 = vpop.permute.xlu0 %218
    %220 = vrot.lane.b32.xlu0 %v60, 30
    %v221 = vpop.permute.xlu0 %220
    %vm222 = vcmp.lt.s32.totalorder %v64, 30
    %v223 = vsel %vm222, %v207, %v215
    %v224 = vsel %vm222, %v209, %v217
    %v225 = vsel %vm222, %v211, %v219
    %v226 = vsel %vm222, %v213, %v221
    %v227 = vsel %vm222, %v215, %v207
    %v228 = vsel %vm222, %v217, %v209
    %v229 = vsel %vm222, %v219, %v211
    %v230 = vsel %vm222, %v221, %v213
    %vm231 = vcmp.lt.s32.totalorder %v66, 14
    %vm232 = vcmp.lt.s32.totalorder %v67, 14
    %vm233 = vmand %vm103, %vm231
    %vm234 = vmand %vm104, %vm232
    %v235 = vsel %vm233, 1, 0
    %v236 = vsel %vm234, 1, 0
    %vm237 = vcmp.eq.s32.totalorder %v235, 1
    %vm238 = vcmp.eq.s32.totalorder %v236, 1
    %v239 = vsel %vm237, %v227, 0.0
    %v240 = vsel %vm238, %v223, 0.0
    %v241 = vsel %vm237, %v228, 0.0
    %v242 = vsel %vm238, %v224, 0.0
    %v243 = vsel %vm237, %v229, 0.0
    %v244 = vsel %vm238, %v225, 0.0
    %v245 = vsel %vm237, %v230, 0.0
    %v246 = vsel %vm238, %v226, 0.0
    %247 = vset.pattern.permute.xlu0 2
    %248 = vperm.xlu0 %247, %v61
    %v249 = vpop.permute.xlu0 %248
    %251 = vset.pattern.permute.xlu0 2
    %252 = vperm.xlu0 %251, %v62
    %v253 = vpop.permute.xlu0 %252
    %v255 = vmul.f32 %v239, %v249
    %v256 = vmul.f32 %v240, %v249
    %v257 = vmul.f32 %v241, %v253
    %v258 = vmul.f32 %v242, %v253
    %v259 = vmul.f32 %v243, %v249
    %v260 = vmul.f32 %v244, %v249
    %v261 = vmul.f32 %v245, %v253
    %v262 = vmul.f32 %v246, %v253
    %v263 = vadd.f32 %v198, %v255
    %v264 = vadd.f32 %v199, %v256
    %v265 = vadd.f32 %v200, %v257
    %v266 = vadd.f32 %v201, %v258
    %v267 = vadd.f32 %v202, %v259
    %v268 = vadd.f32 %v203, %v260
    %v269 = vadd.f32 %v204, %v261
    %v270 = vadd.f32 %v205, %v262
    %271 = vrot.lane.b32.xlu0 %v53, 2
    %v272 = vpop.permute.xlu0 %271
    %273 = vrot.lane.b32.xlu0 %v55, 2
    %v274 = vpop.permute.xlu0 %273
    %275 = vrot.lane.b32.xlu0 %v57, 2
    %v276 = vpop.permute.xlu0 %275
    %277 = vrot.lane.b32.xlu0 %v59, 2
    %v278 = vpop.permute.xlu0 %277
    %279 = vrot.lane.b32.xlu0 %v54, 2
    %v280 = vpop.permute.xlu0 %279
    %281 = vrot.lane.b32.xlu0 %v56, 2
    %v282 = vpop.permute.xlu0 %281
    %283 = vrot.lane.b32.xlu0 %v58, 2
    %v284 = vpop.permute.xlu0 %283
    %285 = vrot.lane.b32.xlu0 %v60, 2
    %v286 = vpop.permute.xlu0 %285
    %vm287 = vcmp.lt.s32.totalorder %v64, 2
    %v288 = vsel %vm287, %v272, %v280
    %v289 = vsel %vm287, %v274, %v282
    %v290 = vsel %vm287, %v276, %v284
    %v291 = vsel %vm287, %v278, %v286
    %v292 = vsel %vm287, %v280, %v272
    %v293 = vsel %vm287, %v282, %v274
    %v294 = vsel %vm287, %v284, %v276
    %v295 = vsel %vm287, %v286, %v278
    %v296 = vsel %vm105, 1, 0
    %v297 = vsel %vm106, 1, 0
    %vm298 = vcmp.eq.s32.totalorder %v296, 1
    %vm299 = vcmp.eq.s32.totalorder %v297, 1
    %v300 = vsel %vm298, %v292, 0.0
    %v301 = vsel %vm299, %v288, 0.0
    %v302 = vsel %vm298, %v293, 0.0
    %v303 = vsel %vm299, %v289, 0.0
    %v304 = vsel %vm298, %v294, 0.0
    %v305 = vsel %vm299, %v290, 0.0
    %v306 = vsel %vm298, %v295, 0.0
    %v307 = vsel %vm299, %v291, 0.0
    %308 = vset.pattern.permute.xlu0 3
    %309 = vperm.xlu0 %308, %v61
    %v310 = vpop.permute.xlu0 %309
    %312 = vset.pattern.permute.xlu0 3
    %313 = vperm.xlu0 %312, %v62
    %v314 = vpop.permute.xlu0 %313
    %v316 = vmul.f32 %v300, %v310
    %v317 = vmul.f32 %v301, %v310
    %v318 = vmul.f32 %v302, %v314
    %v319 = vmul.f32 %v303, %v314
    %v320 = vmul.f32 %v304, %v310
    %v321 = vmul.f32 %v305, %v310
    %v322 = vmul.f32 %v306, %v314
    %v323 = vmul.f32 %v307, %v314
    %v324 = vadd.f32 %v263, %v316
    %v325 = vadd.f32 %v264, %v317
    %v326 = vadd.f32 %v265, %v318
    %v327 = vadd.f32 %v266, %v319
    %v328 = vadd.f32 %v267, %v320
    %v329 = vadd.f32 %v268, %v321
    %v330 = vadd.f32 %v269, %v322
    %v331 = vadd.f32 %v270, %v323
    %332 = vset.pattern.permute.xlu0 4
    %333 = vperm.xlu0 %332, %v61
    %v334 = vpop.permute.xlu0 %333
    %336 = vset.pattern.permute.xlu0 4
    %337 = vperm.xlu0 %336, %v62
    %v338 = vpop.permute.xlu0 %337
    %v340 = vmul.f32 %v53, %v334
    %v341 = vmul.f32 %v54, %v334
    %v342 = vmul.f32 %v55, %v338
    %v343 = vmul.f32 %v56, %v338
    %v344 = vmul.f32 %v57, %v334
    %v345 = vmul.f32 %v58, %v334
    %v346 = vmul.f32 %v59, %v338
    %v347 = vmul.f32 %v60, %v338
    %v348 = vadd.f32 %v324, %v340
    %v349 = vadd.f32 %v325, %v341
    %v350 = vadd.f32 %v326, %v342
    %v351 = vadd.f32 %v327, %v343
    %v352 = vadd.f32 %v328, %v344
    %v353 = vadd.f32 %v329, %v345
    %v354 = vadd.f32 %v330, %v346
    %v355 = vadd.f32 %v331, %v347
    %356 = vrot.lane.b32.xlu0 %v53, 126
    %v357 = vpop.permute.xlu0 %356
    %358 = vrot.lane.b32.xlu0 %v55, 126
    %v359 = vpop.permute.xlu0 %358
    %360 = vrot.lane.b32.xlu0 %v57, 126
    %v361 = vpop.permute.xlu0 %360
    %362 = vrot.lane.b32.xlu0 %v59, 126
    %v363 = vpop.permute.xlu0 %362
    %364 = vrot.lane.b32.xlu0 %v54, 126
    %v365 = vpop.permute.xlu0 %364
    %366 = vrot.lane.b32.xlu0 %v56, 126
    %v367 = vpop.permute.xlu0 %366
    %368 = vrot.lane.b32.xlu0 %v58, 126
    %v369 = vpop.permute.xlu0 %368
    %370 = vrot.lane.b32.xlu0 %v60, 126
    %v371 = vpop.permute.xlu0 %370
    %vm372 = vcmp.lt.s32.totalorder %v64, 126
    %v373 = vsel %vm372, %v357, %v365
    %v374 = vsel %vm372, %v359, %v367
    %v375 = vsel %vm372, %v361, %v369
    %v376 = vsel %vm372, %v363, %v371
    %v377 = vsel %vm372, %v365, %v357
    %v378 = vsel %vm372, %v367, %v359
    %v379 = vsel %vm372, %v369, %v361
    %v380 = vsel %vm372, %v371, %v363
    %v381 = vsel %vm231, 1, 0
    %v382 = vsel %vm232, 1, 0
    %vm383 = vcmp.eq.s32.totalorder %v381, 1
    %vm384 = vcmp.eq.s32.totalorder %v382, 1
    %v385 = vsel %vm383, %v373, 0.0
    %v386 = vsel %vm384, %v377, 0.0
    %v387 = vsel %vm383, %v374, 0.0
    %v388 = vsel %vm384, %v378, 0.0
    %v389 = vsel %vm383, %v375, 0.0
    %v390 = vsel %vm384, %v379, 0.0
    %v391 = vsel %vm383, %v376, 0.0
    %v392 = vsel %vm384, %v380, 0.0
    %393 = vset.pattern.permute.xlu0 5
    %394 = vperm.xlu0 %393, %v61
    %v395 = vpop.permute.xlu0 %394
    %397 = vset.pattern.permute.xlu0 5
    %398 = vperm.xlu0 %397, %v62
    %v399 = vpop.permute.xlu0 %398
    %v401 = vmul.f32 %v385, %v395
    %v402 = vmul.f32 %v386, %v395
    %v403 = vmul.f32 %v387, %v399
    %v404 = vmul.f32 %v388, %v399
    %v405 = vmul.f32 %v389, %v395
    %v406 = vmul.f32 %v390, %v395
    %v407 = vmul.f32 %v391, %v399
    %v408 = vmul.f32 %v392, %v399
    %v409 = vadd.f32 %v348, %v401
    %v410 = vadd.f32 %v349, %v402
    %v411 = vadd.f32 %v350, %v403
    %v412 = vadd.f32 %v351, %v404
    %v413 = vadd.f32 %v352, %v405
    %v414 = vadd.f32 %v353, %v406
    %v415 = vadd.f32 %v354, %v407
    %v416 = vadd.f32 %v355, %v408
    %417 = vrot.lane.b32.xlu0 %v53, 98
    %v418 = vpop.permute.xlu0 %417
    %419 = vrot.lane.b32.xlu0 %v55, 98
    %v420 = vpop.permute.xlu0 %419
    %421 = vrot.lane.b32.xlu0 %v57, 98
    %v422 = vpop.permute.xlu0 %421
    %423 = vrot.lane.b32.xlu0 %v59, 98
    %v424 = vpop.permute.xlu0 %423
    %425 = vrot.lane.b32.xlu0 %v54, 98
    %v426 = vpop.permute.xlu0 %425
    %427 = vrot.lane.b32.xlu0 %v56, 98
    %v428 = vpop.permute.xlu0 %427
    %429 = vrot.lane.b32.xlu0 %v58, 98
    %v430 = vpop.permute.xlu0 %429
    %431 = vrot.lane.b32.xlu0 %v60, 98
    %v432 = vpop.permute.xlu0 %431
    %vm433 = vcmp.lt.s32.totalorder %v64, 98
    %v434 = vsel %vm433, %v418, %v426
    %v435 = vsel %vm433, %v420, %v428
    %v436 = vsel %vm433, %v422, %v430
    %v437 = vsel %vm433, %v424, %v432
    %v438 = vsel %vm433, %v426, %v418
    %v439 = vsel %vm433, %v428, %v420
    %v440 = vsel %vm433, %v430, %v422
    %v441 = vsel %vm433, %v432, %v424
    %vm442 = vcmp.lt.s32.totalorder %v64, 224
    %vm443 = vcmp.lt.s32.totalorder %v65, 224
    %vm444 = vmand %vm442, %vm105
    %vm445 = vmand %vm443, %vm106
    %v446 = vsel %vm444, 1, 0
    %v447 = vsel %vm445, 1, 0
    %vm448 = vcmp.eq.s32.totalorder %v446, 1
    %vm449 = vcmp.eq.s32.totalorder %v447, 1
    %v450 = vsel %vm448, %v434, 0.0
    %v451 = vsel %vm449, %v438, 0.0
    %v452 = vsel %vm448, %v435, 0.0
    %v453 = vsel %vm449, %v439, 0.0
    %v454 = vsel %vm448, %v436, 0.0
    %v455 = vsel %vm449, %v440, 0.0
    %v456 = vsel %vm448, %v437, 0.0
    %v457 = vsel %vm449, %v441, 0.0
    %458 = vset.pattern.permute.xlu0 6
    %459 = vperm.xlu0 %458, %v61
    %v460 = vpop.permute.xlu0 %459
    %462 = vset.pattern.permute.xlu0 6
    %463 = vperm.xlu0 %462, %v62
    %v464 = vpop.permute.xlu0 %463
    %v466 = vmul.f32 %v450, %v460
    %v467 = vmul.f32 %v451, %v460
    %v468 = vmul.f32 %v452, %v464
    %v469 = vmul.f32 %v453, %v464
    %v470 = vmul.f32 %v454, %v460
    %v471 = vmul.f32 %v455, %v460
    %v472 = vmul.f32 %v456, %v464
    %v473 = vmul.f32 %v457, %v464
    %v474 = vadd.f32 %v409, %v466
    %v475 = vadd.f32 %v410, %v467
    %v476 = vadd.f32 %v411, %v468
    %v477 = vadd.f32 %v412, %v469
    %v478 = vadd.f32 %v413, %v470
    %v479 = vadd.f32 %v414, %v471
    %v480 = vadd.f32 %v415, %v472
    %v481 = vadd.f32 %v416, %v473
    %482 = vrot.lane.b32.xlu0 %v53, 96
    %v483 = vpop.permute.xlu0 %482
    %484 = vrot.lane.b32.xlu0 %v55, 96
    %v485 = vpop.permute.xlu0 %484
    %486 = vrot.lane.b32.xlu0 %v57, 96
    %v487 = vpop.permute.xlu0 %486
    %488 = vrot.lane.b32.xlu0 %v59, 96
    %v489 = vpop.permute.xlu0 %488
    %490 = vrot.lane.b32.xlu0 %v54, 96
    %v491 = vpop.permute.xlu0 %490
    %492 = vrot.lane.b32.xlu0 %v56, 96
    %v493 = vpop.permute.xlu0 %492
    %494 = vrot.lane.b32.xlu0 %v58, 96
    %v495 = vpop.permute.xlu0 %494
    %496 = vrot.lane.b32.xlu0 %v60, 96
    %v497 = vpop.permute.xlu0 %496
    %vm498 = vcmp.lt.s32.totalorder %v64, 96
    %v499 = vsel %vm498, %v483, %v491
    %v500 = vsel %vm498, %v485, %v493
    %v501 = vsel %vm498, %v487, %v495
    %v502 = vsel %vm498, %v489, %v497
    %v503 = vsel %vm498, %v491, %v483
    %v504 = vsel %vm498, %v493, %v485
    %v505 = vsel %vm498, %v495, %v487
    %v506 = vsel %vm498, %v497, %v489
    %v507 = vsel %vm442, 1, 0
    %v508 = vsel %vm443, 1, 0
    %vm509 = vcmp.eq.s32.totalorder %v507, 1
    %vm510 = vcmp.eq.s32.totalorder %v508, 1
    %v511 = vsel %vm509, %v499, 0.0
    %v512 = vsel %vm510, %v503, 0.0
    %v513 = vsel %vm509, %v500, 0.0
    %v514 = vsel %vm510, %v504, 0.0
    %v515 = vsel %vm509, %v501, 0.0
    %v516 = vsel %vm510, %v505, 0.0
    %v517 = vsel %vm509, %v502, 0.0
    %v518 = vsel %vm510, %v506, 0.0
    %519 = vset.pattern.permute.xlu0 7
    %520 = vperm.xlu0 %519, %v61
    %v521 = vpop.permute.xlu0 %520
    %523 = vset.pattern.permute.xlu0 7
    %524 = vperm.xlu0 %523, %v62
    %v525 = vpop.permute.xlu0 %524
    %v527 = vmul.f32 %v511, %v521
    %v528 = vmul.f32 %v512, %v521
    %v529 = vmul.f32 %v513, %v525
    %v530 = vmul.f32 %v514, %v525
    %v531 = vmul.f32 %v515, %v521
    %v532 = vmul.f32 %v516, %v521
    %v533 = vmul.f32 %v517, %v525
    %v534 = vmul.f32 %v518, %v525
    %v535 = vadd.f32 %v474, %v527
    %v536 = vadd.f32 %v475, %v528
    %v537 = vadd.f32 %v476, %v529
    %v538 = vadd.f32 %v477, %v530
    %v539 = vadd.f32 %v478, %v531
    %v540 = vadd.f32 %v479, %v532
    %v541 = vadd.f32 %v480, %v533
    %v542 = vadd.f32 %v481, %v534
    %543 = vrot.lane.b32.xlu0 %v53, 94
    %v544 = vpop.permute.xlu0 %543
    %545 = vrot.lane.b32.xlu0 %v55, 94
    %v546 = vpop.permute.xlu0 %545
    %547 = vrot.lane.b32.xlu0 %v57, 94
    %v548 = vpop.permute.xlu0 %547
    %549 = vrot.lane.b32.xlu0 %v59, 94
    %v550 = vpop.permute.xlu0 %549
    %551 = vrot.lane.b32.xlu0 %v54, 94
    %v552 = vpop.permute.xlu0 %551
    %553 = vrot.lane.b32.xlu0 %v56, 94
    %v554 = vpop.permute.xlu0 %553
    %555 = vrot.lane.b32.xlu0 %v58, 94
    %v556 = vpop.permute.xlu0 %555
    %557 = vrot.lane.b32.xlu0 %v60, 94
    %v558 = vpop.permute.xlu0 %557
    %vm559 = vcmp.lt.s32.totalorder %v64, 94
    %v560 = vsel %vm559, %v544, %v552
    %v561 = vsel %vm559, %v546, %v554
    %v562 = vsel %vm559, %v548, %v556
    %v563 = vsel %vm559, %v550, %v558
    %v564 = vsel %vm559, %v552, %v544
    %v565 = vsel %vm559, %v554, %v546
    %v566 = vsel %vm559, %v556, %v548
    %v567 = vsel %vm559, %v558, %v550
    %vm568 = vmand %vm442, %vm231
    %vm569 = vmand %vm443, %vm232
    %v570 = vsel %vm568, 1, 0
    %v571 = vsel %vm569, 1, 0
    %vm572 = vcmp.eq.s32.totalorder %v570, 1
    %vm573 = vcmp.eq.s32.totalorder %v571, 1
    %v574 = vsel %vm572, %v560, 0.0
    %v575 = vsel %vm573, %v564, 0.0
    %v576 = vsel %vm572, %v561, 0.0
    %v577 = vsel %vm573, %v565, 0.0
    %v578 = vsel %vm572, %v562, 0.0
    %v579 = vsel %vm573, %v566, 0.0
    %v580 = vsel %vm572, %v563, 0.0
    %v581 = vsel %vm573, %v567, 0.0
    %582 = vset.pattern.permute.xlu0 8
    %583 = vperm.xlu0 %582, %v61
    %v584 = vpop.permute.xlu0 %583
    %586 = vset.pattern.permute.xlu0 8
    %587 = vperm.xlu0 %586, %v62
    %v588 = vpop.permute.xlu0 %587
    %v590 = vmul.f32 %v574, %v584
    %v591 = vmul.f32 %v575, %v584
    %v592 = vmul.f32 %v576, %v588
    %v593 = vmul.f32 %v577, %v588
    %v594 = vmul.f32 %v578, %v584
    %v595 = vmul.f32 %v579, %v584
    %v596 = vmul.f32 %v580, %v588
    %v597 = vmul.f32 %v581, %v588
    %v598 = vadd.f32 %v535, %v590
    %v599 = vadd.f32 %v536, %v591
    %v600 = vadd.f32 %v537, %v592
    %v601 = vadd.f32 %v538, %v593
    %v602 = vadd.f32 %v539, %v594
    %v603 = vadd.f32 %v540, %v595
    %v604 = vadd.f32 %v541, %v596
    %v605 = vadd.f32 %v542, %v597
    %606 = vrot.lane.b32.xlu0 %v53, 5
    %v607 = vpop.permute.xlu0 %606
    %608 = vrot.lane.b32.xlu0 %v55, 5
    %v609 = vpop.permute.xlu0 %608
    %610 = vrot.lane.b32.xlu0 %v57, 5
    %v611 = vpop.permute.xlu0 %610
    %612 = vrot.lane.b32.xlu0 %v59, 5
    %v613 = vpop.permute.xlu0 %612
    %614 = vrot.lane.b32.xlu0 %v54, 5
    %v615 = vpop.permute.xlu0 %614
    %616 = vrot.lane.b32.xlu0 %v56, 5
    %v617 = vpop.permute.xlu0 %616
    %618 = vrot.lane.b32.xlu0 %v58, 5
    %v619 = vpop.permute.xlu0 %618
    %620 = vrot.lane.b32.xlu0 %v60, 5
    %v621 = vpop.permute.xlu0 %620
    %vm622 = vcmp.lt.s32.totalorder %v64, 5
    %v623 = vsel %vm622, %v607, %v615
    %v624 = vsel %vm622, %v609, %v617
    %v625 = vsel %vm622, %v611, %v619
    %v626 = vsel %vm622, %v613, %v621
    %v627 = vsel %vm622, %v615, %v607
    %v628 = vsel %vm622, %v617, %v609
    %v629 = vsel %vm622, %v619, %v611
    %v630 = vsel %vm622, %v621, %v613
    %vm631 = vcmp.ge.s32.totalorder %v66, 5
    %vm632 = vcmp.ge.s32.totalorder %v67, 5
    %v633 = vsel %vm631, 1, 0
    %v634 = vsel %vm632, 1, 0
    %vm635 = vcmp.eq.s32.totalorder %v633, 1
    %vm636 = vcmp.eq.s32.totalorder %v634, 1
    %v637 = vsel %vm635, %v627, 0.0
    %v638 = vsel %vm636, %v623, 0.0
    %v639 = vsel %vm635, %v628, 0.0
    %v640 = vsel %vm636, %v624, 0.0
    %v641 = vsel %vm635, %v629, 0.0
    %v642 = vsel %vm636, %v625, 0.0
    %v643 = vsel %vm635, %v630, 0.0
    %v644 = vsel %vm636, %v626, 0.0
    %645 = vset.pattern.permute.xlu0 9
    %646 = vperm.xlu0 %645, %v61
    %v647 = vpop.permute.xlu0 %646
    %649 = vset.pattern.permute.xlu0 9
    %650 = vperm.xlu0 %649, %v62
    %v651 = vpop.permute.xlu0 %650
    %v653 = vmul.f32 %v637, %v647
    %v654 = vmul.f32 %v638, %v647
    %v655 = vmul.f32 %v639, %v651
    %v656 = vmul.f32 %v640, %v651
    %v657 = vmul.f32 %v641, %v647
    %v658 = vmul.f32 %v642, %v647
    %v659 = vmul.f32 %v643, %v651
    %v660 = vmul.f32 %v644, %v651
    %v661 = vadd.f32 %v598, %v653
    %v662 = vadd.f32 %v599, %v654
    %v663 = vadd.f32 %v600, %v655
    %v664 = vadd.f32 %v601, %v656
    %v665 = vadd.f32 %v602, %v657
    %v666 = vadd.f32 %v603, %v658
    %v667 = vadd.f32 %v604, %v659
    %v668 = vadd.f32 %v605, %v660
    %669 = vrot.lane.b32.xlu0 %v53, 4
    %v670 = vpop.permute.xlu0 %669
    %671 = vrot.lane.b32.xlu0 %v55, 4
    %v672 = vpop.permute.xlu0 %671
    %673 = vrot.lane.b32.xlu0 %v57, 4
    %v674 = vpop.permute.xlu0 %673
    %675 = vrot.lane.b32.xlu0 %v59, 4
    %v676 = vpop.permute.xlu0 %675
    %677 = vrot.lane.b32.xlu0 %v54, 4
    %v678 = vpop.permute.xlu0 %677
    %679 = vrot.lane.b32.xlu0 %v56, 4
    %v680 = vpop.permute.xlu0 %679
    %681 = vrot.lane.b32.xlu0 %v58, 4
    %v682 = vpop.permute.xlu0 %681
    %683 = vrot.lane.b32.xlu0 %v60, 4
    %v684 = vpop.permute.xlu0 %683
    %vm685 = vcmp.lt.s32.totalorder %v64, 4
    %v686 = vsel %vm685, %v670, %v678
    %v687 = vsel %vm685, %v672, %v680
    %v688 = vsel %vm685, %v674, %v682
    %v689 = vsel %vm685, %v676, %v684
    %v690 = vsel %vm685, %v678, %v670
    %v691 = vsel %vm685, %v680, %v672
    %v692 = vsel %vm685, %v682, %v674
    %v693 = vsel %vm685, %v684, %v676
    %vm694 = vcmp.ge.s32.totalorder %v66, 4
    %vm695 = vcmp.ge.s32.totalorder %v67, 4
    %v696 = vsel %vm694, 1, 0
    %v697 = vsel %vm695, 1, 0
    %vm698 = vcmp.eq.s32.totalorder %v696, 1
    %vm699 = vcmp.eq.s32.totalorder %v697, 1
    %v700 = vsel %vm698, %v690, 0.0
    %v701 = vsel %vm699, %v686, 0.0
    %v702 = vsel %vm698, %v691, 0.0
    %v703 = vsel %vm699, %v687, 0.0
    %v704 = vsel %vm698, %v692, 0.0
    %v705 = vsel %vm699, %v688, 0.0
    %v706 = vsel %vm698, %v693, 0.0
    %v707 = vsel %vm699, %v689, 0.0
    %708 = vset.pattern.permute.xlu0 10
    %709 = vperm.xlu0 %708, %v61
    %v710 = vpop.permute.xlu0 %709
    %712 = vset.pattern.permute.xlu0 10
    %713 = vperm.xlu0 %712, %v62
    %v714 = vpop.permute.xlu0 %713
    %v716 = vmul.f32 %v700, %v710
    %v717 = vmul.f32 %v701, %v710
    %v718 = vmul.f32 %v702, %v714
    %v719 = vmul.f32 %v703, %v714
    %v720 = vmul.f32 %v704, %v710
    %v721 = vmul.f32 %v705, %v710
    %v722 = vmul.f32 %v706, %v714
    %v723 = vmul.f32 %v707, %v714
    %v724 = vadd.f32 %v661, %v716
    %v725 = vadd.f32 %v662, %v717
    %v726 = vadd.f32 %v663, %v718
    %v727 = vadd.f32 %v664, %v719
    %v728 = vadd.f32 %v665, %v720
    %v729 = vadd.f32 %v666, %v721
    %v730 = vadd.f32 %v667, %v722
    %v731 = vadd.f32 %v668, %v723
    %732 = vrot.lane.b32.xlu0 %v53, 3
    %v733 = vpop.permute.xlu0 %732
    %734 = vrot.lane.b32.xlu0 %v55, 3
    %v735 = vpop.permute.xlu0 %734
    %736 = vrot.lane.b32.xlu0 %v57, 3
    %v737 = vpop.permute.xlu0 %736
    %738 = vrot.lane.b32.xlu0 %v59, 3
    %v739 = vpop.permute.xlu0 %738
    %740 = vrot.lane.b32.xlu0 %v54, 3
    %v741 = vpop.permute.xlu0 %740
    %742 = vrot.lane.b32.xlu0 %v56, 3
    %v743 = vpop.permute.xlu0 %742
    %744 = vrot.lane.b32.xlu0 %v58, 3
    %v745 = vpop.permute.xlu0 %744
    %746 = vrot.lane.b32.xlu0 %v60, 3
    %v747 = vpop.permute.xlu0 %746
    %vm748 = vcmp.lt.s32.totalorder %v64, 3
    %v749 = vsel %vm748, %v733, %v741
    %v750 = vsel %vm748, %v735, %v743
    %v751 = vsel %vm748, %v737, %v745
    %v752 = vsel %vm748, %v739, %v747
    %v753 = vsel %vm748, %v741, %v733
    %v754 = vsel %vm748, %v743, %v735
    %v755 = vsel %vm748, %v745, %v737
    %v756 = vsel %vm748, %v747, %v739
    %vm757 = vcmp.ge.s32.totalorder %v66, 3
    %vm758 = vcmp.ge.s32.totalorder %v67, 3
    %v759 = vsel %vm757, 1, 0
    %v760 = vsel %vm758, 1, 0
    %vm761 = vcmp.eq.s32.totalorder %v759, 1
    %vm762 = vcmp.eq.s32.totalorder %v760, 1
    %v763 = vsel %vm761, %v753, 0.0
    %v764 = vsel %vm762, %v749, 0.0
    %v765 = vsel %vm761, %v754, 0.0
    %v766 = vsel %vm762, %v750, 0.0
    %v767 = vsel %vm761, %v755, 0.0
    %v768 = vsel %vm762, %v751, 0.0
    %v769 = vsel %vm761, %v756, 0.0
    %v770 = vsel %vm762, %v752, 0.0
    %771 = vset.pattern.permute.xlu0 11
    %772 = vperm.xlu0 %771, %v61
    %v773 = vpop.permute.xlu0 %772
    %775 = vset.pattern.permute.xlu0 11
    %776 = vperm.xlu0 %775, %v62
    %v777 = vpop.permute.xlu0 %776
    %v779 = vmul.f32 %v763, %v773
    %v780 = vmul.f32 %v764, %v773
    %v781 = vmul.f32 %v765, %v777
    %v782 = vmul.f32 %v766, %v777
    %v783 = vmul.f32 %v767, %v773
    %v784 = vmul.f32 %v768, %v773
    %v785 = vmul.f32 %v769, %v777
    %v786 = vmul.f32 %v770, %v777
    %v787 = vadd.f32 %v724, %v779
    %v788 = vadd.f32 %v725, %v780
    %v789 = vadd.f32 %v726, %v781
    %v790 = vadd.f32 %v727, %v782
    %v791 = vadd.f32 %v728, %v783
    %v792 = vadd.f32 %v729, %v784
    %v793 = vadd.f32 %v730, %v785
    %v794 = vadd.f32 %v731, %v786
    %795 = vrot.lane.b32.xlu0 %v53, 1
    %v796 = vpop.permute.xlu0 %795
    %797 = vrot.lane.b32.xlu0 %v55, 1
    %v798 = vpop.permute.xlu0 %797
    %799 = vrot.lane.b32.xlu0 %v57, 1
    %v800 = vpop.permute.xlu0 %799
    %801 = vrot.lane.b32.xlu0 %v59, 1
    %v802 = vpop.permute.xlu0 %801
    %803 = vrot.lane.b32.xlu0 %v54, 1
    %v804 = vpop.permute.xlu0 %803
    %805 = vrot.lane.b32.xlu0 %v56, 1
    %v806 = vpop.permute.xlu0 %805
    %807 = vrot.lane.b32.xlu0 %v58, 1
    %v808 = vpop.permute.xlu0 %807
    %809 = vrot.lane.b32.xlu0 %v60, 1
    %v810 = vpop.permute.xlu0 %809
    %vm811 = vcmp.lt.s32.totalorder %v64, 1
    %v812 = vsel %vm811, %v796, %v804
    %v813 = vsel %vm811, %v798, %v806
    %v814 = vsel %vm811, %v800, %v808
    %v815 = vsel %vm811, %v802, %v810
    %v816 = vsel %vm811, %v804, %v796
    %v817 = vsel %vm811, %v806, %v798
    %v818 = vsel %vm811, %v808, %v800
    %v819 = vsel %vm811, %v810, %v802
    %vm820 = vcmp.ge.s32.totalorder %v66, 1
    %vm821 = vcmp.ge.s32.totalorder %v67, 1
    %v822 = vsel %vm820, 1, 0
    %v823 = vsel %vm821, 1, 0
    %vm824 = vcmp.eq.s32.totalorder %v822, 1
    %vm825 = vcmp.eq.s32.totalorder %v823, 1
    %v826 = vsel %vm824, %v816, 0.0
    %v827 = vsel %vm825, %v812, 0.0
    %v828 = vsel %vm824, %v817, 0.0
    %v829 = vsel %vm825, %v813, 0.0
    %v830 = vsel %vm824, %v818, 0.0
    %v831 = vsel %vm825, %v814, 0.0
    %v832 = vsel %vm824, %v819, 0.0
    %v833 = vsel %vm825, %v815, 0.0
    %834 = vset.pattern.permute.xlu0 12
    %835 = vperm.xlu0 %834, %v61
    %v836 = vpop.permute.xlu0 %835
    %838 = vset.pattern.permute.xlu0 12
    %839 = vperm.xlu0 %838, %v62
    %v840 = vpop.permute.xlu0 %839
    %v842 = vmul.f32 %v826, %v836
    %v843 = vmul.f32 %v827, %v836
    %v844 = vmul.f32 %v828, %v840
    %v845 = vmul.f32 %v829, %v840
    %v846 = vmul.f32 %v830, %v836
    %v847 = vmul.f32 %v831, %v836
    %v848 = vmul.f32 %v832, %v840
    %v849 = vmul.f32 %v833, %v840
    %v850 = vadd.f32 %v787, %v842
    %v851 = vadd.f32 %v788, %v843
    %v852 = vadd.f32 %v789, %v844
    %v853 = vadd.f32 %v790, %v845
    %v854 = vadd.f32 %v791, %v846
    %v855 = vadd.f32 %v792, %v847
    %v856 = vadd.f32 %v793, %v848
    %v857 = vadd.f32 %v794, %v849
    %858 = vrot.lane.b32.xlu0 %v53, 127
    %v859 = vpop.permute.xlu0 %858
    %860 = vrot.lane.b32.xlu0 %v55, 127
    %v861 = vpop.permute.xlu0 %860
    %862 = vrot.lane.b32.xlu0 %v57, 127
    %v863 = vpop.permute.xlu0 %862
    %864 = vrot.lane.b32.xlu0 %v59, 127
    %v865 = vpop.permute.xlu0 %864
    %866 = vrot.lane.b32.xlu0 %v54, 127
    %v867 = vpop.permute.xlu0 %866
    %868 = vrot.lane.b32.xlu0 %v56, 127
    %v869 = vpop.permute.xlu0 %868
    %870 = vrot.lane.b32.xlu0 %v58, 127
    %v871 = vpop.permute.xlu0 %870
    %872 = vrot.lane.b32.xlu0 %v60, 127
    %v873 = vpop.permute.xlu0 %872
    %vm874 = vcmp.lt.s32.totalorder %v64, 127
    %v875 = vsel %vm874, %v859, %v867
    %v876 = vsel %vm874, %v861, %v869
    %v877 = vsel %vm874, %v863, %v871
    %v878 = vsel %vm874, %v865, %v873
    %v879 = vsel %vm874, %v867, %v859
    %v880 = vsel %vm874, %v869, %v861
    %v881 = vsel %vm874, %v871, %v863
    %v882 = vsel %vm874, %v873, %v865
    %vm883 = vcmp.lt.s32.totalorder %v66, 15
    %vm884 = vcmp.lt.s32.totalorder %v67, 15
    %v885 = vsel %vm883, 1, 0
    %v886 = vsel %vm884, 1, 0
    %vm887 = vcmp.eq.s32.totalorder %v885, 1
    %vm888 = vcmp.eq.s32.totalorder %v886, 1
    %v889 = vsel %vm887, %v875, 0.0
    %v890 = vsel %vm888, %v879, 0.0
    %v891 = vsel %vm887, %v876, 0.0
    %v892 = vsel %vm888, %v880, 0.0
    %v893 = vsel %vm887, %v877, 0.0
    %v894 = vsel %vm888, %v881, 0.0
    %v895 = vsel %vm887, %v878, 0.0
    %v896 = vsel %vm888, %v882, 0.0
    %897 = vset.pattern.permute.xlu0 13
    %898 = vperm.xlu0 %897, %v61
    %v899 = vpop.permute.xlu0 %898
    %901 = vset.pattern.permute.xlu0 13
    %902 = vperm.xlu0 %901, %v62
    %v903 = vpop.permute.xlu0 %902
    %v905 = vmul.f32 %v889, %v899
    %v906 = vmul.f32 %v890, %v899
    %v907 = vmul.f32 %v891, %v903
    %v908 = vmul.f32 %v892, %v903
    %v909 = vmul.f32 %v893, %v899
    %v910 = vmul.f32 %v894, %v899
    %v911 = vmul.f32 %v895, %v903
    %v912 = vmul.f32 %v896, %v903
    %v913 = vadd.f32 %v850, %v905
    %v914 = vadd.f32 %v851, %v906
    %v915 = vadd.f32 %v852, %v907
    %v916 = vadd.f32 %v853, %v908
    %v917 = vadd.f32 %v854, %v909
    %v918 = vadd.f32 %v855, %v910
    %v919 = vadd.f32 %v856, %v911
    %v920 = vadd.f32 %v857, %v912
    %921 = vrot.lane.b32.xlu0 %v53, 125
    %v922 = vpop.permute.xlu0 %921
    %923 = vrot.lane.b32.xlu0 %v55, 125
    %v924 = vpop.permute.xlu0 %923
    %925 = vrot.lane.b32.xlu0 %v57, 125
    %v926 = vpop.permute.xlu0 %925
    %927 = vrot.lane.b32.xlu0 %v59, 125
    %v928 = vpop.permute.xlu0 %927
    %929 = vrot.lane.b32.xlu0 %v54, 125
    %v930 = vpop.permute.xlu0 %929
    %931 = vrot.lane.b32.xlu0 %v56, 125
    %v932 = vpop.permute.xlu0 %931
    %933 = vrot.lane.b32.xlu0 %v58, 125
    %v934 = vpop.permute.xlu0 %933
    %935 = vrot.lane.b32.xlu0 %v60, 125
    %v936 = vpop.permute.xlu0 %935
    %vm937 = vcmp.lt.s32.totalorder %v64, 125
    %v938 = vsel %vm937, %v922, %v930
    %v939 = vsel %vm937, %v924, %v932
    %v940 = vsel %vm937, %v926, %v934
    %v941 = vsel %vm937, %v928, %v936
    %v942 = vsel %vm937, %v930, %v922
    %v943 = vsel %vm937, %v932, %v924
    %v944 = vsel %vm937, %v934, %v926
    %v945 = vsel %vm937, %v936, %v928
    %vm946 = vcmp.lt.s32.totalorder %v66, 13
    %vm947 = vcmp.lt.s32.totalorder %v67, 13
    %v948 = vsel %vm946, 1, 0
    %v949 = vsel %vm947, 1, 0
    %vm950 = vcmp.eq.s32.totalorder %v948, 1
    %vm951 = vcmp.eq.s32.totalorder %v949, 1
    %v952 = vsel %vm950, %v938, 0.0
    %v953 = vsel %vm951, %v942, 0.0
    %v954 = vsel %vm950, %v939, 0.0
    %v955 = vsel %vm951, %v943, 0.0
    %v956 = vsel %vm950, %v940, 0.0
    %v957 = vsel %vm951, %v944, 0.0
    %v958 = vsel %vm950, %v941, 0.0
    %v959 = vsel %vm951, %v945, 0.0
    %960 = vset.pattern.permute.xlu0 14
    %961 = vperm.xlu0 %960, %v61
    %v962 = vpop.permute.xlu0 %961
    %964 = vset.pattern.permute.xlu0 14
    %965 = vperm.xlu0 %964, %v62
    %v966 = vpop.permute.xlu0 %965
    %v968 = vmul.f32 %v952, %v962
    %v969 = vmul.f32 %v953, %v962
    %v970 = vmul.f32 %v954, %v966
    %v971 = vmul.f32 %v955, %v966
    %v972 = vmul.f32 %v956, %v962
    %v973 = vmul.f32 %v957, %v962
    %v974 = vmul.f32 %v958, %v966
    %v975 = vmul.f32 %v959, %v966
    %v976 = vadd.f32 %v913, %v968
    %v977 = vadd.f32 %v914, %v969
    %v978 = vadd.f32 %v915, %v970
    %v979 = vadd.f32 %v916, %v971
    %v980 = vadd.f32 %v917, %v972
    %v981 = vadd.f32 %v918, %v973
    %v982 = vadd.f32 %v919, %v974
    %v983 = vadd.f32 %v920, %v975
    %984 = vrot.lane.b32.xlu0 %v53, 124
    %v985 = vpop.permute.xlu0 %984
    %986 = vrot.lane.b32.xlu0 %v55, 124
    %v987 = vpop.permute.xlu0 %986
    %988 = vrot.lane.b32.xlu0 %v57, 124
    %v989 = vpop.permute.xlu0 %988
    %990 = vrot.lane.b32.xlu0 %v59, 124
    %v991 = vpop.permute.xlu0 %990
    %992 = vrot.lane.b32.xlu0 %v54, 124
    %v993 = vpop.permute.xlu0 %992
    %994 = vrot.lane.b32.xlu0 %v56, 124
    %v995 = vpop.permute.xlu0 %994
    %996 = vrot.lane.b32.xlu0 %v58, 124
    %v997 = vpop.permute.xlu0 %996
    %998 = vrot.lane.b32.xlu0 %v60, 124
    %v999 = vpop.permute.xlu0 %998
    %vm1000 = vcmp.lt.s32.totalorder %v64, 124
    %v1001 = vsel %vm1000, %v985, %v993
    %v1002 = vsel %vm1000, %v987, %v995
    %v1003 = vsel %vm1000, %v989, %v997
    %v1004 = vsel %vm1000, %v991, %v999
    %v1005 = vsel %vm1000, %v993, %v985
    %v1006 = vsel %vm1000, %v995, %v987
    %v1007 = vsel %vm1000, %v997, %v989
    %v1008 = vsel %vm1000, %v999, %v991
    %vm1009 = vcmp.lt.s32.totalorder %v66, 12
    %vm1010 = vcmp.lt.s32.totalorder %v67, 12
    %v1011 = vsel %vm1009, 1, 0
    %v1012 = vsel %vm1010, 1, 0
    %vm1013 = vcmp.eq.s32.totalorder %v1011, 1
    %vm1014 = vcmp.eq.s32.totalorder %v1012, 1
    %v1015 = vsel %vm1013, %v1001, 0.0
    %v1016 = vsel %vm1014, %v1005, 0.0
    %v1017 = vsel %vm1013, %v1002, 0.0
    %v1018 = vsel %vm1014, %v1006, 0.0
    %v1019 = vsel %vm1013, %v1003, 0.0
    %v1020 = vsel %vm1014, %v1007, 0.0
    %v1021 = vsel %vm1013, %v1004, 0.0
    %v1022 = vsel %vm1014, %v1008, 0.0
    %1023 = vset.pattern.permute.xlu0 15
    %1024 = vperm.xlu0 %1023, %v61
    %v1025 = vpop.permute.xlu0 %1024
    %1027 = vset.pattern.permute.xlu0 15
    %1028 = vperm.xlu0 %1027, %v62
    %v1029 = vpop.permute.xlu0 %1028
    %v1031 = vmul.f32 %v1015, %v1025
    %v1032 = vmul.f32 %v1016, %v1025
    %v1033 = vmul.f32 %v1017, %v1029
    %v1034 = vmul.f32 %v1018, %v1029
    %v1035 = vmul.f32 %v1019, %v1025
    %v1036 = vmul.f32 %v1020, %v1025
    %v1037 = vmul.f32 %v1021, %v1029
    %v1038 = vmul.f32 %v1022, %v1029
    %v1039 = vadd.f32 %v976, %v1031
    %v1040 = vadd.f32 %v977, %v1032
    %v1041 = vadd.f32 %v978, %v1033
    %v1042 = vadd.f32 %v979, %v1034
    %v1043 = vadd.f32 %v980, %v1035
    %v1044 = vadd.f32 %v981, %v1036
    %v1045 = vadd.f32 %v982, %v1037
    %v1046 = vadd.f32 %v983, %v1038
    %1047 = vrot.lane.b32.xlu0 %v53, 123
    %v1048 = vpop.permute.xlu0 %1047
    %1049 = vrot.lane.b32.xlu0 %v55, 123
    %v1050 = vpop.permute.xlu0 %1049
    %1051 = vrot.lane.b32.xlu0 %v57, 123
    %v1052 = vpop.permute.xlu0 %1051
    %1053 = vrot.lane.b32.xlu0 %v59, 123
    %v1054 = vpop.permute.xlu0 %1053
    %1055 = vrot.lane.b32.xlu0 %v54, 123
    %v1056 = vpop.permute.xlu0 %1055
    %1057 = vrot.lane.b32.xlu0 %v56, 123
    %v1058 = vpop.permute.xlu0 %1057
    %1059 = vrot.lane.b32.xlu0 %v58, 123
    %v1060 = vpop.permute.xlu0 %1059
    %1061 = vrot.lane.b32.xlu0 %v60, 123
    %v1062 = vpop.permute.xlu0 %1061
    %vm1063 = vcmp.lt.s32.totalorder %v64, 123
    %v1064 = vsel %vm1063, %v1048, %v1056
    %v1065 = vsel %vm1063, %v1050, %v1058
    %v1066 = vsel %vm1063, %v1052, %v1060
    %v1067 = vsel %vm1063, %v1054, %v1062
    %v1068 = vsel %vm1063, %v1056, %v1048
    %v1069 = vsel %vm1063, %v1058, %v1050
    %v1070 = vsel %vm1063, %v1060, %v1052
    %v1071 = vsel %vm1063, %v1062, %v1054
    %vm1072 = vcmp.lt.s32.totalorder %v66, 11
    %vm1073 = vcmp.lt.s32.totalorder %v67, 11
    %v1074 = vsel %vm1072, 1, 0
    %v1075 = vsel %vm1073, 1, 0
    %vm1076 = vcmp.eq.s32.totalorder %v1074, 1
    %vm1077 = vcmp.eq.s32.totalorder %v1075, 1
    %v1078 = vsel %vm1076, %v1064, 0.0
    %v1079 = vsel %vm1077, %v1068, 0.0
    %v1080 = vsel %vm1076, %v1065, 0.0
    %v1081 = vsel %vm1077, %v1069, 0.0
    %v1082 = vsel %vm1076, %v1066, 0.0
    %v1083 = vsel %vm1077, %v1070, 0.0
    %v1084 = vsel %vm1076, %v1067, 0.0
    %v1085 = vsel %vm1077, %v1071, 0.0
    %1086 = vset.pattern.permute.xlu0 16
    %1087 = vperm.xlu0 %1086, %v61
    %v1088 = vpop.permute.xlu0 %1087
    %1090 = vset.pattern.permute.xlu0 16
    %1091 = vperm.xlu0 %1090, %v62
    %v1092 = vpop.permute.xlu0 %1091
    %v1094 = vmul.f32 %v1078, %v1088
    %v1095 = vmul.f32 %v1079, %v1088
    %v1096 = vmul.f32 %v1080, %v1092
    %v1097 = vmul.f32 %v1081, %v1092
    %v1098 = vmul.f32 %v1082, %v1088
    %v1099 = vmul.f32 %v1083, %v1088
    %v1100 = vmul.f32 %v1084, %v1092
    %v1101 = vmul.f32 %v1085, %v1092
    %v1102 = vadd.f32 %v1039, %v1094
    %v1103 = vadd.f32 %v1040, %v1095
    %v1104 = vadd.f32 %v1041, %v1096
    %v1105 = vadd.f32 %v1042, %v1097
    %v1106 = vadd.f32 %v1043, %v1098
    %v1107 = vadd.f32 %v1044, %v1099
    %v1108 = vadd.f32 %v1045, %v1100
    %v1109 = vadd.f32 %v1046, %v1101
    %1110 = vrot.lane.b32.xlu0 %v53, 80
    %v1111 = vpop.permute.xlu0 %1110
    %1112 = vrot.lane.b32.xlu0 %v55, 80
    %v1113 = vpop.permute.xlu0 %1112
    %1114 = vrot.lane.b32.xlu0 %v57, 80
    %v1115 = vpop.permute.xlu0 %1114
    %1116 = vrot.lane.b32.xlu0 %v59, 80
    %v1117 = vpop.permute.xlu0 %1116
    %1118 = vrot.lane.b32.xlu0 %v54, 80
    %v1119 = vpop.permute.xlu0 %1118
    %1120 = vrot.lane.b32.xlu0 %v56, 80
    %v1121 = vpop.permute.xlu0 %1120
    %1122 = vrot.lane.b32.xlu0 %v58, 80
    %v1123 = vpop.permute.xlu0 %1122
    %1124 = vrot.lane.b32.xlu0 %v60, 80
    %v1125 = vpop.permute.xlu0 %1124
    %vm1126 = vcmp.lt.s32.totalorder %v64, 80
    %v1127 = vsel %vm1126, %v1111, %v1119
    %v1128 = vsel %vm1126, %v1113, %v1121
    %v1129 = vsel %vm1126, %v1115, %v1123
    %v1130 = vsel %vm1126, %v1117, %v1125
    %v1131 = vsel %vm1126, %v1119, %v1111
    %v1132 = vsel %vm1126, %v1121, %v1113
    %v1133 = vsel %vm1126, %v1123, %v1115
    %v1134 = vsel %vm1126, %v1125, %v1117
    %vm1135 = vcmp.ge.s32.totalorder %v64, 80
    %vm1136 = vcmp.ge.s32.totalorder %v65, 80
    %v1137 = vsel %vm1135, 1, 0
    %v1138 = vsel %vm1136, 1, 0
    %vm1139 = vcmp.eq.s32.totalorder %v1137, 1
    %vm1140 = vcmp.eq.s32.totalorder %v1138, 1
    %v1141 = vsel %vm1139, %v1131, 0.0
    %v1142 = vsel %vm1140, %v1127, 0.0
    %v1143 = vsel %vm1139, %v1132, 0.0
    %v1144 = vsel %vm1140, %v1128, 0.0
    %v1145 = vsel %vm1139, %v1133, 0.0
    %v1146 = vsel %vm1140, %v1129, 0.0
    %v1147 = vsel %vm1139, %v1134, 0.0
    %v1148 = vsel %vm1140, %v1130, 0.0
    %1149 = vset.pattern.permute.xlu0 17
    %1150 = vperm.xlu0 %1149, %v61
    %v1151 = vpop.permute.xlu0 %1150
    %1153 = vset.pattern.permute.xlu0 17
    %1154 = vperm.xlu0 %1153, %v62
    %v1155 = vpop.permute.xlu0 %1154
    %v1157 = vmul.f32 %v1141, %v1151
    %v1158 = vmul.f32 %v1142, %v1151
    %v1159 = vmul.f32 %v1143, %v1155
    %v1160 = vmul.f32 %v1144, %v1155
    %v1161 = vmul.f32 %v1145, %v1151
    %v1162 = vmul.f32 %v1146, %v1151
    %v1163 = vmul.f32 %v1147, %v1155
    %v1164 = vmul.f32 %v1148, %v1155
    %v1165 = vadd.f32 %v1102, %v1157
    %v1166 = vadd.f32 %v1103, %v1158
    %v1167 = vadd.f32 %v1104, %v1159
    %v1168 = vadd.f32 %v1105, %v1160
    %v1169 = vadd.f32 %v1106, %v1161
    %v1170 = vadd.f32 %v1107, %v1162
    %v1171 = vadd.f32 %v1108, %v1163
    %v1172 = vadd.f32 %v1109, %v1164
    %1173 = vrot.lane.b32.xlu0 %v53, 64
    %v1174 = vpop.permute.xlu0 %1173
    %1175 = vrot.lane.b32.xlu0 %v55, 64
    %v1176 = vpop.permute.xlu0 %1175
    %1177 = vrot.lane.b32.xlu0 %v57, 64
    %v1178 = vpop.permute.xlu0 %1177
    %1179 = vrot.lane.b32.xlu0 %v59, 64
    %v1180 = vpop.permute.xlu0 %1179
    %1181 = vrot.lane.b32.xlu0 %v54, 64
    %v1182 = vpop.permute.xlu0 %1181
    %1183 = vrot.lane.b32.xlu0 %v56, 64
    %v1184 = vpop.permute.xlu0 %1183
    %1185 = vrot.lane.b32.xlu0 %v58, 64
    %v1186 = vpop.permute.xlu0 %1185
    %1187 = vrot.lane.b32.xlu0 %v60, 64
    %v1188 = vpop.permute.xlu0 %1187
    %vm1189 = vcmp.lt.s32.totalorder %v64, 64
    %v1190 = vsel %vm1189, %v1174, %v1182
    %v1191 = vsel %vm1189, %v1176, %v1184
    %v1192 = vsel %vm1189, %v1178, %v1186
    %v1193 = vsel %vm1189, %v1180, %v1188
    %v1194 = vsel %vm1189, %v1182, %v1174
    %v1195 = vsel %vm1189, %v1184, %v1176
    %v1196 = vsel %vm1189, %v1186, %v1178
    %v1197 = vsel %vm1189, %v1188, %v1180
    %vm1198 = vcmp.ge.s32.totalorder %v64, 64
    %vm1199 = vcmp.ge.s32.totalorder %v65, 64
    %v1200 = vsel %vm1198, 1, 0
    %v1201 = vsel %vm1199, 1, 0
    %vm1202 = vcmp.eq.s32.totalorder %v1200, 1
    %vm1203 = vcmp.eq.s32.totalorder %v1201, 1
    %v1204 = vsel %vm1202, %v1194, 0.0
    %v1205 = vsel %vm1203, %v1190, 0.0
    %v1206 = vsel %vm1202, %v1195, 0.0
    %v1207 = vsel %vm1203, %v1191, 0.0
    %v1208 = vsel %vm1202, %v1196, 0.0
    %v1209 = vsel %vm1203, %v1192, 0.0
    %v1210 = vsel %vm1202, %v1197, 0.0
    %v1211 = vsel %vm1203, %v1193, 0.0
    %1212 = vset.pattern.permute.xlu0 18
    %1213 = vperm.xlu0 %1212, %v61
    %v1214 = vpop.permute.xlu0 %1213
    %1216 = vset.pattern.permute.xlu0 18
    %1217 = vperm.xlu0 %1216, %v62
    %v1218 = vpop.permute.xlu0 %1217
    %v1220 = vmul.f32 %v1204, %v1214
    %v1221 = vmul.f32 %v1205, %v1214
    %v1222 = vmul.f32 %v1206, %v1218
    %v1223 = vmul.f32 %v1207, %v1218
    %v1224 = vmul.f32 %v1208, %v1214
    %v1225 = vmul.f32 %v1209, %v1214
    %v1226 = vmul.f32 %v1210, %v1218
    %v1227 = vmul.f32 %v1211, %v1218
    %v1228 = vadd.f32 %v1165, %v1220
    %v1229 = vadd.f32 %v1166, %v1221
    %v1230 = vadd.f32 %v1167, %v1222
    %v1231 = vadd.f32 %v1168, %v1223
    %v1232 = vadd.f32 %v1169, %v1224
    %v1233 = vadd.f32 %v1170, %v1225
    %v1234 = vadd.f32 %v1171, %v1226
    %v1235 = vadd.f32 %v1172, %v1227
    %1236 = vrot.lane.b32.xlu0 %v53, 48
    %v1237 = vpop.permute.xlu0 %1236
    %1238 = vrot.lane.b32.xlu0 %v55, 48
    %v1239 = vpop.permute.xlu0 %1238
    %1240 = vrot.lane.b32.xlu0 %v57, 48
    %v1241 = vpop.permute.xlu0 %1240
    %1242 = vrot.lane.b32.xlu0 %v59, 48
    %v1243 = vpop.permute.xlu0 %1242
    %1244 = vrot.lane.b32.xlu0 %v54, 48
    %v1245 = vpop.permute.xlu0 %1244
    %1246 = vrot.lane.b32.xlu0 %v56, 48
    %v1247 = vpop.permute.xlu0 %1246
    %1248 = vrot.lane.b32.xlu0 %v58, 48
    %v1249 = vpop.permute.xlu0 %1248
    %1250 = vrot.lane.b32.xlu0 %v60, 48
    %v1251 = vpop.permute.xlu0 %1250
    %vm1252 = vcmp.lt.s32.totalorder %v64, 48
    %v1253 = vsel %vm1252, %v1237, %v1245
    %v1254 = vsel %vm1252, %v1239, %v1247
    %v1255 = vsel %vm1252, %v1241, %v1249
    %v1256 = vsel %vm1252, %v1243, %v1251
    %v1257 = vsel %vm1252, %v1245, %v1237
    %v1258 = vsel %vm1252, %v1247, %v1239
    %v1259 = vsel %vm1252, %v1249, %v1241
    %v1260 = vsel %vm1252, %v1251, %v1243
    %vm1261 = vcmp.ge.s32.totalorder %v64, 48
    %vm1262 = vcmp.ge.s32.totalorder %v65, 48
    %v1263 = vsel %vm1261, 1, 0
    %v1264 = vsel %vm1262, 1, 0
    %vm1265 = vcmp.eq.s32.totalorder %v1263, 1
    %vm1266 = vcmp.eq.s32.totalorder %v1264, 1
    %v1267 = vsel %vm1265, %v1257, 0.0
    %v1268 = vsel %vm1266, %v1253, 0.0
    %v1269 = vsel %vm1265, %v1258, 0.0
    %v1270 = vsel %vm1266, %v1254, 0.0
    %v1271 = vsel %vm1265, %v1259, 0.0
    %v1272 = vsel %vm1266, %v1255, 0.0
    %v1273 = vsel %vm1265, %v1260, 0.0
    %v1274 = vsel %vm1266, %v1256, 0.0
    %1275 = vset.pattern.permute.xlu0 19
    %1276 = vperm.xlu0 %1275, %v61
    %v1277 = vpop.permute.xlu0 %1276
    %1279 = vset.pattern.permute.xlu0 19
    %1280 = vperm.xlu0 %1279, %v62
    %v1281 = vpop.permute.xlu0 %1280
    %v1283 = vmul.f32 %v1267, %v1277
    %v1284 = vmul.f32 %v1268, %v1277
    %v1285 = vmul.f32 %v1269, %v1281
    %v1286 = vmul.f32 %v1270, %v1281
    %v1287 = vmul.f32 %v1271, %v1277
    %v1288 = vmul.f32 %v1272, %v1277
    %v1289 = vmul.f32 %v1273, %v1281
    %v1290 = vmul.f32 %v1274, %v1281
    %v1291 = vadd.f32 %v1228, %v1283
    %v1292 = vadd.f32 %v1229, %v1284
    %v1293 = vadd.f32 %v1230, %v1285
    %v1294 = vadd.f32 %v1231, %v1286
    %v1295 = vadd.f32 %v1232, %v1287
    %v1296 = vadd.f32 %v1233, %v1288
    %v1297 = vadd.f32 %v1234, %v1289
    %v1298 = vadd.f32 %v1235, %v1290
    %1299 = vrot.lane.b32.xlu0 %v53, 16
    %v1300 = vpop.permute.xlu0 %1299
    %1301 = vrot.lane.b32.xlu0 %v55, 16
    %v1302 = vpop.permute.xlu0 %1301
    %1303 = vrot.lane.b32.xlu0 %v57, 16
    %v1304 = vpop.permute.xlu0 %1303
    %1305 = vrot.lane.b32.xlu0 %v59, 16
    %v1306 = vpop.permute.xlu0 %1305
    %1307 = vrot.lane.b32.xlu0 %v54, 16
    %v1308 = vpop.permute.xlu0 %1307
    %1309 = vrot.lane.b32.xlu0 %v56, 16
    %v1310 = vpop.permute.xlu0 %1309
    %1311 = vrot.lane.b32.xlu0 %v58, 16
    %v1312 = vpop.permute.xlu0 %1311
    %1313 = vrot.lane.b32.xlu0 %v60, 16
    %v1314 = vpop.permute.xlu0 %1313
    %vm1315 = vcmp.lt.s32.totalorder %v64, 16
    %v1316 = vsel %vm1315, %v1300, %v1308
    %v1317 = vsel %vm1315, %v1302, %v1310
    %v1318 = vsel %vm1315, %v1304, %v1312
    %v1319 = vsel %vm1315, %v1306, %v1314
    %v1320 = vsel %vm1315, %v1308, %v1300
    %v1321 = vsel %vm1315, %v1310, %v1302
    %v1322 = vsel %vm1315, %v1312, %v1304
    %v1323 = vsel %vm1315, %v1314, %v1306
    %vm1324 = vcmp.ge.s32.totalorder %v64, 16
    %vm1325 = vcmp.ge.s32.totalorder %v65, 16
    %v1326 = vsel %vm1324, 1, 0
    %v1327 = vsel %vm1325, 1, 0
    %vm1328 = vcmp.eq.s32.totalorder %v1326, 1
    %vm1329 = vcmp.eq.s32.totalorder %v1327, 1
    %v1330 = vsel %vm1328, %v1320, 0.0
    %v1331 = vsel %vm1329, %v1316, 0.0
    %v1332 = vsel %vm1328, %v1321, 0.0
    %v1333 = vsel %vm1329, %v1317, 0.0
    %v1334 = vsel %vm1328, %v1322, 0.0
    %v1335 = vsel %vm1329, %v1318, 0.0
    %v1336 = vsel %vm1328, %v1323, 0.0
    %v1337 = vsel %vm1329, %v1319, 0.0
    %1338 = vset.pattern.permute.xlu0 20
    %1339 = vperm.xlu0 %1338, %v61
    %v1340 = vpop.permute.xlu0 %1339
    %1342 = vset.pattern.permute.xlu0 20
    %1343 = vperm.xlu0 %1342, %v62
    %v1344 = vpop.permute.xlu0 %1343
    %v1346 = vmul.f32 %v1330, %v1340
    %v1347 = vmul.f32 %v1331, %v1340
    %v1348 = vmul.f32 %v1332, %v1344
    %v1349 = vmul.f32 %v1333, %v1344
    %v1350 = vmul.f32 %v1334, %v1340
    %v1351 = vmul.f32 %v1335, %v1340
    %v1352 = vmul.f32 %v1336, %v1344
    %v1353 = vmul.f32 %v1337, %v1344
    %v1354 = vadd.f32 %v1291, %v1346
    %v1355 = vadd.f32 %v1292, %v1347
    %v1356 = vadd.f32 %v1293, %v1348
    %v1357 = vadd.f32 %v1294, %v1349
    %v1358 = vadd.f32 %v1295, %v1350
    %v1359 = vadd.f32 %v1296, %v1351
    %v1360 = vadd.f32 %v1297, %v1352
    %v1361 = vadd.f32 %v1298, %v1353
    %1362 = vrot.lane.b32.xlu0 %v53, 112
    %v1363 = vpop.permute.xlu0 %1362
    %1364 = vrot.lane.b32.xlu0 %v55, 112
    %v1365 = vpop.permute.xlu0 %1364
    %1366 = vrot.lane.b32.xlu0 %v57, 112
    %v1367 = vpop.permute.xlu0 %1366
    %1368 = vrot.lane.b32.xlu0 %v59, 112
    %v1369 = vpop.permute.xlu0 %1368
    %1370 = vrot.lane.b32.xlu0 %v54, 112
    %v1371 = vpop.permute.xlu0 %1370
    %1372 = vrot.lane.b32.xlu0 %v56, 112
    %v1373 = vpop.permute.xlu0 %1372
    %1374 = vrot.lane.b32.xlu0 %v58, 112
    %v1375 = vpop.permute.xlu0 %1374
    %1376 = vrot.lane.b32.xlu0 %v60, 112
    %v1377 = vpop.permute.xlu0 %1376
    %vm1378 = vcmp.lt.s32.totalorder %v64, 112
    %v1379 = vsel %vm1378, %v1363, %v1371
    %v1380 = vsel %vm1378, %v1365, %v1373
    %v1381 = vsel %vm1378, %v1367, %v1375
    %v1382 = vsel %vm1378, %v1369, %v1377
    %v1383 = vsel %vm1378, %v1371, %v1363
    %v1384 = vsel %vm1378, %v1373, %v1365
    %v1385 = vsel %vm1378, %v1375, %v1367
    %v1386 = vsel %vm1378, %v1377, %v1369
    %vm1387 = vcmp.lt.s32.totalorder %v64, 240
    %vm1388 = vcmp.lt.s32.totalorder %v65, 240
    %v1389 = vsel %vm1387, 1, 0
    %v1390 = vsel %vm1388, 1, 0
    %vm1391 = vcmp.eq.s32.totalorder %v1389, 1
    %vm1392 = vcmp.eq.s32.totalorder %v1390, 1
    %v1393 = vsel %vm1391, %v1379, 0.0
    %v1394 = vsel %vm1392, %v1383, 0.0
    %v1395 = vsel %vm1391, %v1380, 0.0
    %v1396 = vsel %vm1392, %v1384, 0.0
    %v1397 = vsel %vm1391, %v1381, 0.0
    %v1398 = vsel %vm1392, %v1385, 0.0
    %v1399 = vsel %vm1391, %v1382, 0.0
    %v1400 = vsel %vm1392, %v1386, 0.0
    %1401 = vset.pattern.permute.xlu0 21
    %1402 = vperm.xlu0 %1401, %v61
    %v1403 = vpop.permute.xlu0 %1402
    %1405 = vset.pattern.permute.xlu0 21
    %1406 = vperm.xlu0 %1405, %v62
    %v1407 = vpop.permute.xlu0 %1406
    %v1409 = vmul.f32 %v1393, %v1403
    %v1410 = vmul.f32 %v1394, %v1403
    %v1411 = vmul.f32 %v1395, %v1407
    %v1412 = vmul.f32 %v1396, %v1407
    %v1413 = vmul.f32 %v1397, %v1403
    %v1414 = vmul.f32 %v1398, %v1403
    %v1415 = vmul.f32 %v1399, %v1407
    %v1416 = vmul.f32 %v1400, %v1407
    %v1417 = vadd.f32 %v1354, %v1409
    %v1418 = vadd.f32 %v1355, %v1410
    %v1419 = vadd.f32 %v1356, %v1411
    %v1420 = vadd.f32 %v1357, %v1412
    %v1421 = vadd.f32 %v1358, %v1413
    %v1422 = vadd.f32 %v1359, %v1414
    %v1423 = vadd.f32 %v1360, %v1415
    %v1424 = vadd.f32 %v1361, %v1416
    %vm1425 = vcmp.lt.s32.totalorder %v64, 208
    %vm1426 = vcmp.lt.s32.totalorder %v65, 208
    %v1427 = vsel %vm1425, 1, 0
    %v1428 = vsel %vm1426, 1, 0
    %vm1429 = vcmp.eq.s32.totalorder %v1427, 1
    %vm1430 = vcmp.eq.s32.totalorder %v1428, 1
    %v1431 = vsel %vm1429, %v1127, 0.0
    %v1432 = vsel %vm1430, %v1131, 0.0
    %v1433 = vsel %vm1429, %v1128, 0.0
    %v1434 = vsel %vm1430, %v1132, 0.0
    %v1435 = vsel %vm1429, %v1129, 0.0
    %v1436 = vsel %vm1430, %v1133, 0.0
    %v1437 = vsel %vm1429, %v1130, 0.0
    %v1438 = vsel %vm1430, %v1134, 0.0
    %1439 = vset.pattern.permute.xlu0 22
    %1440 = vperm.xlu0 %1439, %v61
    %v1441 = vpop.permute.xlu0 %1440
    %1443 = vset.pattern.permute.xlu0 22
    %1444 = vperm.xlu0 %1443, %v62
    %v1445 = vpop.permute.xlu0 %1444
    %v1447 = vmul.f32 %v1431, %v1441
    %v1448 = vmul.f32 %v1432, %v1441
    %v1449 = vmul.f32 %v1433, %v1445
    %v1450 = vmul.f32 %v1434, %v1445
    %v1451 = vmul.f32 %v1435, %v1441
    %v1452 = vmul.f32 %v1436, %v1441
    %v1453 = vmul.f32 %v1437, %v1445
    %v1454 = vmul.f32 %v1438, %v1445
    %v1455 = vadd.f32 %v1417, %v1447
    %v1456 = vadd.f32 %v1418, %v1448
    %v1457 = vadd.f32 %v1419, %v1449
    %v1458 = vadd.f32 %v1420, %v1450
    %v1459 = vadd.f32 %v1421, %v1451
    %v1460 = vadd.f32 %v1422, %v1452
    %v1461 = vadd.f32 %v1423, %v1453
    %v1462 = vadd.f32 %v1424, %v1454
    %vm1463 = vcmp.lt.s32.totalorder %v64, 192
    %vm1464 = vcmp.lt.s32.totalorder %v65, 192
    %v1465 = vsel %vm1463, 1, 0
    %v1466 = vsel %vm1464, 1, 0
    %vm1467 = vcmp.eq.s32.totalorder %v1465, 1
    %vm1468 = vcmp.eq.s32.totalorder %v1466, 1
    %v1469 = vsel %vm1467, %v1190, 0.0
    %v1470 = vsel %vm1468, %v1194, 0.0
    %v1471 = vsel %vm1467, %v1191, 0.0
    %v1472 = vsel %vm1468, %v1195, 0.0
    %v1473 = vsel %vm1467, %v1192, 0.0
    %v1474 = vsel %vm1468, %v1196, 0.0
    %v1475 = vsel %vm1467, %v1193, 0.0
    %v1476 = vsel %vm1468, %v1197, 0.0
    %1477 = vset.pattern.permute.xlu0 23
    %1478 = vperm.xlu0 %1477, %v61
    %v1479 = vpop.permute.xlu0 %1478
    %1481 = vset.pattern.permute.xlu0 23
    %1482 = vperm.xlu0 %1481, %v62
    %v1483 = vpop.permute.xlu0 %1482
    %v1485 = vmul.f32 %v1469, %v1479
    %v1486 = vmul.f32 %v1470, %v1479
    %v1487 = vmul.f32 %v1471, %v1483
    %v1488 = vmul.f32 %v1472, %v1483
    %v1489 = vmul.f32 %v1473, %v1479
    %v1490 = vmul.f32 %v1474, %v1479
    %v1491 = vmul.f32 %v1475, %v1483
    %v1492 = vmul.f32 %v1476, %v1483
    %v1493 = vadd.f32 %v1455, %v1485
    %v1494 = vadd.f32 %v1456, %v1486
    %v1495 = vadd.f32 %v1457, %v1487
    %v1496 = vadd.f32 %v1458, %v1488
    %v1497 = vadd.f32 %v1459, %v1489
    %v1498 = vadd.f32 %v1460, %v1490
    %v1499 = vadd.f32 %v1461, %v1491
    %v1500 = vadd.f32 %v1462, %v1492
    %vm1501 = vcmp.lt.s32.totalorder %v64, 176
    %vm1502 = vcmp.lt.s32.totalorder %v65, 176
    %v1503 = vsel %vm1501, 1, 0
    %v1504 = vsel %vm1502, 1, 0
    %vm1505 = vcmp.eq.s32.totalorder %v1503, 1
    %vm1506 = vcmp.eq.s32.totalorder %v1504, 1
    %v1507 = vsel %vm1505, %v1253, 0.0
    %v1508 = vsel %vm1506, %v1257, 0.0
    %v1509 = vsel %vm1505, %v1254, 0.0
    %v1510 = vsel %vm1506, %v1258, 0.0
    %v1511 = vsel %vm1505, %v1255, 0.0
    %v1512 = vsel %vm1506, %v1259, 0.0
    %v1513 = vsel %vm1505, %v1256, 0.0
    %v1514 = vsel %vm1506, %v1260, 0.0
    %1515 = vset.pattern.permute.xlu0 24
    %1516 = vperm.xlu0 %1515, %v61
    %v1517 = vpop.permute.xlu0 %1516
    %1519 = vset.pattern.permute.xlu0 24
    %1520 = vperm.xlu0 %1519, %v62
    %v1521 = vpop.permute.xlu0 %1520
    %v1523 = vmul.f32 %v1507, %v1517
    %v1524 = vmul.f32 %v1508, %v1517
    %v1525 = vmul.f32 %v1509, %v1521
    %v1526 = vmul.f32 %v1510, %v1521
    %v1527 = vmul.f32 %v1511, %v1517
    %v1528 = vmul.f32 %v1512, %v1517
    %v1529 = vmul.f32 %v1513, %v1521
    %v1530 = vmul.f32 %v1514, %v1521
    %v1531 = vadd.f32 %v1493, %v1523
    %v1532 = vadd.f32 %v1494, %v1524
    %v1533 = vadd.f32 %v1495, %v1525
    %v1534 = vadd.f32 %v1496, %v1526
    %v1535 = vadd.f32 %v1497, %v1527
    %v1536 = vadd.f32 %v1498, %v1528
    %v1537 = vadd.f32 %v1499, %v1529
    %v1538 = vadd.f32 %v1500, %v1530
    %1539 = vst [vmem:[#allocation3] sm:$0xff] %v1531
    %1540 = vst [vmem:[#allocation3 + $0x8] sm:$0xff] %v1532
    %1541 = vst [vmem:[#allocation3 + $0x10] sm:$0xff] %v1533
    %1542 = vst [vmem:[#allocation3 + $0x18] sm:$0xff] %v1534
    %1543 = vst [vmem:[#allocation3 + $0x20] sm:$0xff] %v1535
    %1544 = vst [vmem:[#allocation3 + $0x28] sm:$0xff] %v1536
    %1545 = vst [vmem:[#allocation3 + $0x30] sm:$0xff] %v1537
    %1546 = vst [vmem:[#allocation3 + $0x38] sm:$0xff] %v1538
    // Predicated region
    $region33: #{_lambda_.1} parent=1 // pred_check
      _
    $region34: #{_lambda_.1} parent=1 // pred_check_branch
      %1548 = sbr.rel (0) target = $region36
    $region35: #{_lambda_.1} parent=1 // pred_region
      %s1549 = sadd.s32 0, 1
      %s1550 = smul.u32 2, %s1549
      %s1551 = smul.addr %s1550, 2
      %s1552 = smul.addr %s1551, 8
      %s1553 = scalar_lea.vmem %s2, %s1552
      // Predicated region
      $region37: #{_lambda_.1} parent=35 // pred_check
        _
      $region38: #{_lambda_.1} parent=35 // pred_check_branch
        %1555 = sbr.rel (0) target = $region40
      $region39: #{_lambda_.1} parent=35 // pred_region
        // Predicated region
        $region41: #{_lambda_.1} parent=39 // pred_check
          _
        $region42: #{_lambda_.1} parent=39 // pred_check_branch
          %1557 = sbr.rel (0) target = $region44
        $region43: #{_lambda_.1} parent=39 // pred_region
          loop: start=0, step=1, limit=1
          $region45: #{_lambda_.1} parent=43 // loop_pre_header
            _
          $region46: #{_lambda_.1} parent=43 // loop_header
            %s1559 = sphi 0, %s1563
            %p1560 = scmp.ge.s32.totalorder %s1559, 1
            %s1564 = sphi [#allocation3], [#allocation3]
            %s1565 = sphi %s1553, %s1553
          $region47: #{_lambda_.1} parent=43 // loop_header_branch
            %1562 = sbr.rel (%p1560) target = $region51
          $region48: #{_lambda_.1} parent=43 // loop_body
            %v1566 = vld [vmem:[%s1564] sm:$0xff]
            %1567 = vst [vmem:[%s1565] sm:$0xff] %v1566
            %v1568 = vld [vmem:[%s1564 + $0x8] sm:$0xff]
            %1569 = vst [vmem:[%s1565 + $0x8] sm:$0xff] %v1568
            %v1570 = vld [vmem:[%s1564 + $0x10] sm:$0xff]
            %1571 = vst [vmem:[%s1565 + $0x10] sm:$0xff] %v1570
            %v1572 = vld [vmem:[%s1564 + $0x18] sm:$0xff]
            %1573 = vst [vmem:[%s1565 + $0x18] sm:$0xff] %v1572
            %v1574 = vld [vmem:[%s1564 + $0x20] sm:$0xff]
            %1575 = vst [vmem:[%s1565 + $0x40] sm:$0xff] %v1574
            %v1576 = vld [vmem:[%s1564 + $0x28] sm:$0xff]
            %1577 = vst [vmem:[%s1565 + $0x48] sm:$0xff] %v1576
            %v1578 = vld [vmem:[%s1564 + $0x30] sm:$0xff]
            %1579 = vst [vmem:[%s1565 + $0x50] sm:$0xff] %v1578
            %v1580 = vld [vmem:[%s1564 + $0x38] sm:$0xff]
            %1581 = vst [vmem:[%s1565 + $0x58] sm:$0xff] %v1580
          $region49: #{_lambda_.1} parent=43 // loop_footer
            %s1563 = sadd.s32 1, %s1559
          $region50: #{_lambda_.1} parent=43 // loop_footer_branch
            %1558 = sbr.rel target = $region46
          $region51: #{_lambda_.1} parent=43 // loop_exit
            _
        $region44: #{_lambda_.1} parent=39 // pred_fallthru
          _
        // Predicated region
        $region52: #{_lambda_.1} parent=39 // pred_check
          _
        $region53: #{_lambda_.1} parent=39 // pred_check_branch
          %1583 = sbr.rel target = $region55
        $region54: #{_lambda_.1} parent=39 // pred_region
          _
        $region55: #{_lambda_.1} parent=39 // pred_fallthru
          _
      $region40: #{_lambda_.1} parent=35 // pred_fallthru
        _
      %1584 = vnop
    $region36: #{_lambda_.1} parent=1 // pred_fallthru
      _
    // Predicated region
    $region56: #{_lambda_.1} parent=1 // pred_check
      _
    $region57: #{_lambda_.1} parent=1 // pred_check_branch
      %1586 = sbr.rel (0) target = $region59
    $region58: #{_lambda_.1} parent=1 // pred_region
      _
    $region59: #{_lambda_.1} parent=1 // pred_fallthru
      _

// kernel: _lambda_.1
$region0: #{_lambda_.1}
  #allocation0 [shape = 'u32[]', space=smem, size = 0x4, offset = 0x4, fixed_abs, tag = 'smem constant byte address 0x4 - core index']
  #allocation1 [shape = 'u32[144,128]{1,0:T(1,128)}', space=vmem, size = 0x12000, scoped, tag = 'internal scratch']
  %s0 = inlined_call_operand.vmem [shape: f32[2,32,256], index: 0, kind: input, shape index: {}, may-alias: {0,2}]
  %s1 = inlined_call_operand.vmem [shape: f32[16,128], index: 1, kind: input, shape index: {}]
  %s2 = inlined_call_operand.vmem [shape: f32[2,32,256], index: 2, kind: output, shape index: {}, may-alias: {0,2}]
  %s3 = sld [smem:[#allocation0]]
  $region60: #{_lambda_.1} parent=0
    _
  %s5 = ssub.s32 1, %s3
  %s6 = scalar_select 0, %s5, %s3
  $region1: #{_lambda_.1} parent=0
    #allocation2 [shape = 'u8[32768]{0}', space=vmem, size = 0x8000, scoped, tag = 'input window, operand 0, single buffered']
    #allocation3 [shape = 'u8[32768]{0}', space=vmem, size = 0x8000, scoped, tag = 'output window, operand 0, single buffered']
    // Predicated region
    $region2: #{_lambda_.1} parent=1 // pred_check
      _
    $region3: #{_lambda_.1} parent=1 // pred_check_branch
      %8 = sbr.rel (0) target = $region5
    $region4: #{_lambda_.1} parent=1 // pred_region
      %s9 = sadd.s32 0, 1
      %s10 = smul.u32 2, %s9
      %s11 = smul.addr %s10, 2
      %s12 = smul.addr %s11, 8
      %s13 = scalar_lea.vmem %s0, %s12
      // Predicated region
      $region6: #{_lambda_.1} parent=4 // pred_check
        _
      $region7: #{_lambda_.1} parent=4 // pred_check_branch
        %15 = sbr.rel (0) target = $region9
      $region8: #{_lambda_.1} parent=4 // pred_region
        // Predicated region
        $region10: #{_lambda_.1} parent=8 // pred_check
          _
        $region11: #{_lambda_.1} parent=8 // pred_check_branch
          %17 = sbr.rel (0) target = $region13
        $region12: #{_lambda_.1} parent=8 // pred_region
          loop: start=0, step=1, limit=1
          $region14: #{_lambda_.1} parent=12 // loop_pre_header
            _
          $region15: #{_lambda_.1} parent=12 // loop_header
            %s19 = sphi 0, %s23
            %p20 = scmp.ge.s32.totalorder %s19, 1
            %s24 = sphi %s13, %s13
            %s25 = sphi [#allocation2], [#allocation2]
          $region16: #{_lambda_.1} parent=12 // loop_header_branch
            %22 = sbr.rel (%p20) target = $region20
          $region17: #{_lambda_.1} parent=12 // loop_body
            %v26 = vld [vmem:[%s24] sm:$0xff]
            %27 = vst [vmem:[%s25] sm:$0xff] %v26
            %v28 = vld [vmem:[%s24 + $0x8] sm:$0xff]
            %29 = vst [vmem:[%s25 + $0x8] sm:$0xff] %v28
            %v30 = vld [vmem:[%s24 + $0x10] sm:$0xff]
            %31 = vst [vmem:[%s25 + $0x10] sm:$0xff] %v30
            %v32 = vld [vmem:[%s24 + $0x18] sm:$0xff]
            %33 = vst [vmem:[%s25 + $0x18] sm:$0xff] %v32
            %v34 = vld [vmem:[%s24 + $0x40] sm:$0xff]
            %35 = vst [vmem:[%s25 + $0x20] sm:$0xff] %v34
            %v36 = vld [vmem:[%s24 + $0x48] sm:$0xff]
            %37 = vst [vmem:[%s25 + $0x28] sm:$0xff] %v36
            %v38 = vld [vmem:[%s24 + $0x50] sm:$0xff]
            %39 = vst [vmem:[%s25 + $0x30] sm:$0xff] %v38
            %v40 = vld [vmem:[%s24 + $0x58] sm:$0xff]
            %41 = vst [vmem:[%s25 + $0x38] sm:$0xff] %v40
          $region18: #{_lambda_.1} parent=12 // loop_footer
            %s23 = sadd.s32 1, %s19
          $region19: #{_lambda_.1} parent=12 // loop_footer_branch
            %18 = sbr.rel target = $region15
          $region20: #{_lambda_.1} parent=12 // loop_exit
            _
        $region13: #{_lambda_.1} parent=8 // pred_fallthru
          _
        // Predicated region
        $region21: #{_lambda_.1} parent=8 // pred_check
          _
        $region22: #{_lambda_.1} parent=8 // pred_check_branch
          %43 = sbr.rel target = $region24
        $region23: #{_lambda_.1} parent=8 // pred_region
          _
        $region24: #{_lambda_.1} parent=8 // pred_fallthru
          _
      $region9: #{_lambda_.1} parent=4 // pred_fallthru
        _
      %44 = vnop
    $region5: #{_lambda_.1} parent=1 // pred_fallthru
      _
    // Predicated region
    $region25: #{_lambda_.1} parent=1 // pred_check
      _
    $region26: #{_lambda_.1} parent=1 // pred_check_branch
      %46 = sbr.rel (0) target = $region28
    $region27: #{_lambda_.1} parent=1 // pred_region
      _
    $region28: #{_lambda_.1} parent=1 // pred_fallthru
      _
    // Predicated region
    $region29: #{_lambda_.1} parent=1 // pred_check
      _
    $region30: #{_lambda_.1} parent=1 // pred_check_branch
      %48 = sbr.rel (0) target = $region32
    $region31: #{_lambda_.1} parent=1 // pred_region
      _
    $region32: #{_lambda_.1} parent=1 // pred_fallthru
      _
    %s49 = sadd.s32 0, 1
    %s50 = smul.u32 2, %s49
    %s51 = sadd.s32 0, 1
    %s52 = smul.u32 2, %s51
    %v53 = vld [vmem:[#allocation2] sm:$0xff]
    %v54 = vld [vmem:[#allocation2 + $0x8] sm:$0xff]
    %v55 = vld [vmem:[#allocation2 + $0x10] sm:$0xff]
    %v56 = vld [vmem:[#allocation2 + $0x18] sm:$0xff]
    %v57 = vld [vmem:[#allocation2 + $0x20] sm:$0xff]
    %v58 = vld [vmem:[#allocation2 + $0x28] sm:$0xff]
    %v59 = vld [vmem:[#allocation2 + $0x30] sm:$0xff]
    %v60 = vld [vmem:[#allocation2 + $0x38] sm:$0xff]
    %v61 = vld [vmem:[%s1] sm:$0xff]
    %v62 = vld [vmem:[%s1 + $0x8] sm:$0xff]
    %v63 = vlaneseq
    %v64 = vand.u32 %v63, 127
    %v65 = vadd.s32 %v64, 128
    %v66 = vand.u32 %v64, 15
    %v67 = vand.u32 %v65, 15
    %69 = vset.pattern.permute.xlu0 32
    %70 = vperm.xlu0 %69, %v61
    %v71 = vpop.permute.xlu0 %70
    %74 = vset.pattern.permute.xlu0 32
    %75 = vperm.xlu0 %74, %v62
    %v76 = vpop.permute.xlu0 %75
    %82 = vrot.lane.b32.xlu0 %v54, 34
    %v83 = vpop.permute.xlu0 %82
    %84 = vrot.lane.b32.xlu0 %v56, 34
    %v85 = vpop.permute.xlu0 %84
    %86 = vrot.lane.b32.xlu0 %v58, 34
    %v87 = vpop.permute.xlu0 %86
    %88 = vrot.lane.b32.xlu0 %v60, 34
    %v89 = vpop.permute.xlu0 %88
    %98 = vrot.lane.b32.xlu0 %v53, 34
    %v99 = vpop.permute.xlu0 %98
    %100 = vrot.lane.b32.xlu0 %v55, 34
    %v101 = vpop.permute.xlu0 %100
    %102 = vrot.lane.b32.xlu0 %v57, 34
    %v103 = vpop.permute.xlu0 %102
    %104 = vrot.lane.b32.xlu0 %v59, 34
    %v105 = vpop.permute.xlu0 %104
    %vm106 = vcmask 277504
    %v107 = vsel %vm106, %v99, %v83
    %v108 = vsel %vm106, %v101, %v85
    %v109 = vsel %vm106, %v103, %v87
    %v110 = vsel %vm106, %v105, %v89
    %v119 = vsel %vm106, %v83, %v99
    %v120 = vsel %vm106, %v85, %v101
    %v121 = vsel %vm106, %v87, %v103
    %v122 = vsel %vm106, %v89, %v105
    %vm123 = vcmp.ge.s32.totalorder %v64, 32
    %vm124 = vcmp.ge.s32.totalorder %v65, 32
    %vm125 = vcmp.ge.s32.totalorder %v66, 2
    %vm126 = vcmp.ge.s32.totalorder %v67, 2
    %vm127 = vmand %vm123, %vm125
    %vm128 = vmand %vm124, %vm126
    %v129 = vsel %vm127, 1, 0
    %v130 = vsel %vm128, 1, 0
    %vm131 = vcmp.eq.s32.totalorder %v129, 1
    %vm132 = vcmp.eq.s32.totalorder %v130, 1
    %v133 = vsel %vm131, %v119, 0.0
    %v134 = vsel %vm132, %v107, 0.0
    %v135 = vsel %vm131, %v120, 0.0
    %v136 = vsel %vm132, %v108, 0.0
    %v137 = vsel %vm131, %v121, 0.0
    %v138 = vsel %vm132, %v109, 0.0
    %v139 = vsel %vm131, %v122, 0.0
    %v140 = vsel %vm132, %v110, 0.0
    %141 = vset.pattern.permute.xlu0 0
    %142 = vperm.xlu0 %141, %v61
    %v143 = vpop.permute.xlu0 %142
    %145 = vset.pattern.permute.xlu0 0
    %146 = vperm.xlu0 %145, %v62
    %v147 = vpop.permute.xlu0 %146
    %v149 = vmul.f32 %v133, %v143
    %v150 = vmul.f32 %v134, %v143
    %v151 = vmul.f32 %v135, %v147
    %v152 = vmul.f32 %v136, %v147
    %v153 = vmul.f32 %v137, %v143
    %v154 = vmul.f32 %v138, %v143
    %v155 = vmul.f32 %v139, %v147
    %v156 = vmul.f32 %v140, %v147
    %v157 = vadd.f32 %v71, %v149
    %v158 = vadd.f32 %v71, %v150
    %v159 = vadd.f32 %v76, %v151
    %v160 = vadd.f32 %v76, %v152
    %v161 = vadd.f32 %v71, %v153
    %v162 = vadd.f32 %v71, %v154
    %v163 = vadd.f32 %v76, %v155
    %v164 = vadd.f32 %v76, %v156
    %165 = vrot.lane.b32.xlu0 %v54, 32
    %v166 = vpop.permute.xlu0 %165
    %167 = vrot.lane.b32.xlu0 %v56, 32
    %v168 = vpop.permute.xlu0 %167
    %169 = vrot.lane.b32.xlu0 %v58, 32
    %v170 = vpop.permute.xlu0 %169
    %171 = vrot.lane.b32.xlu0 %v60, 32
    %v172 = vpop.permute.xlu0 %171
    %177 = vrot.lane.b32.xlu0 %v53, 32
    %v178 = vpop.permute.xlu0 %177
    %179 = vrot.lane.b32.xlu0 %v55, 32
    %v180 = vpop.permute.xlu0 %179
    %181 = vrot.lane.b32.xlu0 %v57, 32
    %v182 = vpop.permute.xlu0 %181
    %183 = vrot.lane.b32.xlu0 %v59, 32
    %v184 = vpop.permute.xlu0 %183
    %vm185 = vcmask 261120
    %v186 = vsel %vm185, %v178, %v166
    %v187 = vsel %vm185, %v180, %v168
    %v188 = vsel %vm185, %v182, %v170
    %v189 = vsel %vm185, %v184, %v172
    %v198 = vsel %vm185, %v166, %v178
    %v199 = vsel %vm185, %v168, %v180
    %v200 = vsel %vm185, %v170, %v182
    %v201 = vsel %vm185, %v172, %v184
    %v202 = vsel %vm123, 1, 0
    %v203 = vsel %vm124, 1, 0
    %vm204 = vcmp.eq.s32.totalorder %v202, 1
    %vm205 = vcmp.eq.s32.totalorder %v203, 1
    %v206 = vsel %vm204, %v198, 0.0
    %v207 = vsel %vm205, %v186, 0.0
    %v208 = vsel %vm204, %v199, 0.0
    %v209 = vsel %vm205, %v187, 0.0
    %v210 = vsel %vm204, %v200, 0.0
    %v211 = vsel %vm205, %v188, 0.0
    %v212 = vsel %vm204, %v201, 0.0
    %v213 = vsel %vm205, %v189, 0.0
    %214 = vset.pattern.permute.xlu0 1
    %215 = vperm.xlu0 %214, %v61
    %v216 = vpop.permute.xlu0 %215
    %218 = vset.pattern.permute.xlu0 1
    %219 = vperm.xlu0 %218, %v62
    %v220 = vpop.permute.xlu0 %219
    %v222 = vmul.f32 %v206, %v216
    %v223 = vmul.f32 %v207, %v216
    %v224 = vmul.f32 %v208, %v220
    %v225 = vmul.f32 %v209, %v220
    %v226 = vmul.f32 %v210, %v216
    %v227 = vmul.f32 %v211, %v216
    %v228 = vmul.f32 %v212, %v220
    %v229 = vmul.f32 %v213, %v220
    %v230 = vadd.f32 %v157, %v222
    %v231 = vadd.f32 %v158, %v223
    %v232 = vadd.f32 %v159, %v224
    %v233 = vadd.f32 %v160, %v225
    %v234 = vadd.f32 %v161, %v226
    %v235 = vadd.f32 %v162, %v227
    %v236 = vadd.f32 %v163, %v228
    %v237 = vadd.f32 %v164, %v229
    %238 = vrot.lane.b32.xlu0 %v54, 30
    %v239 = vpop.permute.xlu0 %238
    %240 = vrot.lane.b32.xlu0 %v56, 30
    %v241 = vpop.permute.xlu0 %240
    %242 = vrot.lane.b32.xlu0 %v58, 30
    %v243 = vpop.permute.xlu0 %242
    %244 = vrot.lane.b32.xlu0 %v60, 30
    %v245 = vpop.permute.xlu0 %244
    %250 = vrot.lane.b32.xlu0 %v53, 30
    %v251 = vpop.permute.xlu0 %250
    %252 = vrot.lane.b32.xlu0 %v55, 30
    %v253 = vpop.permute.xlu0 %252
    %254 = vrot.lane.b32.xlu0 %v57, 30
    %v255 = vpop.permute.xlu0 %254
    %256 = vrot.lane.b32.xlu0 %v59, 30
    %v257 = vpop.permute.xlu0 %256
    %vm258 = vcmask 244736
    %v259 = vsel %vm258, %v251, %v239
    %v260 = vsel %vm258, %v253, %v241
    %v261 = vsel %vm258, %v255, %v243
    %v262 = vsel %vm258, %v257, %v245
    %v271 = vsel %vm258, %v239, %v251
    %v272 = vsel %vm258, %v241, %v253
    %v273 = vsel %vm258, %v243, %v255
    %v274 = vsel %vm258, %v245, %v257
    %vm275 = vcmp.lt.s32.totalorder %v66, 14
    %vm276 = vcmp.lt.s32.totalorder %v67, 14
    %vm277 = vmand %vm123, %vm275
    %vm278 = vmand %vm124, %vm276
    %v279 = vsel %vm277, 1, 0
    %v280 = vsel %vm278, 1, 0
    %vm281 = vcmp.eq.s32.totalorder %v279, 1
    %vm282 = vcmp.eq.s32.totalorder %v280, 1
    %v283 = vsel %vm281, %v271, 0.0
    %v284 = vsel %vm282, %v259, 0.0
    %v285 = vsel %vm281, %v272, 0.0
    %v286 = vsel %vm282, %v260, 0.0
    %v287 = vsel %vm281, %v273, 0.0
    %v288 = vsel %vm282, %v261, 0.0
    %v289 = vsel %vm281, %v274, 0.0
    %v290 = vsel %vm282, %v262, 0.0
    %291 = vset.pattern.permute.xlu0 2
    %292 = vperm.xlu0 %291, %v61
    %v293 = vpop.permute.xlu0 %292
    %295 = vset.pattern.permute.xlu0 2
    %296 = vperm.xlu0 %295, %v62
    %v297 = vpop.permute.xlu0 %296
    %v299 = vmul.f32 %v283, %v293
    %v300 = vmul.f32 %v284, %v293
    %v301 = vmul.f32 %v285, %v297
    %v302 = vmul.f32 %v286, %v297
    %v303 = vmul.f32 %v287, %v293
    %v304 = vmul.f32 %v288, %v293
    %v305 = vmul.f32 %v289, %v297
    %v306 = vmul.f32 %v290, %v297
    %v307 = vadd.f32 %v230, %v299
    %v308 = vadd.f32 %v231, %v300
    %v309 = vadd.f32 %v232, %v301
    %v310 = vadd.f32 %v233, %v302
    %v311 = vadd.f32 %v234, %v303
    %v312 = vadd.f32 %v235, %v304
    %v313 = vadd.f32 %v236, %v305
    %v314 = vadd.f32 %v237, %v306
    %315 = vrot.lane.b32.xlu0 %v54, 2
    %v316 = vpop.permute.xlu0 %315
    %317 = vrot.lane.b32.xlu0 %v56, 2
    %v318 = vpop.permute.xlu0 %317
    %319 = vrot.lane.b32.xlu0 %v58, 2
    %v320 = vpop.permute.xlu0 %319
    %321 = vrot.lane.b32.xlu0 %v60, 2
    %v322 = vpop.permute.xlu0 %321
    %327 = vrot.lane.b32.xlu0 %v53, 2
    %v328 = vpop.permute.xlu0 %327
    %329 = vrot.lane.b32.xlu0 %v55, 2
    %v330 = vpop.permute.xlu0 %329
    %331 = vrot.lane.b32.xlu0 %v57, 2
    %v332 = vpop.permute.xlu0 %331
    %333 = vrot.lane.b32.xlu0 %v59, 2
    %v334 = vpop.permute.xlu0 %333
    %vm335 = vcmask 15360
    %v336 = vsel %vm335, %v328, %v316
    %v337 = vsel %vm335, %v330, %v318
    %v338 = vsel %vm335, %v332, %v320
    %v339 = vsel %vm335, %v334, %v322
    %v348 = vsel %vm335, %v316, %v328
    %v349 = vsel %vm335, %v318, %v330
    %v350 = vsel %vm335, %v320, %v332
    %v351 = vsel %vm335, %v322, %v334
    %v352 = vsel %vm125, 1, 0
    %v353 = vsel %vm126, 1, 0
    %vm354 = vcmp.eq.s32.totalorder %v352, 1
    %vm355 = vcmp.eq.s32.totalorder %v353, 1
    %v356 = vsel %vm354, %v348, 0.0
    %v357 = vsel %vm355, %v336, 0.0
    %v358 = vsel %vm354, %v349, 0.0
    %v359 = vsel %vm355, %v337, 0.0
    %v360 = vsel %vm354, %v350, 0.0
    %v361 = vsel %vm355, %v338, 0.0
    %v362 = vsel %vm354, %v351, 0.0
    %v363 = vsel %vm355, %v339, 0.0
    %364 = vset.pattern.permute.xlu0 3
    %365 = vperm.xlu0 %364, %v61
    %v366 = vpop.permute.xlu0 %365
    %368 = vset.pattern.permute.xlu0 3
    %369 = vperm.xlu0 %368, %v62
    %v370 = vpop.permute.xlu0 %369
    %v372 = vmul.f32 %v356, %v366
    %v373 = vmul.f32 %v357, %v366
    %v374 = vmul.f32 %v358, %v370
    %v375 = vmul.f32 %v359, %v370
    %v376 = vmul.f32 %v360, %v366
    %v377 = vmul.f32 %v361, %v366
    %v378 = vmul.f32 %v362, %v370
    %v379 = vmul.f32 %v363, %v370
    %v380 = vadd.f32 %v307, %v372
    %v381 = vadd.f32 %v308, %v373
    %v382 = vadd.f32 %v309, %v374
    %v383 = vadd.f32 %v310, %v375
    %v384 = vadd.f32 %v311, %v376
    %v385 = vadd.f32 %v312, %v377
    %v386 = vadd.f32 %v313, %v378
    %v387 = vadd.f32 %v314, %v379
    %388 = vset.pattern.permute.xlu0 4
    %389 = vperm.xlu0 %388, %v61
    %v390 = vpop.permute.xlu0 %389
    %392 = vset.pattern.permute.xlu0 4
    %393 = vperm.xlu0 %392, %v62
    %v394 = vpop.permute.xlu0 %393
    %v396 = vmul.f32 %v53, %v390
    %v397 = vmul.f32 %v54, %v390
    %v398 = vmul.f32 %v55, %v394
    %v399 = vmul.f32 %v56, %v394
    %v400 = vmul.f32 %v57, %v390
    %v401 = vmul.f32 %v58, %v390
    %v402 = vmul.f32 %v59, %v394
    %v403 = vmul.f32 %v60, %v394
    %v404 = vadd.f32 %v380, %v396
    %v405 = vadd.f32 %v381, %v397
    %v406 = vadd.f32 %v382, %v398
    %v407 = vadd.f32 %v383, %v399
    %v408 = vadd.f32 %v384, %v400
    %v409 = vadd.f32 %v385, %v401
    %v410 = vadd.f32 %v386, %v402
    %v411 = vadd.f32 %v387, %v403
    %412 = vrot.lane.b32.xlu0 %v53, 126
    %v413 = vpop.permute.xlu0 %412
    %414 = vrot.lane.b32.xlu0 %v54, 126
    %v415 = vpop.permute.xlu0 %414
    %416 = vrot.lane.b32.xlu0 %v55, 126
    %v417 = vpop.permute.xlu0 %416
    %418 = vrot.lane.b32.xlu0 %v56, 126
    %v419 = vpop.permute.xlu0 %418
    %420 = vrot.lane.b32.xlu0 %v57, 126
    %v421 = vpop.permute.xlu0 %420
    %422 = vrot.lane.b32.xlu0 %v58, 126
    %v423 = vpop.permute.xlu0 %422
    %424 = vrot.lane.b32.xlu0 %v59, 126
    %v425 = vpop.permute.xlu0 %424
    %426 = vrot.lane.b32.xlu0 %v60, 126
    %v427 = vpop.permute.xlu0 %426
    %vm428 = vcmask 1031168
    %v429 = vsel %vm428, %v413, %v415
    %v430 = vsel %vm428, %v417, %v419
    %v431 = vsel %vm428, %v421, %v423
    %v432 = vsel %vm428, %v425, %v427
    %v445 = vsel %vm428, %v415, %v413
    %v446 = vsel %vm428, %v419, %v417
    %v447 = vsel %vm428, %v423, %v421
    %v448 = vsel %vm428, %v427, %v425
    %v449 = vsel %vm275, 1, 0
    %v450 = vsel %vm276, 1, 0
    %vm451 = vcmp.eq.s32.totalorder %v449, 1
    %vm452 = vcmp.eq.s32.totalorder %v450, 1
    %v453 = vsel %vm451, %v429, 0.0
    %v454 = vsel %vm452, %v445, 0.0
    %v455 = vsel %vm451, %v430, 0.0
    %v456 = vsel %vm452, %v446, 0.0
    %v457 = vsel %vm451, %v431, 0.0
    %v458 = vsel %vm452, %v447, 0.0
    %v459 = vsel %vm451, %v432, 0.0
    %v460 = vsel %vm452, %v448, 0.0
    %461 = vset.pattern.permute.xlu0 5
    %462 = vperm.xlu0 %461, %v61
    %v463 = vpop.permute.xlu0 %462
    %465 = vset.pattern.permute.xlu0 5
    %466 = vperm.xlu0 %465, %v62
    %v467 = vpop.permute.xlu0 %466
    %v469 = vmul.f32 %v453, %v463
    %v470 = vmul.f32 %v454, %v463
    %v471 = vmul.f32 %v455, %v467
    %v472 = vmul.f32 %v456, %v467
    %v473 = vmul.f32 %v457, %v463
    %v474 = vmul.f32 %v458, %v463
    %v475 = vmul.f32 %v459, %v467
    %v476 = vmul.f32 %v460, %v467
    %v477 = vadd.f32 %v404, %v469
    %v478 = vadd.f32 %v405, %v470
    %v479 = vadd.f32 %v406, %v471
    %v480 = vadd.f32 %v407, %v472
    %v481 = vadd.f32 %v408, %v473
    %v482 = vadd.f32 %v409, %v474
    %v483 = vadd.f32 %v410, %v475
    %v484 = vadd.f32 %v411, %v476
    %485 = vrot.lane.b32.xlu0 %v53, 98
    %v486 = vpop.permute.xlu0 %485
    %487 = vrot.lane.b32.xlu0 %v54, 98
    %v488 = vpop.permute.xlu0 %487
    %489 = vrot.lane.b32.xlu0 %v55, 98
    %v490 = vpop.permute.xlu0 %489
    %491 = vrot.lane.b32.xlu0 %v56, 98
    %v492 = vpop.permute.xlu0 %491
    %493 = vrot.lane.b32.xlu0 %v57, 98
    %v494 = vpop.permute.xlu0 %493
    %495 = vrot.lane.b32.xlu0 %v58, 98
    %v496 = vpop.permute.xlu0 %495
    %497 = vrot.lane.b32.xlu0 %v59, 98
    %v498 = vpop.permute.xlu0 %497
    %499 = vrot.lane.b32.xlu0 %v60, 98
    %v500 = vpop.permute.xlu0 %499
    %vm501 = vcmask 801792
    %v502 = vsel %vm501, %v486, %v488
    %v503 = vsel %vm501, %v490, %v492
    %v504 = vsel %vm501, %v494, %v496
    %v505 = vsel %vm501, %v498, %v500
    %v518 = vsel %vm501, %v488, %v486
    %v519 = vsel %vm501, %v492, %v490
    %v520 = vsel %vm501, %v496, %v494
    %v521 = vsel %vm501, %v500, %v498
    %vm522 = vcmp.lt.s32.totalorder %v64, 224
    %vm523 = vcmp.lt.s32.totalorder %v65, 224
    %vm524 = vmand %vm522, %vm125
    %vm525 = vmand %vm523, %vm126
    %v526 = vsel %vm524, 1, 0
    %v527 = vsel %vm525, 1, 0
    %vm528 = vcmp.eq.s32.totalorder %v526, 1
    %vm529 = vcmp.eq.s32.totalorder %v527, 1
    %v530 = vsel %vm528, %v502, 0.0
    %v531 = vsel %vm529, %v518, 0.0
    %v532 = vsel %vm528, %v503, 0.0
    %v533 = vsel %vm529, %v519, 0.0
    %v534 = vsel %vm528, %v504, 0.0
    %v535 = vsel %vm529, %v520, 0.0
    %v536 = vsel %vm528, %v505, 0.0
    %v537 = vsel %vm529, %v521, 0.0
    %538 = vset.pattern.permute.xlu0 6
    %539 = vperm.xlu0 %538, %v61
    %v540 = vpop.permute.xlu0 %539
    %542 = vset.pattern.permute.xlu0 6
    %543 = vperm.xlu0 %542, %v62
    %v544 = vpop.permute.xlu0 %543
    %v546 = vmul.f32 %v530, %v540
    %v547 = vmul.f32 %v531, %v540
    %v548 = vmul.f32 %v532, %v544
    %v549 = vmul.f32 %v533, %v544
    %v550 = vmul.f32 %v534, %v540
    %v551 = vmul.f32 %v535, %v540
    %v552 = vmul.f32 %v536, %v544
    %v553 = vmul.f32 %v537, %v544
    %v554 = vadd.f32 %v477, %v546
    %v555 = vadd.f32 %v478, %v547
    %v556 = vadd.f32 %v479, %v548
    %v557 = vadd.f32 %v480, %v549
    %v558 = vadd.f32 %v481, %v550
    %v559 = vadd.f32 %v482, %v551
    %v560 = vadd.f32 %v483, %v552
    %v561 = vadd.f32 %v484, %v553
    %562 = vrot.lane.b32.xlu0 %v53, 96
    %v563 = vpop.permute.xlu0 %562
    %564 = vrot.lane.b32.xlu0 %v54, 96
    %v565 = vpop.permute.xlu0 %564
    %566 = vrot.lane.b32.xlu0 %v55, 96
    %v567 = vpop.permute.xlu0 %566
    %568 = vrot.lane.b32.xlu0 %v56, 96
    %v569 = vpop.permute.xlu0 %568
    %570 = vrot.lane.b32.xlu0 %v57, 96
    %v571 = vpop.permute.xlu0 %570
    %572 = vrot.lane.b32.xlu0 %v58, 96
    %v573 = vpop.permute.xlu0 %572
    %574 = vrot.lane.b32.xlu0 %v59, 96
    %v575 = vpop.permute.xlu0 %574
    %576 = vrot.lane.b32.xlu0 %v60, 96
    %v577 = vpop.permute.xlu0 %576
    %vm578 = vcmask 785408
    %v579 = vsel %vm578, %v563, %v565
    %v580 = vsel %vm578, %v567, %v569
    %v581 = vsel %vm578, %v571, %v573
    %v582 = vsel %vm578, %v575, %v577
    %v595 = vsel %vm578, %v565, %v563
    %v596 = vsel %vm578, %v569, %v567
    %v597 = vsel %vm578, %v573, %v571
    %v598 = vsel %vm578, %v577, %v575
    %v599 = vsel %vm522, 1, 0
    %v600 = vsel %vm523, 1, 0
    %vm601 = vcmp.eq.s32.totalorder %v599, 1
    %vm602 = vcmp.eq.s32.totalorder %v600, 1
    %v603 = vsel %vm601, %v579, 0.0
    %v604 = vsel %vm602, %v595, 0.0
    %v605 = vsel %vm601, %v580, 0.0
    %v606 = vsel %vm602, %v596, 0.0
    %v607 = vsel %vm601, %v581, 0.0
    %v608 = vsel %vm602, %v597, 0.0
    %v609 = vsel %vm601, %v582, 0.0
    %v610 = vsel %vm602, %v598, 0.0
    %611 = vset.pattern.permute.xlu0 7
    %612 = vperm.xlu0 %611, %v61
    %v613 = vpop.permute.xlu0 %612
    %615 = vset.pattern.permute.xlu0 7
    %616 = vperm.xlu0 %615, %v62
    %v617 = vpop.permute.xlu0 %616
    %v619 = vmul.f32 %v603, %v613
    %v620 = vmul.f32 %v604, %v613
    %v621 = vmul.f32 %v605, %v617
    %v622 = vmul.f32 %v606, %v617
    %v623 = vmul.f32 %v607, %v613
    %v624 = vmul.f32 %v608, %v613
    %v625 = vmul.f32 %v609, %v617
    %v626 = vmul.f32 %v610, %v617
    %v627 = vadd.f32 %v554, %v619
    %v628 = vadd.f32 %v555, %v620
    %v629 = vadd.f32 %v556, %v621
    %v630 = vadd.f32 %v557, %v622
    %v631 = vadd.f32 %v558, %v623
    %v632 = vadd.f32 %v559, %v624
    %v633 = vadd.f32 %v560, %v625
    %v634 = vadd.f32 %v561, %v626
    %635 = vrot.lane.b32.xlu0 %v53, 94
    %v636 = vpop.permute.xlu0 %635
    %637 = vrot.lane.b32.xlu0 %v54, 94
    %v638 = vpop.permute.xlu0 %637
    %639 = vrot.lane.b32.xlu0 %v55, 94
    %v640 = vpop.permute.xlu0 %639
    %641 = vrot.lane.b32.xlu0 %v56, 94
    %v642 = vpop.permute.xlu0 %641
    %643 = vrot.lane.b32.xlu0 %v57, 94
    %v644 = vpop.permute.xlu0 %643
    %645 = vrot.lane.b32.xlu0 %v58, 94
    %v646 = vpop.permute.xlu0 %645
    %647 = vrot.lane.b32.xlu0 %v59, 94
    %v648 = vpop.permute.xlu0 %647
    %649 = vrot.lane.b32.xlu0 %v60, 94
    %v650 = vpop.permute.xlu0 %649
    %vm651 = vcmask 769024
    %v652 = vsel %vm651, %v636, %v638
    %v653 = vsel %vm651, %v640, %v642
    %v654 = vsel %vm651, %v644, %v646
    %v655 = vsel %vm651, %v648, %v650
    %v668 = vsel %vm651, %v638, %v636
    %v669 = vsel %vm651, %v642, %v640
    %v670 = vsel %vm651, %v646, %v644
    %v671 = vsel %vm651, %v650, %v648
    %vm672 = vmand %vm522, %vm275
    %vm673 = vmand %vm523, %vm276
    %v674 = vsel %vm672, 1, 0
    %v675 = vsel %vm673, 1, 0
    %vm676 = vcmp.eq.s32.totalorder %v674, 1
    %vm677 = vcmp.eq.s32.totalorder %v675, 1
    %v678 = vsel %vm676, %v652, 0.0
    %v679 = vsel %vm677, %v668, 0.0
    %v680 = vsel %vm676, %v653, 0.0
    %v681 = vsel %vm677, %v669, 0.0
    %v682 = vsel %vm676, %v654, 0.0
    %v683 = vsel %vm677, %v670, 0.0
    %v684 = vsel %vm676, %v655, 0.0
    %v685 = vsel %vm677, %v671, 0.0
    %686 = vset.pattern.permute.xlu0 8
    %687 = vperm.xlu0 %686, %v61
    %v688 = vpop.permute.xlu0 %687
    %690 = vset.pattern.permute.xlu0 8
    %691 = vperm.xlu0 %690, %v62
    %v692 = vpop.permute.xlu0 %691
    %v694 = vmul.f32 %v678, %v688
    %v695 = vmul.f32 %v679, %v688
    %v696 = vmul.f32 %v680, %v692
    %v697 = vmul.f32 %v681, %v692
    %v698 = vmul.f32 %v682, %v688
    %v699 = vmul.f32 %v683, %v688
    %v700 = vmul.f32 %v684, %v692
    %v701 = vmul.f32 %v685, %v692
    %v702 = vadd.f32 %v627, %v694
    %v703 = vadd.f32 %v628, %v695
    %v704 = vadd.f32 %v629, %v696
    %v705 = vadd.f32 %v630, %v697
    %v706 = vadd.f32 %v631, %v698
    %v707 = vadd.f32 %v632, %v699
    %v708 = vadd.f32 %v633, %v700
    %v709 = vadd.f32 %v634, %v701
    %710 = vrot.lane.b32.xlu0 %v54, 5
    %v711 = vpop.permute.xlu0 %710
    %712 = vrot.lane.b32.xlu0 %v56, 5
    %v713 = vpop.permute.xlu0 %712
    %714 = vrot.lane.b32.xlu0 %v58, 5
    %v715 = vpop.permute.xlu0 %714
    %716 = vrot.lane.b32.xlu0 %v60, 5
    %v717 = vpop.permute.xlu0 %716
    %722 = vrot.lane.b32.xlu0 %v53, 5
    %v723 = vpop.permute.xlu0 %722
    %724 = vrot.lane.b32.xlu0 %v55, 5
    %v725 = vpop.permute.xlu0 %724
    %726 = vrot.lane.b32.xlu0 %v57, 5
    %v727 = vpop.permute.xlu0 %726
    %728 = vrot.lane.b32.xlu0 %v59, 5
    %v729 = vpop.permute.xlu0 %728
    %vm730 = vcmask 39936
    %v731 = vsel %vm730, %v723, %v711
    %v732 = vsel %vm730, %v725, %v713
    %v733 = vsel %vm730, %v727, %v715
    %v734 = vsel %vm730, %v729, %v717
    %v743 = vsel %vm730, %v711, %v723
    %v744 = vsel %vm730, %v713, %v725
    %v745 = vsel %vm730, %v715, %v727
    %v746 = vsel %vm730, %v717, %v729
    %vm747 = vcmp.ge.s32.totalorder %v66, 5
    %vm748 = vcmp.ge.s32.totalorder %v67, 5
    %v749 = vsel %vm747, 1, 0
    %v750 = vsel %vm748, 1, 0
    %vm751 = vcmp.eq.s32.totalorder %v749, 1
    %vm752 = vcmp.eq.s32.totalorder %v750, 1
    %v753 = vsel %vm751, %v743, 0.0
    %v754 = vsel %vm752, %v731, 0.0
    %v755 = vsel %vm751, %v744, 0.0
    %v756 = vsel %vm752, %v732, 0.0
    %v757 = vsel %vm751, %v745, 0.0
    %v758 = vsel %vm752, %v733, 0.0
    %v759 = vsel %vm751, %v746, 0.0
    %v760 = vsel %vm752, %v734, 0.0
    %761 = vset.pattern.permute.xlu0 9
    %762 = vperm.xlu0 %761, %v61
    %v763 = vpop.permute.xlu0 %762
    %765 = vset.pattern.permute.xlu0 9
    %766 = vperm.xlu0 %765, %v62
    %v767 = vpop.permute.xlu0 %766
    %v769 = vmul.f32 %v753, %v763
    %v770 = vmul.f32 %v754, %v763
    %v771 = vmul.f32 %v755, %v767
    %v772 = vmul.f32 %v756, %v767
    %v773 = vmul.f32 %v757, %v763
    %v774 = vmul.f32 %v758, %v763
    %v775 = vmul.f32 %v759, %v767
    %v776 = vmul.f32 %v760, %v767
    %v777 = vadd.f32 %v702, %v769
    %v778 = vadd.f32 %v703, %v770
    %v779 = vadd.f32 %v704, %v771
    %v780 = vadd.f32 %v705, %v772
    %v781 = vadd.f32 %v706, %v773
    %v782 = vadd.f32 %v707, %v774
    %v783 = vadd.f32 %v708, %v775
    %v784 = vadd.f32 %v709, %v776
    %785 = vrot.lane.b32.xlu0 %v54, 4
    %v786 = vpop.permute.xlu0 %785
    %787 = vrot.lane.b32.xlu0 %v56, 4
    %v788 = vpop.permute.xlu0 %787
    %789 = vrot.lane.b32.xlu0 %v58, 4
    %v790 = vpop.permute.xlu0 %789
    %791 = vrot.lane.b32.xlu0 %v60, 4
    %v792 = vpop.permute.xlu0 %791
    %797 = vrot.lane.b32.xlu0 %v53, 4
    %v798 = vpop.permute.xlu0 %797
    %799 = vrot.lane.b32.xlu0 %v55, 4
    %v800 = vpop.permute.xlu0 %799
    %801 = vrot.lane.b32.xlu0 %v57, 4
    %v802 = vpop.permute.xlu0 %801
    %803 = vrot.lane.b32.xlu0 %v59, 4
    %v804 = vpop.permute.xlu0 %803
    %vm805 = vcmask 31744
    %v806 = vsel %vm805, %v798, %v786
    %v807 = vsel %vm805, %v800, %v788
    %v808 = vsel %vm805, %v802, %v790
    %v809 = vsel %vm805, %v804, %v792
    %v818 = vsel %vm805, %v786, %v798
    %v819 = vsel %vm805, %v788, %v800
    %v820 = vsel %vm805, %v790, %v802
    %v821 = vsel %vm805, %v792, %v804
    %vm822 = vcmp.ge.s32.totalorder %v66, 4
    %vm823 = vcmp.ge.s32.totalorder %v67, 4
    %v824 = vsel %vm822, 1, 0
    %v825 = vsel %vm823, 1, 0
    %vm826 = vcmp.eq.s32.totalorder %v824, 1
    %vm827 = vcmp.eq.s32.totalorder %v825, 1
    %v828 = vsel %vm826, %v818, 0.0
    %v829 = vsel %vm827, %v806, 0.0
    %v830 = vsel %vm826, %v819, 0.0
    %v831 = vsel %vm827, %v807, 0.0
    %v832 = vsel %vm826, %v820, 0.0
    %v833 = vsel %vm827, %v808, 0.0
    %v834 = vsel %vm826, %v821, 0.0
    %v835 = vsel %vm827, %v809, 0.0
    %836 = vset.pattern.permute.xlu0 10
    %837 = vperm.xlu0 %836, %v61
    %v838 = vpop.permute.xlu0 %837
    %840 = vset.pattern.permute.xlu0 10
    %841 = vperm.xlu0 %840, %v62
    %v842 = vpop.permute.xlu0 %841
    %v844 = vmul.f32 %v828, %v838
    %v845 = vmul.f32 %v829, %v838
    %v846 = vmul.f32 %v830, %v842
    %v847 = vmul.f32 %v831, %v842
    %v848 = vmul.f32 %v832, %v838
    %v849 = vmul.f32 %v833, %v838
    %v850 = vmul.f32 %v834, %v842
    %v851 = vmul.f32 %v835, %v842
    %v852 = vadd.f32 %v777, %v844
    %v853 = vadd.f32 %v778, %v845
    %v854 = vadd.f32 %v779, %v846
    %v855 = vadd.f32 %v780, %v847
    %v856 = vadd.f32 %v781, %v848
    %v857 = vadd.f32 %v782, %v849
    %v858 = vadd.f32 %v783, %v850
    %v859 = vadd.f32 %v784, %v851
    %860 = vrot.lane.b32.xlu0 %v54, 3
    %v861 = vpop.permute.xlu0 %860
    %862 = vrot.lane.b32.xlu0 %v56, 3
    %v863 = vpop.permute.xlu0 %862
    %864 = vrot.lane.b32.xlu0 %v58, 3
    %v865 = vpop.permute.xlu0 %864
    %866 = vrot.lane.b32.xlu0 %v60, 3
    %v867 = vpop.permute.xlu0 %866
    %872 = vrot.lane.b32.xlu0 %v53, 3
    %v873 = vpop.permute.xlu0 %872
    %874 = vrot.lane.b32.xlu0 %v55, 3
    %v875 = vpop.permute.xlu0 %874
    %876 = vrot.lane.b32.xlu0 %v57, 3
    %v877 = vpop.permute.xlu0 %876
    %878 = vrot.lane.b32.xlu0 %v59, 3
    %v879 = vpop.permute.xlu0 %878
    %vm880 = vcmask 23552
    %v881 = vsel %vm880, %v873, %v861
    %v882 = vsel %vm880, %v875, %v863
    %v883 = vsel %vm880, %v877, %v865
    %v884 = vsel %vm880, %v879, %v867
    %v893 = vsel %vm880, %v861, %v873
    %v894 = vsel %vm880, %v863, %v875
    %v895 = vsel %vm880, %v865, %v877
    %v896 = vsel %vm880, %v867, %v879
    %vm897 = vcmp.ge.s32.totalorder %v66, 3
    %vm898 = vcmp.ge.s32.totalorder %v67, 3
    %v899 = vsel %vm897, 1, 0
    %v900 = vsel %vm898, 1, 0
    %vm901 = vcmp.eq.s32.totalorder %v899, 1
    %vm902 = vcmp.eq.s32.totalorder %v900, 1
    %v903 = vsel %vm901, %v893, 0.0
    %v904 = vsel %vm902, %v881, 0.0
    %v905 = vsel %vm901, %v894, 0.0
    %v906 = vsel %vm902, %v882, 0.0
    %v907 = vsel %vm901, %v895, 0.0
    %v908 = vsel %vm902, %v883, 0.0
    %v909 = vsel %vm901, %v896, 0.0
    %v910 = vsel %vm902, %v884, 0.0
    %911 = vset.pattern.permute.xlu0 11
    %912 = vperm.xlu0 %911, %v61
    %v913 = vpop.permute.xlu0 %912
    %915 = vset.pattern.permute.xlu0 11
    %916 = vperm.xlu0 %915, %v62
    %v917 = vpop.permute.xlu0 %916
    %v919 = vmul.f32 %v903, %v913
    %v920 = vmul.f32 %v904, %v913
    %v921 = vmul.f32 %v905, %v917
    %v922 = vmul.f32 %v906, %v917
    %v923 = vmul.f32 %v907, %v913
    %v924 = vmul.f32 %v908, %v913
    %v925 = vmul.f32 %v909, %v917
    %v926 = vmul.f32 %v910, %v917
    %v927 = vadd.f32 %v852, %v919
    %v928 = vadd.f32 %v853, %v920
    %v929 = vadd.f32 %v854, %v921
    %v930 = vadd.f32 %v855, %v922
    %v931 = vadd.f32 %v856, %v923
    %v932 = vadd.f32 %v857, %v924
    %v933 = vadd.f32 %v858, %v925
    %v934 = vadd.f32 %v859, %v926
    %935 = vrot.lane.b32.xlu0 %v54, 1
    %v936 = vpop.permute.xlu0 %935
    %937 = vrot.lane.b32.xlu0 %v56, 1
    %v938 = vpop.permute.xlu0 %937
    %939 = vrot.lane.b32.xlu0 %v58, 1
    %v940 = vpop.permute.xlu0 %939
    %941 = vrot.lane.b32.xlu0 %v60, 1
    %v942 = vpop.permute.xlu0 %941
    %947 = vrot.lane.b32.xlu0 %v53, 1
    %v948 = vpop.permute.xlu0 %947
    %949 = vrot.lane.b32.xlu0 %v55, 1
    %v950 = vpop.permute.xlu0 %949
    %951 = vrot.lane.b32.xlu0 %v57, 1
    %v952 = vpop.permute.xlu0 %951
    %953 = vrot.lane.b32.xlu0 %v59, 1
    %v954 = vpop.permute.xlu0 %953
    %vm955 = vcmask 7168
    %v956 = vsel %vm955, %v948, %v936
    %v957 = vsel %vm955, %v950, %v938
    %v958 = vsel %vm955, %v952, %v940
    %v959 = vsel %vm955, %v954, %v942
    %v968 = vsel %vm955, %v936, %v948
    %v969 = vsel %vm955, %v938, %v950
    %v970 = vsel %vm955, %v940, %v952
    %v971 = vsel %vm955, %v942, %v954
    %vm972 = vcmp.ge.s32.totalorder %v66, 1
    %vm973 = vcmp.ge.s32.totalorder %v67, 1
    %v974 = vsel %vm972, 1, 0
    %v975 = vsel %vm973, 1, 0
    %vm976 = vcmp.eq.s32.totalorder %v974, 1
    %vm977 = vcmp.eq.s32.totalorder %v975, 1
    %v978 = vsel %vm976, %v968, 0.0
    %v979 = vsel %vm977, %v956, 0.0
    %v980 = vsel %vm976, %v969, 0.0
    %v981 = vsel %vm977, %v957, 0.0
    %v982 = vsel %vm976, %v970, 0.0
    %v983 = vsel %vm977, %v958, 0.0
    %v984 = vsel %vm976, %v971, 0.0
    %v985 = vsel %vm977, %v959, 0.0
    %986 = vset.pattern.permute.xlu0 12
    %987 = vperm.xlu0 %986, %v61
    %v988 = vpop.permute.xlu0 %987
    %990 = vset.pattern.permute.xlu0 12
    %991 = vperm.xlu0 %990, %v62
    %v992 = vpop.permute.xlu0 %991
    %v994 = vmul.f32 %v978, %v988
    %v995 = vmul.f32 %v979, %v988
    %v996 = vmul.f32 %v980, %v992
    %v997 = vmul.f32 %v981, %v992
    %v998 = vmul.f32 %v982, %v988
    %v999 = vmul.f32 %v983, %v988
    %v1000 = vmul.f32 %v984, %v992
    %v1001 = vmul.f32 %v985, %v992
    %v1002 = vadd.f32 %v927, %v994
    %v1003 = vadd.f32 %v928, %v995
    %v1004 = vadd.f32 %v929, %v996
    %v1005 = vadd.f32 %v930, %v997
    %v1006 = vadd.f32 %v931, %v998
    %v1007 = vadd.f32 %v932, %v999
    %v1008 = vadd.f32 %v933, %v1000
    %v1009 = vadd.f32 %v934, %v1001
    %1010 = vrot.lane.b32.xlu0 %v53, 127
    %v1011 = vpop.permute.xlu0 %1010
    %1012 = vrot.lane.b32.xlu0 %v54, 127
    %v1013 = vpop.permute.xlu0 %1012
    %1014 = vrot.lane.b32.xlu0 %v55, 127
    %v1015 = vpop.permute.xlu0 %1014
    %1016 = vrot.lane.b32.xlu0 %v56, 127
    %v1017 = vpop.permute.xlu0 %1016
    %1018 = vrot.lane.b32.xlu0 %v57, 127
    %v1019 = vpop.permute.xlu0 %1018
    %1020 = vrot.lane.b32.xlu0 %v58, 127
    %v1021 = vpop.permute.xlu0 %1020
    %1022 = vrot.lane.b32.xlu0 %v59, 127
    %v1023 = vpop.permute.xlu0 %1022
    %1024 = vrot.lane.b32.xlu0 %v60, 127
    %v1025 = vpop.permute.xlu0 %1024
    %vm1026 = vcmask 1039360
    %v1027 = vsel %vm1026, %v1011, %v1013
    %v1028 = vsel %vm1026, %v1015, %v1017
    %v1029 = vsel %vm1026, %v1019, %v1021
    %v1030 = vsel %vm1026, %v1023, %v1025
    %v1043 = vsel %vm1026, %v1013, %v1011
    %v1044 = vsel %vm1026, %v1017, %v1015
    %v1045 = vsel %vm1026, %v1021, %v1019
    %v1046 = vsel %vm1026, %v1025, %v1023
    %vm1047 = vcmp.lt.s32.totalorder %v66, 15
    %vm1048 = vcmp.lt.s32.totalorder %v67, 15
    %v1049 = vsel %vm1047, 1, 0
    %v1050 = vsel %vm1048, 1, 0
    %vm1051 = vcmp.eq.s32.totalorder %v1049, 1
    %vm1052 = vcmp.eq.s32.totalorder %v1050, 1
    %v1053 = vsel %vm1051, %v1027, 0.0
    %v1054 = vsel %vm1052, %v1043, 0.0
    %v1055 = vsel %vm1051, %v1028, 0.0
    %v1056 = vsel %vm1052, %v1044, 0.0
    %v1057 = vsel %vm1051, %v1029, 0.0
    %v1058 = vsel %vm1052, %v1045, 0.0
    %v1059 = vsel %vm1051, %v1030, 0.0
    %v1060 = vsel %vm1052, %v1046, 0.0
    %1061 = vset.pattern.permute.xlu0 13
    %1062 = vperm.xlu0 %1061, %v61
    %v1063 = vpop.permute.xlu0 %1062
    %1065 = vset.pattern.permute.xlu0 13
    %1066 = vperm.xlu0 %1065, %v62
    %v1067 = vpop.permute.xlu0 %1066
    %v1069 = vmul.f32 %v1053, %v1063
    %v1070 = vmul.f32 %v1054, %v1063
    %v1071 = vmul.f32 %v1055, %v1067
    %v1072 = vmul.f32 %v1056, %v1067
    %v1073 = vmul.f32 %v1057, %v1063
    %v1074 = vmul.f32 %v1058, %v1063
    %v1075 = vmul.f32 %v1059, %v1067
    %v1076 = vmul.f32 %v1060, %v1067
    %v1077 = vadd.f32 %v1002, %v1069
    %v1078 = vadd.f32 %v1003, %v1070
    %v1079 = vadd.f32 %v1004, %v1071
    %v1080 = vadd.f32 %v1005, %v1072
    %v1081 = vadd.f32 %v1006, %v1073
    %v1082 = vadd.f32 %v1007, %v1074
    %v1083 = vadd.f32 %v1008, %v1075
    %v1084 = vadd.f32 %v1009, %v1076
    %1085 = vrot.lane.b32.xlu0 %v53, 125
    %v1086 = vpop.permute.xlu0 %1085
    %1087 = vrot.lane.b32.xlu0 %v54, 125
    %v1088 = vpop.permute.xlu0 %1087
    %1089 = vrot.lane.b32.xlu0 %v55, 125
    %v1090 = vpop.permute.xlu0 %1089
    %1091 = vrot.lane.b32.xlu0 %v56, 125
    %v1092 = vpop.permute.xlu0 %1091
    %1093 = vrot.lane.b32.xlu0 %v57, 125
    %v1094 = vpop.permute.xlu0 %1093
    %1095 = vrot.lane.b32.xlu0 %v58, 125
    %v1096 = vpop.permute.xlu0 %1095
    %1097 = vrot.lane.b32.xlu0 %v59, 125
    %v1098 = vpop.permute.xlu0 %1097
    %1099 = vrot.lane.b32.xlu0 %v60, 125
    %v1100 = vpop.permute.xlu0 %1099
    %vm1101 = vcmask 1022976
    %v1102 = vsel %vm1101, %v1086, %v1088
    %v1103 = vsel %vm1101, %v1090, %v1092
    %v1104 = vsel %vm1101, %v1094, %v1096
    %v1105 = vsel %vm1101, %v1098, %v1100
    %v1118 = vsel %vm1101, %v1088, %v1086
    %v1119 = vsel %vm1101, %v1092, %v1090
    %v1120 = vsel %vm1101, %v1096, %v1094
    %v1121 = vsel %vm1101, %v1100, %v1098
    %vm1122 = vcmp.lt.s32.totalorder %v66, 13
    %vm1123 = vcmp.lt.s32.totalorder %v67, 13
    %v1124 = vsel %vm1122, 1, 0
    %v1125 = vsel %vm1123, 1, 0
    %vm1126 = vcmp.eq.s32.totalorder %v1124, 1
    %vm1127 = vcmp.eq.s32.totalorder %v1125, 1
    %v1128 = vsel %vm1126, %v1102, 0.0
    %v1129 = vsel %vm1127, %v1118, 0.0
    %v1130 = vsel %vm1126, %v1103, 0.0
    %v1131 = vsel %vm1127, %v1119, 0.0
    %v1132 = vsel %vm1126, %v1104, 0.0
    %v1133 = vsel %vm1127, %v1120, 0.0
    %v1134 = vsel %vm1126, %v1105, 0.0
    %v1135 = vsel %vm1127, %v1121, 0.0
    %1136 = vset.pattern.permute.xlu0 14
    %1137 = vperm.xlu0 %1136, %v61
    %v1138 = vpop.permute.xlu0 %1137
    %1140 = vset.pattern.permute.xlu0 14
    %1141 = vperm.xlu0 %1140, %v62
    %v1142 = vpop.permute.xlu0 %1141
    %v1144 = vmul.f32 %v1128, %v1138
    %v1145 = vmul.f32 %v1129, %v1138
    %v1146 = vmul.f32 %v1130, %v1142
    %v1147 = vmul.f32 %v1131, %v1142
    %v1148 = vmul.f32 %v1132, %v1138
    %v1149 = vmul.f32 %v1133, %v1138
    %v1150 = vmul.f32 %v1134, %v1142
    %v1151 = vmul.f32 %v1135, %v1142
    %v1152 = vadd.f32 %v1077, %v1144
    %v1153 = vadd.f32 %v1078, %v1145
    %v1154 = vadd.f32 %v1079, %v1146
    %v1155 = vadd.f32 %v1080, %v1147
    %v1156 = vadd.f32 %v1081, %v1148
    %v1157 = vadd.f32 %v1082, %v1149
    %v1158 = vadd.f32 %v1083, %v1150
    %v1159 = vadd.f32 %v1084, %v1151
    %1160 = vrot.lane.b32.xlu0 %v53, 124
    %v1161 = vpop.permute.xlu0 %1160
    %1162 = vrot.lane.b32.xlu0 %v54, 124
    %v1163 = vpop.permute.xlu0 %1162
    %1164 = vrot.lane.b32.xlu0 %v55, 124
    %v1165 = vpop.permute.xlu0 %1164
    %1166 = vrot.lane.b32.xlu0 %v56, 124
    %v1167 = vpop.permute.xlu0 %1166
    %1168 = vrot.lane.b32.xlu0 %v57, 124
    %v1169 = vpop.permute.xlu0 %1168
    %1170 = vrot.lane.b32.xlu0 %v58, 124
    %v1171 = vpop.permute.xlu0 %1170
    %1172 = vrot.lane.b32.xlu0 %v59, 124
    %v1173 = vpop.permute.xlu0 %1172
    %1174 = vrot.lane.b32.xlu0 %v60, 124
    %v1175 = vpop.permute.xlu0 %1174
    %vm1176 = vcmask 1014784
    %v1177 = vsel %vm1176, %v1161, %v1163
    %v1178 = vsel %vm1176, %v1165, %v1167
    %v1179 = vsel %vm1176, %v1169, %v1171
    %v1180 = vsel %vm1176, %v1173, %v1175
    %v1193 = vsel %vm1176, %v1163, %v1161
    %v1194 = vsel %vm1176, %v1167, %v1165
    %v1195 = vsel %vm1176, %v1171, %v1169
    %v1196 = vsel %vm1176, %v1175, %v1173
    %vm1197 = vcmp.lt.s32.totalorder %v66, 12
    %vm1198 = vcmp.lt.s32.totalorder %v67, 12
    %v1199 = vsel %vm1197, 1, 0
    %v1200 = vsel %vm1198, 1, 0
    %vm1201 = vcmp.eq.s32.totalorder %v1199, 1
    %vm1202 = vcmp.eq.s32.totalorder %v1200, 1
    %v1203 = vsel %vm1201, %v1177, 0.0
    %v1204 = vsel %vm1202, %v1193, 0.0
    %v1205 = vsel %vm1201, %v1178, 0.0
    %v1206 = vsel %vm1202, %v1194, 0.0
    %v1207 = vsel %vm1201, %v1179, 0.0
    %v1208 = vsel %vm1202, %v1195, 0.0
    %v1209 = vsel %vm1201, %v1180, 0.0
    %v1210 = vsel %vm1202, %v1196, 0.0
    %1211 = vset.pattern.permute.xlu0 15
    %1212 = vperm.xlu0 %1211, %v61
    %v1213 = vpop.permute.xlu0 %1212
    %1215 = vset.pattern.permute.xlu0 15
    %1216 = vperm.xlu0 %1215, %v62
    %v1217 = vpop.permute.xlu0 %1216
    %v1219 = vmul.f32 %v1203, %v1213
    %v1220 = vmul.f32 %v1204, %v1213
    %v1221 = vmul.f32 %v1205, %v1217
    %v1222 = vmul.f32 %v1206, %v1217
    %v1223 = vmul.f32 %v1207, %v1213
    %v1224 = vmul.f32 %v1208, %v1213
    %v1225 = vmul.f32 %v1209, %v1217
    %v1226 = vmul.f32 %v1210, %v1217
    %v1227 = vadd.f32 %v1152, %v1219
    %v1228 = vadd.f32 %v1153, %v1220
    %v1229 = vadd.f32 %v1154, %v1221
    %v1230 = vadd.f32 %v1155, %v1222
    %v1231 = vadd.f32 %v1156, %v1223
    %v1232 = vadd.f32 %v1157, %v1224
    %v1233 = vadd.f32 %v1158, %v1225
    %v1234 = vadd.f32 %v1159, %v1226
    %1235 = vrot.lane.b32.xlu0 %v53, 123
    %v1236 = vpop.permute.xlu0 %1235
    %1237 = vrot.lane.b32.xlu0 %v54, 123
    %v1238 = vpop.permute.xlu0 %1237
    %1239 = vrot.lane.b32.xlu0 %v55, 123
    %v1240 = vpop.permute.xlu0 %1239
    %1241 = vrot.lane.b32.xlu0 %v56, 123
    %v1242 = vpop.permute.xlu0 %1241
    %1243 = vrot.lane.b32.xlu0 %v57, 123
    %v1244 = vpop.permute.xlu0 %1243
    %1245 = vrot.lane.b32.xlu0 %v58, 123
    %v1246 = vpop.permute.xlu0 %1245
    %1247 = vrot.lane.b32.xlu0 %v59, 123
    %v1248 = vpop.permute.xlu0 %1247
    %1249 = vrot.lane.b32.xlu0 %v60, 123
    %v1250 = vpop.permute.xlu0 %1249
    %vm1251 = vcmask 1006592
    %v1252 = vsel %vm1251, %v1236, %v1238
    %v1253 = vsel %vm1251, %v1240, %v1242
    %v1254 = vsel %vm1251, %v1244, %v1246
    %v1255 = vsel %vm1251, %v1248, %v1250
    %v1268 = vsel %vm1251, %v1238, %v1236
    %v1269 = vsel %vm1251, %v1242, %v1240
    %v1270 = vsel %vm1251, %v1246, %v1244
    %v1271 = vsel %vm1251, %v1250, %v1248
    %vm1272 = vcmp.lt.s32.totalorder %v66, 11
    %vm1273 = vcmp.lt.s32.totalorder %v67, 11
    %v1274 = vsel %vm1272, 1, 0
    %v1275 = vsel %vm1273, 1, 0
    %vm1276 = vcmp.eq.s32.totalorder %v1274, 1
    %vm1277 = vcmp.eq.s32.totalorder %v1275, 1
    %v1278 = vsel %vm1276, %v1252, 0.0
    %v1279 = vsel %vm1277, %v1268, 0.0
    %v1280 = vsel %vm1276, %v1253, 0.0
    %v1281 = vsel %vm1277, %v1269, 0.0
    %v1282 = vsel %vm1276, %v1254, 0.0
    %v1283 = vsel %vm1277, %v1270, 0.0
    %v1284 = vsel %vm1276, %v1255, 0.0
    %v1285 = vsel %vm1277, %v1271, 0.0
    %1286 = vset.pattern.permute.xlu0 16
    %1287 = vperm.xlu0 %1286, %v61
    %v1288 = vpop.permute.xlu0 %1287
    %1290 = vset.pattern.permute.xlu0 16
    %1291 = vperm.xlu0 %1290, %v62
    %v1292 = vpop.permute.xlu0 %1291
    %v1294 = vmul.f32 %v1278, %v1288
    %v1295 = vmul.f32 %v1279, %v1288
    %v1296 = vmul.f32 %v1280, %v1292
    %v1297 = vmul.f32 %v1281, %v1292
    %v1298 = vmul.f32 %v1282, %v1288
    %v1299 = vmul.f32 %v1283, %v1288
    %v1300 = vmul.f32 %v1284, %v1292
    %v1301 = vmul.f32 %v1285, %v1292
    %v1302 = vadd.f32 %v1227, %v1294
    %v1303 = vadd.f32 %v1228, %v1295
    %v1304 = vadd.f32 %v1229, %v1296
    %v1305 = vadd.f32 %v1230, %v1297
    %v1306 = vadd.f32 %v1231, %v1298
    %v1307 = vadd.f32 %v1232, %v1299
    %v1308 = vadd.f32 %v1233, %v1300
    %v1309 = vadd.f32 %v1234, %v1301
    %1310 = vrot.lane.b32.xlu0 %v54, 80
    %v1311 = vpop.permute.xlu0 %1310
    %1312 = vrot.lane.b32.xlu0 %v56, 80
    %v1313 = vpop.permute.xlu0 %1312
    %1314 = vrot.lane.b32.xlu0 %v58, 80
    %v1315 = vpop.permute.xlu0 %1314
    %1316 = vrot.lane.b32.xlu0 %v60, 80
    %v1317 = vpop.permute.xlu0 %1316
    %1322 = vrot.lane.b32.xlu0 %v53, 80
    %v1323 = vpop.permute.xlu0 %1322
    %1324 = vrot.lane.b32.xlu0 %v55, 80
    %v1325 = vpop.permute.xlu0 %1324
    %1326 = vrot.lane.b32.xlu0 %v57, 80
    %v1327 = vpop.permute.xlu0 %1326
    %1328 = vrot.lane.b32.xlu0 %v59, 80
    %v1329 = vpop.permute.xlu0 %1328
    %vm1330 = vcmask 654336
    %v1331 = vsel %vm1330, %v1323, %v1311
    %v1332 = vsel %vm1330, %v1325, %v1313
    %v1333 = vsel %vm1330, %v1327, %v1315
    %v1334 = vsel %vm1330, %v1329, %v1317
    %v1343 = vsel %vm1330, %v1311, %v1323
    %v1344 = vsel %vm1330, %v1313, %v1325
    %v1345 = vsel %vm1330, %v1315, %v1327
    %v1346 = vsel %vm1330, %v1317, %v1329
    %vm1347 = vcmp.ge.s32.totalorder %v64, 80
    %vm1348 = vcmp.ge.s32.totalorder %v65, 80
    %v1349 = vsel %vm1347, 1, 0
    %v1350 = vsel %vm1348, 1, 0
    %vm1351 = vcmp.eq.s32.totalorder %v1349, 1
    %vm1352 = vcmp.eq.s32.totalorder %v1350, 1
    %v1353 = vsel %vm1351, %v1343, 0.0
    %v1354 = vsel %vm1352, %v1331, 0.0
    %v1355 = vsel %vm1351, %v1344, 0.0
    %v1356 = vsel %vm1352, %v1332, 0.0
    %v1357 = vsel %vm1351, %v1345, 0.0
    %v1358 = vsel %vm1352, %v1333, 0.0
    %v1359 = vsel %vm1351, %v1346, 0.0
    %v1360 = vsel %vm1352, %v1334, 0.0
    %1361 = vset.pattern.permute.xlu0 17
    %1362 = vperm.xlu0 %1361, %v61
    %v1363 = vpop.permute.xlu0 %1362
    %1365 = vset.pattern.permute.xlu0 17
    %1366 = vperm.xlu0 %1365, %v62
    %v1367 = vpop.permute.xlu0 %1366
    %v1369 = vmul.f32 %v1353, %v1363
    %v1370 = vmul.f32 %v1354, %v1363
    %v1371 = vmul.f32 %v1355, %v1367
    %v1372 = vmul.f32 %v1356, %v1367
    %v1373 = vmul.f32 %v1357, %v1363
    %v1374 = vmul.f32 %v1358, %v1363
    %v1375 = vmul.f32 %v1359, %v1367
    %v1376 = vmul.f32 %v1360, %v1367
    %v1377 = vadd.f32 %v1302, %v1369
    %v1378 = vadd.f32 %v1303, %v1370
    %v1379 = vadd.f32 %v1304, %v1371
    %v1380 = vadd.f32 %v1305, %v1372
    %v1381 = vadd.f32 %v1306, %v1373
    %v1382 = vadd.f32 %v1307, %v1374
    %v1383 = vadd.f32 %v1308, %v1375
    %v1384 = vadd.f32 %v1309, %v1376
    %1385 = vrot.lane.b32.xlu0 %v54, 64
    %v1386 = vpop.permute.xlu0 %1385
    %1387 = vrot.lane.b32.xlu0 %v56, 64
    %v1388 = vpop.permute.xlu0 %1387
    %1389 = vrot.lane.b32.xlu0 %v58, 64
    %v1390 = vpop.permute.xlu0 %1389
    %1391 = vrot.lane.b32.xlu0 %v60, 64
    %v1392 = vpop.permute.xlu0 %1391
    %1397 = vrot.lane.b32.xlu0 %v53, 64
    %v1398 = vpop.permute.xlu0 %1397
    %1399 = vrot.lane.b32.xlu0 %v55, 64
    %v1400 = vpop.permute.xlu0 %1399
    %1401 = vrot.lane.b32.xlu0 %v57, 64
    %v1402 = vpop.permute.xlu0 %1401
    %1403 = vrot.lane.b32.xlu0 %v59, 64
    %v1404 = vpop.permute.xlu0 %1403
    %vm1405 = vcmask 523264
    %v1406 = vsel %vm1405, %v1398, %v1386
    %v1407 = vsel %vm1405, %v1400, %v1388
    %v1408 = vsel %vm1405, %v1402, %v1390
    %v1409 = vsel %vm1405, %v1404, %v1392
    %v1418 = vsel %vm1405, %v1386, %v1398
    %v1419 = vsel %vm1405, %v1388, %v1400
    %v1420 = vsel %vm1405, %v1390, %v1402
    %v1421 = vsel %vm1405, %v1392, %v1404
    %vm1422 = vcmp.ge.s32.totalorder %v64, 64
    %vm1423 = vcmp.ge.s32.totalorder %v65, 64
    %v1424 = vsel %vm1422, 1, 0
    %v1425 = vsel %vm1423, 1, 0
    %vm1426 = vcmp.eq.s32.totalorder %v1424, 1
    %vm1427 = vcmp.eq.s32.totalorder %v1425, 1
    %v1428 = vsel %vm1426, %v1418, 0.0
    %v1429 = vsel %vm1427, %v1406, 0.0
    %v1430 = vsel %vm1426, %v1419, 0.0
    %v1431 = vsel %vm1427, %v1407, 0.0
    %v1432 = vsel %vm1426, %v1420, 0.0
    %v1433 = vsel %vm1427, %v1408, 0.0
    %v1434 = vsel %vm1426, %v1421, 0.0
    %v1435 = vsel %vm1427, %v1409, 0.0
    %1436 = vset.pattern.permute.xlu0 18
    %1437 = vperm.xlu0 %1436, %v61
    %v1438 = vpop.permute.xlu0 %1437
    %1440 = vset.pattern.permute.xlu0 18
    %1441 = vperm.xlu0 %1440, %v62
    %v1442 = vpop.permute.xlu0 %1441
    %v1444 = vmul.f32 %v1428, %v1438
    %v1445 = vmul.f32 %v1429, %v1438
    %v1446 = vmul.f32 %v1430, %v1442
    %v1447 = vmul.f32 %v1431, %v1442
    %v1448 = vmul.f32 %v1432, %v1438
    %v1449 = vmul.f32 %v1433, %v1438
    %v1450 = vmul.f32 %v1434, %v1442
    %v1451 = vmul.f32 %v1435, %v1442
    %v1452 = vadd.f32 %v1377, %v1444
    %v1453 = vadd.f32 %v1378, %v1445
    %v1454 = vadd.f32 %v1379, %v1446
    %v1455 = vadd.f32 %v1380, %v1447
    %v1456 = vadd.f32 %v1381, %v1448
    %v1457 = vadd.f32 %v1382, %v1449
    %v1458 = vadd.f32 %v1383, %v1450
    %v1459 = vadd.f32 %v1384, %v1451
    %1460 = vrot.lane.b32.xlu0 %v54, 48
    %v1461 = vpop.permute.xlu0 %1460
    %1462 = vrot.lane.b32.xlu0 %v56, 48
    %v1463 = vpop.permute.xlu0 %1462
    %1464 = vrot.lane.b32.xlu0 %v58, 48
    %v1465 = vpop.permute.xlu0 %1464
    %1466 = vrot.lane.b32.xlu0 %v60, 48
    %v1467 = vpop.permute.xlu0 %1466
    %1472 = vrot.lane.b32.xlu0 %v53, 48
    %v1473 = vpop.permute.xlu0 %1472
    %1474 = vrot.lane.b32.xlu0 %v55, 48
    %v1475 = vpop.permute.xlu0 %1474
    %1476 = vrot.lane.b32.xlu0 %v57, 48
    %v1477 = vpop.permute.xlu0 %1476
    %1478 = vrot.lane.b32.xlu0 %v59, 48
    %v1479 = vpop.permute.xlu0 %1478
    %vm1480 = vcmask 392192
    %v1481 = vsel %vm1480, %v1473, %v1461
    %v1482 = vsel %vm1480, %v1475, %v1463
    %v1483 = vsel %vm1480, %v1477, %v1465
    %v1484 = vsel %vm1480, %v1479, %v1467
    %v1493 = vsel %vm1480, %v1461, %v1473
    %v1494 = vsel %vm1480, %v1463, %v1475
    %v1495 = vsel %vm1480, %v1465, %v1477
    %v1496 = vsel %vm1480, %v1467, %v1479
    %vm1497 = vcmp.ge.s32.totalorder %v64, 48
    %vm1498 = vcmp.ge.s32.totalorder %v65, 48
    %v1499 = vsel %vm1497, 1, 0
    %v1500 = vsel %vm1498, 1, 0
    %vm1501 = vcmp.eq.s32.totalorder %v1499, 1
    %vm1502 = vcmp.eq.s32.totalorder %v1500, 1
    %v1503 = vsel %vm1501, %v1493, 0.0
    %v1504 = vsel %vm1502, %v1481, 0.0
    %v1505 = vsel %vm1501, %v1494, 0.0
    %v1506 = vsel %vm1502, %v1482, 0.0
    %v1507 = vsel %vm1501, %v1495, 0.0
    %v1508 = vsel %vm1502, %v1483, 0.0
    %v1509 = vsel %vm1501, %v1496, 0.0
    %v1510 = vsel %vm1502, %v1484, 0.0
    %1511 = vset.pattern.permute.xlu0 19
    %1512 = vperm.xlu0 %1511, %v61
    %v1513 = vpop.permute.xlu0 %1512
    %1515 = vset.pattern.permute.xlu0 19
    %1516 = vperm.xlu0 %1515, %v62
    %v1517 = vpop.permute.xlu0 %1516
    %v1519 = vmul.f32 %v1503, %v1513
    %v1520 = vmul.f32 %v1504, %v1513
    %v1521 = vmul.f32 %v1505, %v1517
    %v1522 = vmul.f32 %v1506, %v1517
    %v1523 = vmul.f32 %v1507, %v1513
    %v1524 = vmul.f32 %v1508, %v1513
    %v1525 = vmul.f32 %v1509, %v1517
    %v1526 = vmul.f32 %v1510, %v1517
    %v1527 = vadd.f32 %v1452, %v1519
    %v1528 = vadd.f32 %v1453, %v1520
    %v1529 = vadd.f32 %v1454, %v1521
    %v1530 = vadd.f32 %v1455, %v1522
    %v1531 = vadd.f32 %v1456, %v1523
    %v1532 = vadd.f32 %v1457, %v1524
    %v1533 = vadd.f32 %v1458, %v1525
    %v1534 = vadd.f32 %v1459, %v1526
    %1535 = vrot.lane.b32.xlu0 %v54, 16
    %v1536 = vpop.permute.xlu0 %1535
    %1537 = vrot.lane.b32.xlu0 %v56, 16
    %v1538 = vpop.permute.xlu0 %1537
    %1539 = vrot.lane.b32.xlu0 %v58, 16
    %v1540 = vpop.permute.xlu0 %1539
    %1541 = vrot.lane.b32.xlu0 %v60, 16
    %v1542 = vpop.permute.xlu0 %1541
    %1547 = vrot.lane.b32.xlu0 %v53, 16
    %v1548 = vpop.permute.xlu0 %1547
    %1549 = vrot.lane.b32.xlu0 %v55, 16
    %v1550 = vpop.permute.xlu0 %1549
    %1551 = vrot.lane.b32.xlu0 %v57, 16
    %v1552 = vpop.permute.xlu0 %1551
    %1553 = vrot.lane.b32.xlu0 %v59, 16
    %v1554 = vpop.permute.xlu0 %1553
    %vm1555 = vcmask 130048
    %v1556 = vsel %vm1555, %v1548, %v1536
    %v1557 = vsel %vm1555, %v1550, %v1538
    %v1558 = vsel %vm1555, %v1552, %v1540
    %v1559 = vsel %vm1555, %v1554, %v1542
    %v1568 = vsel %vm1555, %v1536, %v1548
    %v1569 = vsel %vm1555, %v1538, %v1550
    %v1570 = vsel %vm1555, %v1540, %v1552
    %v1571 = vsel %vm1555, %v1542, %v1554
    %vm1572 = vcmp.ge.s32.totalorder %v64, 16
    %vm1573 = vcmp.ge.s32.totalorder %v65, 16
    %v1574 = vsel %vm1572, 1, 0
    %v1575 = vsel %vm1573, 1, 0
    %vm1576 = vcmp.eq.s32.totalorder %v1574, 1
    %vm1577 = vcmp.eq.s32.totalorder %v1575, 1
    %v1578 = vsel %vm1576, %v1568, 0.0
    %v1579 = vsel %vm1577, %v1556, 0.0
    %v1580 = vsel %vm1576, %v1569, 0.0
    %v1581 = vsel %vm1577, %v1557, 0.0
    %v1582 = vsel %vm1576, %v1570, 0.0
    %v1583 = vsel %vm1577, %v1558, 0.0
    %v1584 = vsel %vm1576, %v1571, 0.0
    %v1585 = vsel %vm1577, %v1559, 0.0
    %1586 = vset.pattern.permute.xlu0 20
    %1587 = vperm.xlu0 %1586, %v61
    %v1588 = vpop.permute.xlu0 %1587
    %1590 = vset.pattern.permute.xlu0 20
    %1591 = vperm.xlu0 %1590, %v62
    %v1592 = vpop.permute.xlu0 %1591
    %v1594 = vmul.f32 %v1578, %v1588
    %v1595 = vmul.f32 %v1579, %v1588
    %v1596 = vmul.f32 %v1580, %v1592
    %v1597 = vmul.f32 %v1581, %v1592
    %v1598 = vmul.f32 %v1582, %v1588
    %v1599 = vmul.f32 %v1583, %v1588
    %v1600 = vmul.f32 %v1584, %v1592
    %v1601 = vmul.f32 %v1585, %v1592
    %v1602 = vadd.f32 %v1527, %v1594
    %v1603 = vadd.f32 %v1528, %v1595
    %v1604 = vadd.f32 %v1529, %v1596
    %v1605 = vadd.f32 %v1530, %v1597
    %v1606 = vadd.f32 %v1531, %v1598
    %v1607 = vadd.f32 %v1532, %v1599
    %v1608 = vadd.f32 %v1533, %v1600
    %v1609 = vadd.f32 %v1534, %v1601
    %1610 = vrot.lane.b32.xlu0 %v53, 112
    %v1611 = vpop.permute.xlu0 %1610
    %1612 = vrot.lane.b32.xlu0 %v54, 112
    %v1613 = vpop.permute.xlu0 %1612
    %1614 = vrot.lane.b32.xlu0 %v55, 112
    %v1615 = vpop.permute.xlu0 %1614
    %1616 = vrot.lane.b32.xlu0 %v56, 112
    %v1617 = vpop.permute.xlu0 %1616
    %1618 = vrot.lane.b32.xlu0 %v57, 112
    %v1619 = vpop.permute.xlu0 %1618
    %1620 = vrot.lane.b32.xlu0 %v58, 112
    %v1621 = vpop.permute.xlu0 %1620
    %1622 = vrot.lane.b32.xlu0 %v59, 112
    %v1623 = vpop.permute.xlu0 %1622
    %1624 = vrot.lane.b32.xlu0 %v60, 112
    %v1625 = vpop.permute.xlu0 %1624
    %vm1626 = vcmask 916480
    %v1627 = vsel %vm1626, %v1611, %v1613
    %v1628 = vsel %vm1626, %v1615, %v1617
    %v1629 = vsel %vm1626, %v1619, %v1621
    %v1630 = vsel %vm1626, %v1623, %v1625
    %v1643 = vsel %vm1626, %v1613, %v1611
    %v1644 = vsel %vm1626, %v1617, %v1615
    %v1645 = vsel %vm1626, %v1621, %v1619
    %v1646 = vsel %vm1626, %v1625, %v1623
    %vm1647 = vcmp.lt.s32.totalorder %v64, 240
    %vm1648 = vcmp.lt.s32.totalorder %v65, 240
    %v1649 = vsel %vm1647, 1, 0
    %v1650 = vsel %vm1648, 1, 0
    %vm1651 = vcmp.eq.s32.totalorder %v1649, 1
    %vm1652 = vcmp.eq.s32.totalorder %v1650, 1
    %v1653 = vsel %vm1651, %v1627, 0.0
    %v1654 = vsel %vm1652, %v1643, 0.0
    %v1655 = vsel %vm1651, %v1628, 0.0
    %v1656 = vsel %vm1652, %v1644, 0.0
    %v1657 = vsel %vm1651, %v1629, 0.0
    %v1658 = vsel %vm1652, %v1645, 0.0
    %v1659 = vsel %vm1651, %v1630, 0.0
    %v1660 = vsel %vm1652, %v1646, 0.0
    %1661 = vset.pattern.permute.xlu0 21
    %1662 = vperm.xlu0 %1661, %v61
    %v1663 = vpop.permute.xlu0 %1662
    %1665 = vset.pattern.permute.xlu0 21
    %1666 = vperm.xlu0 %1665, %v62
    %v1667 = vpop.permute.xlu0 %1666
    %v1669 = vmul.f32 %v1653, %v1663
    %v1670 = vmul.f32 %v1654, %v1663
    %v1671 = vmul.f32 %v1655, %v1667
    %v1672 = vmul.f32 %v1656, %v1667
    %v1673 = vmul.f32 %v1657, %v1663
    %v1674 = vmul.f32 %v1658, %v1663
    %v1675 = vmul.f32 %v1659, %v1667
    %v1676 = vmul.f32 %v1660, %v1667
    %v1677 = vadd.f32 %v1602, %v1669
    %v1678 = vadd.f32 %v1603, %v1670
    %v1679 = vadd.f32 %v1604, %v1671
    %v1680 = vadd.f32 %v1605, %v1672
    %v1681 = vadd.f32 %v1606, %v1673
    %v1682 = vadd.f32 %v1607, %v1674
    %v1683 = vadd.f32 %v1608, %v1675
    %v1684 = vadd.f32 %v1609, %v1676
    %vm1685 = vcmp.lt.s32.totalorder %v64, 208
    %vm1686 = vcmp.lt.s32.totalorder %v65, 208
    %v1687 = vsel %vm1685, 1, 0
    %v1688 = vsel %vm1686, 1, 0
    %vm1689 = vcmp.eq.s32.totalorder %v1687, 1
    %vm1690 = vcmp.eq.s32.totalorder %v1688, 1
    %v1691 = vsel %vm1689, %v1331, 0.0
    %v1692 = vsel %vm1690, %v1343, 0.0
    %v1693 = vsel %vm1689, %v1332, 0.0
    %v1694 = vsel %vm1690, %v1344, 0.0
    %v1695 = vsel %vm1689, %v1333, 0.0
    %v1696 = vsel %vm1690, %v1345, 0.0
    %v1697 = vsel %vm1689, %v1334, 0.0
    %v1698 = vsel %vm1690, %v1346, 0.0
    %1699 = vset.pattern.permute.xlu0 22
    %1700 = vperm.xlu0 %1699, %v61
    %v1701 = vpop.permute.xlu0 %1700
    %1703 = vset.pattern.permute.xlu0 22
    %1704 = vperm.xlu0 %1703, %v62
    %v1705 = vpop.permute.xlu0 %1704
    %v1707 = vmul.f32 %v1691, %v1701
    %v1708 = vmul.f32 %v1692, %v1701
    %v1709 = vmul.f32 %v1693, %v1705
    %v1710 = vmul.f32 %v1694, %v1705
    %v1711 = vmul.f32 %v1695, %v1701
    %v1712 = vmul.f32 %v1696, %v1701
    %v1713 = vmul.f32 %v1697, %v1705
    %v1714 = vmul.f32 %v1698, %v1705
    %v1715 = vadd.f32 %v1677, %v1707
    %v1716 = vadd.f32 %v1678, %v1708
    %v1717 = vadd.f32 %v1679, %v1709
    %v1718 = vadd.f32 %v1680, %v1710
    %v1719 = vadd.f32 %v1681, %v1711
    %v1720 = vadd.f32 %v1682, %v1712
    %v1721 = vadd.f32 %v1683, %v1713
    %v1722 = vadd.f32 %v1684, %v1714
    %vm1723 = vcmp.lt.s32.totalorder %v64, 192
    %vm1724 = vcmp.lt.s32.totalorder %v65, 192
    %v1725 = vsel %vm1723, 1, 0
    %v1726 = vsel %vm1724, 1, 0
    %vm1727 = vcmp.eq.s32.totalorder %v1725, 1
    %vm1728 = vcmp.eq.s32.totalorder %v1726, 1
    %v1729 = vsel %vm1727, %v1406, 0.0
    %v1730 = vsel %vm1728, %v1418, 0.0
    %v1731 = vsel %vm1727, %v1407, 0.0
    %v1732 = vsel %vm1728, %v1419, 0.0
    %v1733 = vsel %vm1727, %v1408, 0.0
    %v1734 = vsel %vm1728, %v1420, 0.0
    %v1735 = vsel %vm1727, %v1409, 0.0
    %v1736 = vsel %vm1728, %v1421, 0.0
    %1737 = vset.pattern.permute.xlu0 23
    %1738 = vperm.xlu0 %1737, %v61
    %v1739 = vpop.permute.xlu0 %1738
    %1741 = vset.pattern.permute.xlu0 23
    %1742 = vperm.xlu0 %1741, %v62
    %v1743 = vpop.permute.xlu0 %1742
    %v1745 = vmul.f32 %v1729, %v1739
    %v1746 = vmul.f32 %v1730, %v1739
    %v1747 = vmul.f32 %v1731, %v1743
    %v1748 = vmul.f32 %v1732, %v1743
    %v1749 = vmul.f32 %v1733, %v1739
    %v1750 = vmul.f32 %v1734, %v1739
    %v1751 = vmul.f32 %v1735, %v1743
    %v1752 = vmul.f32 %v1736, %v1743
    %v1753 = vadd.f32 %v1715, %v1745
    %v1754 = vadd.f32 %v1716, %v1746
    %v1755 = vadd.f32 %v1717, %v1747
    %v1756 = vadd.f32 %v1718, %v1748
    %v1757 = vadd.f32 %v1719, %v1749
    %v1758 = vadd.f32 %v1720, %v1750
    %v1759 = vadd.f32 %v1721, %v1751
    %v1760 = vadd.f32 %v1722, %v1752
    %vm1761 = vcmp.lt.s32.totalorder %v64, 176
    %vm1762 = vcmp.lt.s32.totalorder %v65, 176
    %v1763 = vsel %vm1761, 1, 0
    %v1764 = vsel %vm1762, 1, 0
    %vm1765 = vcmp.eq.s32.totalorder %v1763, 1
    %vm1766 = vcmp.eq.s32.totalorder %v1764, 1
    %v1767 = vsel %vm1765, %v1481, 0.0
    %v1768 = vsel %vm1766, %v1493, 0.0
    %v1769 = vsel %vm1765, %v1482, 0.0
    %v1770 = vsel %vm1766, %v1494, 0.0
    %v1771 = vsel %vm1765, %v1483, 0.0
    %v1772 = vsel %vm1766, %v1495, 0.0
    %v1773 = vsel %vm1765, %v1484, 0.0
    %v1774 = vsel %vm1766, %v1496, 0.0
    %1775 = vset.pattern.permute.xlu0 24
    %1776 = vperm.xlu0 %1775, %v61
    %v1777 = vpop.permute.xlu0 %1776
    %1779 = vset.pattern.permute.xlu0 24
    %1780 = vperm.xlu0 %1779, %v62
    %v1781 = vpop.permute.xlu0 %1780
    %v1783 = vmul.f32 %v1767, %v1777
    %v1784 = vmul.f32 %v1768, %v1777
    %v1785 = vmul.f32 %v1769, %v1781
    %v1786 = vmul.f32 %v1770, %v1781
    %v1787 = vmul.f32 %v1771, %v1777
    %v1788 = vmul.f32 %v1772, %v1777
    %v1789 = vmul.f32 %v1773, %v1781
    %v1790 = vmul.f32 %v1774, %v1781
    %v1791 = vadd.f32 %v1753, %v1783
    %v1792 = vadd.f32 %v1754, %v1784
    %v1793 = vadd.f32 %v1755, %v1785
    %v1794 = vadd.f32 %v1756, %v1786
    %v1795 = vadd.f32 %v1757, %v1787
    %v1796 = vadd.f32 %v1758, %v1788
    %v1797 = vadd.f32 %v1759, %v1789
    %v1798 = vadd.f32 %v1760, %v1790
    %1799 = vst [vmem:[#allocation3] sm:$0xff] %v1791
    %1800 = vst [vmem:[#allocation3 + $0x8] sm:$0xff] %v1792
    %1801 = vst [vmem:[#allocation3 + $0x10] sm:$0xff] %v1793
    %1802 = vst [vmem:[#allocation3 + $0x18] sm:$0xff] %v1794
    %1803 = vst [vmem:[#allocation3 + $0x20] sm:$0xff] %v1795
    %1804 = vst [vmem:[#allocation3 + $0x28] sm:$0xff] %v1796
    %1805 = vst [vmem:[#allocation3 + $0x30] sm:$0xff] %v1797
    %1806 = vst [vmem:[#allocation3 + $0x38] sm:$0xff] %v1798
    // Predicated region
    $region33: #{_lambda_.1} parent=1 // pred_check
      _
    $region34: #{_lambda_.1} parent=1 // pred_check_branch
      %1808 = sbr.rel (0) target = $region36
    $region35: #{_lambda_.1} parent=1 // pred_region
      %s1809 = sadd.s32 0, 1
      %s1810 = smul.u32 2, %s1809
      %s1811 = smul.addr %s1810, 2
      %s1812 = smul.addr %s1811, 8
      %s1813 = scalar_lea.vmem %s2, %s1812
      // Predicated region
      $region37: #{_lambda_.1} parent=35 // pred_check
        _
      $region38: #{_lambda_.1} parent=35 // pred_check_branch
        %1815 = sbr.rel (0) target = $region40
      $region39: #{_lambda_.1} parent=35 // pred_region
        // Predicated region
        $region41: #{_lambda_.1} parent=39 // pred_check
          _
        $region42: #{_lambda_.1} parent=39 // pred_check_branch
          %1817 = sbr.rel (0) target = $region44
        $region43: #{_lambda_.1} parent=39 // pred_region
          loop: start=0, step=1, limit=1
          $region45: #{_lambda_.1} parent=43 // loop_pre_header
            _
          $region46: #{_lambda_.1} parent=43 // loop_header
            %s1819 = sphi 0, %s1823
            %p1820 = scmp.ge.s32.totalorder %s1819, 1
            %s1824 = sphi [#allocation3], [#allocation3]
            %s1825 = sphi %s1813, %s1813
          $region47: #{_lambda_.1} parent=43 // loop_header_branch
            %1822 = sbr.rel (%p1820) target = $region51
          $region48: #{_lambda_.1} parent=43 // loop_body
            %v1826 = vld [vmem:[%s1824] sm:$0xff]
            %1827 = vst [vmem:[%s1825] sm:$0xff] %v1826
            %v1828 = vld [vmem:[%s1824 + $0x8] sm:$0xff]
            %1829 = vst [vmem:[%s1825 + $0x8] sm:$0xff] %v1828
            %v1830 = vld [vmem:[%s1824 + $0x10] sm:$0xff]
            %1831 = vst [vmem:[%s1825 + $0x10] sm:$0xff] %v1830
            %v1832 = vld [vmem:[%s1824 + $0x18] sm:$0xff]
            %1833 = vst [vmem:[%s1825 + $0x18] sm:$0xff] %v1832
            %v1834 = vld [vmem:[%s1824 + $0x20] sm:$0xff]
            %1835 = vst [vmem:[%s1825 + $0x40] sm:$0xff] %v1834
            %v1836 = vld [vmem:[%s1824 + $0x28] sm:$0xff]
            %1837 = vst [vmem:[%s1825 + $0x48] sm:$0xff] %v1836
            %v1838 = vld [vmem:[%s1824 + $0x30] sm:$0xff]
            %1839 = vst [vmem:[%s1825 + $0x50] sm:$0xff] %v1838
            %v1840 = vld [vmem:[%s1824 + $0x38] sm:$0xff]
            %1841 = vst [vmem:[%s1825 + $0x58] sm:$0xff] %v1840
          $region49: #{_lambda_.1} parent=43 // loop_footer
            %s1823 = sadd.s32 1, %s1819
          $region50: #{_lambda_.1} parent=43 // loop_footer_branch
            %1818 = sbr.rel target = $region46
          $region51: #{_lambda_.1} parent=43 // loop_exit
            _
        $region44: #{_lambda_.1} parent=39 // pred_fallthru
          _
        // Predicated region
        $region52: #{_lambda_.1} parent=39 // pred_check
          _
        $region53: #{_lambda_.1} parent=39 // pred_check_branch
          %1843 = sbr.rel target = $region55
        $region54: #{_lambda_.1} parent=39 // pred_region
          _
        $region55: #{_lambda_.1} parent=39 // pred_fallthru
          _
      $region40: #{_lambda_.1} parent=35 // pred_fallthru
        _
      %1844 = vnop
    $region36: #{_lambda_.1} parent=1 // pred_fallthru
      _
    // Predicated region
    $region56: #{_lambda_.1} parent=1 // pred_check
      _
    $region57: #{_lambda_.1} parent=1 // pred_check_branch
      %1846 = sbr.rel (0) target = $region59
    $region58: #{_lambda_.1} parent=1 // pred_region
      _
    $region59: #{_lambda_.1} parent=1 // pred_fallthru
      _

</llo_original>
